<compile_context>
chip_gen: v7x
topology: tpu7x:2x2x1
jax: 0.10.0
libtpu: 0.0.40
codegen_flags: <defaults>
</compile_context>

<pallas_src>
import functools

import jax
import jax.numpy as jnp
from jax.experimental import pallas as pl
from jax.experimental.pallas import tpu as pltpu


def _encoder_kernel(x_ref, n1w_ref, hmask_ref, wqkv_ref, w1_ref, w2_ref, o_ref,
                    *, c_pad, inv_c, eps):
    x = x_ref[0]                         # (S, Cp) tokens; padded channels hold exact zeros
    n1w = n1w_ref[...]                   # (1, Cp) norm1 weight (zero in padded lanes)
    hm = hmask_ref[...]                  # (H, 1, Cp) 0/1 per-head channel mask

    def rms_scale(v):
        # rsqrt of the mean over the REAL channels: padded lanes are exact zeros, so a
        # full-lane sum * (1/C_real) equals the unpadded mean.
        return jax.lax.rsqrt(jnp.sum(v * v, axis=-1, keepdims=True) * inv_c + eps)

    # ---- norm1 + fused QKV projection ----
    xn = x * rms_scale(x) * n1w          # norm1(x)
    rq = rms_scale(xn)                   # q_norm per-token scale (its weight is folded into Wq)

    qkv = jnp.dot(xn, wqkv_ref[...], preferred_element_type=jnp.float32)   # (S, 3*Cp)
    q = qkv[:, 0:c_pad] * rq             # q_norm_w, 1/sqrt(head_dim) and k_norm_w folded into Wq
    kx = qkv[:, c_pad:2 * c_pad]         # GQA-expanded K (per-query-head channel layout)
    vx = qkv[:, 2 * c_pad:3 * c_pad]     # GQA-expanded V
    # k_norm statistic: mean over the G-duplicated expanded channels equals the mean over the
    # Ckv kv channels; the k_norm weight itself is already folded into Wq's columns.
    kx = kx * rms_scale(kx)

    # ---- attention: stacked-M matmuls, single softmax pass ----
    num_heads = hm.shape[0]
    seq = x.shape[0]
    qh = (q[None, :, :] * hm).reshape(num_heads * seq, c_pad)   # head-masked Q stacked into M
    s = jax.lax.dot_general(qh, kx, (((1,), (1,)), ((), ())),
                            preferred_element_type=jnp.float32)             # (H*S, S)
    s = s - jnp.max(s, axis=-1, keepdims=True)
    p = jnp.exp(s)
    p = p * pl.reciprocal(jnp.sum(p, axis=-1, keepdims=True), approx=True)
    o = jnp.dot(p, vx, preferred_element_type=jnp.float32)                  # (H*S, Cp)
    attn = jnp.sum(o.reshape(num_heads, seq, c_pad) * hm, axis=0)           # (S, Cp) exact concat

    x1 = x + attn                        # residual 1 (dropout == identity in eval)

    # ---- norm2 + FFN (norm2_w folded into W1 rows, w3 gate folded into W2 rows) ----
    x1n = x1 * rms_scale(x1)
    h1 = jnp.dot(x1n, w1_ref[...], preferred_element_type=jnp.float32)      # (S, Hd)
    h1 = h1 * jax.nn.sigmoid(h1)         # SiLU
    y = jnp.dot(h1, w2_ref[...], preferred_element_type=jnp.float32)        # (S, Cp)

    o_ref[0] = x1 + y                    # residual 2


def encoder_forward(x_nchw, params, *, num_q_heads, num_kv_heads, eps=1e-6):
    """x_nchw: (B, C, H, W) float32. Returns (B, C, H, W).

    params (matmul layout; PyTorch Conv2d(out,in,1,1) weight -> transpose/reshape to (in,out)):
      norm1_w/q_norm_w/norm2_w: (1, C), k_norm_w: (1, Ckv),
      wq: (C, C), wk/wv: (C, Ckv), w1: (C, Hd), w3: (1, Hd), w2: (Hd, C).
    """
    B, C, H, W = x_nchw.shape
    S = H * W
    head_dim = C // num_q_heads
    group = num_q_heads // num_kv_heads
    Hd = params["w1"].shape[1]

    Cp = ((C + 127) // 128) * 128         # lane-dense channel padding (32 -> 128)
    Hdp = ((Hd + 127) // 128) * 128

    # NCHW -> (B, S, C) tokens, zero-padded to Cp channels.
    x_bsc = jnp.transpose(x_nchw, (0, 2, 3, 1)).reshape(B, S, C)
    x_p = jnp.pad(x_bsc, ((0, 0), (0, 0), (0, Cp - C)))

    # ---- wrapper-side (free) weight preprocessing ----
    # channel c -> query head h = c // head_dim ; source kv channel = (h // group)*head_dim + c%head_dim
    c_idx = jnp.arange(C)
    h_of_c = c_idx // head_dim
    src = (h_of_c // group) * head_dim + (c_idx % head_dim)        # (C,) int

    wk_exp = params["wk"][:, src]                                  # (C, C): GQA expansion folded in
    wv_exp = params["wv"][:, src]                                  # (C, C)
    knw_exp = params["k_norm_w"].reshape(-1)[src]                  # (C,)

    qnw = params["q_norm_w"].reshape(-1)
    scale = 1.0 / (head_dim ** 0.5)
    # q_norm weight -> Wq rows; attention scale and k_norm weight -> Wq columns (commute onto Q).
    wq_f = (qnw[:, None] * params["wq"]) * (scale * knw_exp)[None, :]

    n2w = params["norm2_w"].reshape(-1)
    w1_f = n2w[:, None] * params["w1"]                             # norm2 weight -> W1 rows
    w3 = params["w3"].reshape(-1)
    w2_f = w3[:, None] * params["w2"]                              # post-SiLU gate -> W2 rows

    def pad2(a, rows, cols):
        return jnp.pad(a, ((0, rows - a.shape[0]), (0, cols - a.shape[1])))

    wqkv = jnp.concatenate([pad2(wq_f, Cp, Cp),
                            pad2(wk_exp, Cp, Cp),
                            pad2(wv_exp, Cp, Cp)], axis=1)         # (Cp, 3*Cp)
    w1_p = pad2(w1_f, Cp, Hdp)
    w2_p = pad2(w2_f, Hdp, Cp)
    n1w_p = pad2(params["norm1_w"].reshape(1, C), 1, Cp)

    # Per-head channel mask, (H, 1, Cp) float32; padded channels map to no head.
    cp_idx = jnp.arange(Cp)
    hmask = ((jnp.arange(num_q_heads)[:, None] == cp_idx[None, :] // head_dim)
             & (cp_idx[None, :] < C)[None, :]).astype(jnp.float32)
    hmask = hmask.reshape(num_q_heads, 1, Cp)

    kernel = functools.partial(_encoder_kernel, c_pad=Cp, inv_c=1.0 / C, eps=eps)

    def const(shape):
        n = len(shape)
        return pl.BlockSpec(shape, lambda b, _n=n: (0,) * _n)

    out_p = pl.pallas_call(
        kernel,
        out_shape=jax.ShapeDtypeStruct((B, S, Cp), jnp.float32),
        grid=(B,),
        in_specs=[
            pl.BlockSpec((1, S, Cp), lambda b: (b, 0, 0)),   # x tokens (one batch per grid step)
            const((1, Cp)),                                  # norm1 weight
            const((num_q_heads, 1, Cp)),                     # head mask
            const((Cp, 3 * Cp)),                             # fused [Wq | Wk | Wv]
            const((Cp, Hdp)),                                # W1 (norm2 folded)
            const((Hdp, Cp)),                                # W2 (w3 gate folded)
        ],
        out_specs=pl.BlockSpec((1, S, Cp), lambda b: (b, 0, 0)),
        compiler_params=pltpu.CompilerParams(dimension_semantics=("parallel",)),
    )(x_p, n1w_p, hmask, wqkv, w1_p, w2_p)

    # Drop channel padding; (B, S, C) -> NCHW.
    out_bsc = out_p[:, :, :C]
    return jnp.transpose(out_bsc.reshape(B, H, W, C), (0, 3, 1, 2))


def _ref_encoder(x_bsc, params, *, num_q_heads, num_kv_heads, head_dim, eps=1e-6):
    """Pure-JAX reference of the same math (token layout), mirroring the PyTorch module."""
    def rms(v, w):
        return v * jax.lax.rsqrt(jnp.mean(v * v, -1, keepdims=True) + eps) * w

    xn = rms(x_bsc, params["norm1_w"])
    qn = rms(xn, params["q_norm_w"])
    q = qn @ params["wq"]
    k = rms(xn @ params["wk"], params["k_norm_w"])
    v = xn @ params["wv"]
    B, S, C = x_bsc.shape
    q = q.reshape(B, S, num_q_heads, head_dim).transpose(0, 2, 1, 3)
    k = k.reshape(B, S, num_kv_heads, head_dim).transpose(0, 2, 1, 3)
    v = v.reshape(B, S, num_kv_heads, head_dim).transpose(0, 2, 1, 3)
    rep = num_q_heads // num_kv_heads
    k = jnp.repeat(k, rep, axis=1)
    v = jnp.repeat(v, rep, axis=1)
    s = jnp.einsum("bhqd,bhkd->bhqk", q, k) / (head_dim ** 0.5)
    p = jax.nn.softmax(s, axis=-1)
    attn = jnp.einsum("bhqk,bhkd->bhqd", p, v)
    attn = attn.transpose(0, 2, 1, 3).reshape(B, S, C)
    x1 = x_bsc + attn
    x1n = rms(x1, params["norm2_w"])
    h1 = x1n @ params["w1"]
    h1 = h1 * jax.nn.sigmoid(h1) * params["w3"]
    return x1 + h1 @ params["w2"]


if __name__ == "__main__":
    # Small shapes consistent with the module (embed_dim=32, 8 query heads / 2 kv heads).
    B, C, H, W = 2, 32, 8, 8
    num_q_heads, num_kv_heads = 8, 2
    head_dim = C // num_q_heads
    Ckv = head_dim * num_kv_heads

    # FFN hidden-dim computation mirrors the PyTorch __init__.
    hidden_dim = int(C * 2)
    hidden_dim = int(2 * hidden_dim / 3)
    multiple_of = 256
    hidden_dim = multiple_of * ((hidden_dim + multiple_of - 1) // multiple_of)  # -> 256

    key = jax.random.PRNGKey(0)
    kx, kq, kk, kv, k1, k2, k3, k4, k5, k6, k7 = jax.random.split(key, 11)

    x = jax.random.normal(kx, (B, C, H, W), jnp.float32)

    params = {
        "norm1_w": 1.0 + 0.1 * jax.random.normal(k3, (1, C), jnp.float32),
        "q_norm_w": 1.0 + 0.1 * jax.random.normal(k4, (1, C), jnp.float32),
        "k_norm_w": 1.0 + 0.1 * jax.random.normal(k5, (1, Ckv), jnp.float32),
        "norm2_w": 1.0 + 0.1 * jax.random.normal(k6, (1, C), jnp.float32),
        "wq": jax.random.normal(kq, (C, C), jnp.float32) * 0.1,
        "wk": jax.random.normal(kk, (C, Ckv), jnp.float32) * 0.1,
        "wv": jax.random.normal(kv, (C, Ckv), jnp.float32) * 0.1,
        "w1": jax.random.normal(k1, (C, hidden_dim), jnp.float32) * 0.1,
        "w3": 1.0 + 0.1 * jax.random.normal(k7, (1, hidden_dim), jnp.float32),
        "w2": jax.random.normal(k2, (hidden_dim, C), jnp.float32) * 0.1,
    }

    out = encoder_forward(x, params, num_q_heads=num_q_heads, num_kv_heads=num_kv_heads)
    out = jax.block_until_ready(out)

    # Correctness check against a pure-JAX reference.
    x_bsc = jnp.transpose(x, (0, 2, 3, 1)).reshape(B, H * W, C)
    ref = _ref_encoder(x_bsc, params, num_q_heads=num_q_heads,
                       num_kv_heads=num_kv_heads, head_dim=head_dim)
    ref_nchw = jnp.transpose(ref.reshape(B, H, W, C), (0, 3, 1, 2))
    assert out.shape == (B, C, H, W)
    max_err = float(jnp.max(jnp.abs(out - ref_nchw)))
    assert jnp.allclose(out, ref_nchw, atol=1e-3, rtol=1e-3), max_err

    print("KERNEL_OK")
</pallas_src>

<mosaic_0001>
module attributes {stable_mosaic.version = 11 : i64} {
  func.func @_encoder_kernel(%arg0: i32, %arg1: memref<1x64x128xf32, #tpu.memory_space<vmem>>, %arg2: memref<1x128xf32, #tpu.memory_space<vmem>>, %arg3: memref<8x1x128xf32, #tpu.memory_space<vmem>>, %arg4: memref<128x384xf32, #tpu.memory_space<vmem>>, %arg5: memref<128x256xf32, #tpu.memory_space<vmem>>, %arg6: memref<256x128xf32, #tpu.memory_space<vmem>>, %arg7: memref<1x64x128xf32, #tpu.memory_space<vmem>>) attributes {dimension_semantics = [#tpu.dimension_semantics<parallel>], iteration_bounds = array<i64: 2>, scalar_prefetch = 0 : i64, scratch_operands = 0 : i64, tpu.core_type = #tpu.core_type<tc>, window_params = [{transform_indices = @transform_0, window_bounds = array<i64: 1, 64, 128>}, {pipeline_mode = #tpu.pipeline_mode<synchronous>, transform_indices = @transform_1, window_bounds = array<i64: 1, 128>}, {pipeline_mode = #tpu.pipeline_mode<synchronous>, transform_indices = @transform_2, window_bounds = array<i64: 8, 1, 128>}, {pipeline_mode = #tpu.pipeline_mode<synchronous>, transform_indices = @transform_3, window_bounds = array<i64: 128, 384>}, {pipeline_mode = #tpu.pipeline_mode<synchronous>, transform_indices = @transform_4, window_bounds = array<i64: 128, 256>}, {pipeline_mode = #tpu.pipeline_mode<synchronous>, transform_indices = @transform_5, window_bounds = array<i64: 256, 128>}, {transform_indices = @transform_6, window_bounds = array<i64: 1, 64, 128>}]} {
    %c0 = arith.constant 0 : index
    %c0_0 = arith.constant 0 : index
    %c0_1 = arith.constant 0 : index
    %0 = vector.load %arg1[%c0, %c0_0, %c0_1] : memref<1x64x128xf32, #tpu.memory_space<vmem>>, vector<1x64x128xf32>
    %1 = vector.shape_cast %0 : vector<1x64x128xf32> to vector<64x128xf32>
    %c0_2 = arith.constant 0 : index
    %c0_3 = arith.constant 0 : index
    %2 = vector.load %arg2[%c0_2, %c0_3] : memref<1x128xf32, #tpu.memory_space<vmem>>, vector<1x128xf32>
    %c0_4 = arith.constant 0 : index
    %c0_5 = arith.constant 0 : index
    %c0_6 = arith.constant 0 : index
    %3 = vector.load %arg3[%c0_4, %c0_5, %c0_6] : memref<8x1x128xf32, #tpu.memory_space<vmem>>, vector<8x1x128xf32>
    %4 = arith.mulf %1, %1 : vector<64x128xf32>
    %cst = arith.constant dense<0.000000e+00> : vector<64xf32>
    %5 = vector.multi_reduction <add>, %4, %cst [1] : vector<64x128xf32> to vector<64xf32>
    %6 = vector.shape_cast %5 : vector<64xf32> to vector<64x1xf32>
    %cst_7 = arith.constant 3.125000e-02 : f32
    %7 = vector.broadcast %cst_7 : f32 to vector<64x1xf32>
    %8 = arith.mulf %6, %7 : vector<64x1xf32>
    %cst_8 = arith.constant 9.99999997E-7 : f32
    %9 = vector.broadcast %cst_8 : f32 to vector<64x1xf32>
    %10 = arith.addf %8, %9 : vector<64x1xf32>
    %11 = math.rsqrt %10 : vector<64x1xf32>
    %12 = vector.broadcast %11 : vector<64x1xf32> to vector<64x128xf32>
    %13 = arith.mulf %1, %12 : vector<64x128xf32>
    %14 = vector.broadcast %2 : vector<1x128xf32> to vector<64x128xf32>
    %15 = arith.mulf %13, %14 : vector<64x128xf32>
    %16 = arith.mulf %15, %15 : vector<64x128xf32>
    %cst_9 = arith.constant dense<0.000000e+00> : vector<64xf32>
    %17 = vector.multi_reduction <add>, %16, %cst_9 [1] : vector<64x128xf32> to vector<64xf32>
    %18 = vector.shape_cast %17 : vector<64xf32> to vector<64x1xf32>
    %cst_10 = arith.constant 3.125000e-02 : f32
    %19 = vector.broadcast %cst_10 : f32 to vector<64x1xf32>
    %20 = arith.mulf %18, %19 : vector<64x1xf32>
    %cst_11 = arith.constant 9.99999997E-7 : f32
    %21 = vector.broadcast %cst_11 : f32 to vector<64x1xf32>
    %22 = arith.addf %20, %21 : vector<64x1xf32>
    %23 = math.rsqrt %22 : vector<64x1xf32>
    %c0_12 = arith.constant 0 : index
    %c0_13 = arith.constant 0 : index
    %24 = vector.load %arg4[%c0_12, %c0_13] : memref<128x384xf32, #tpu.memory_space<vmem>>, vector<128x384xf32>
    %cst_14 = arith.constant dense<0.000000e+00> : vector<64x384xf32>
    %25 = tpu.matmul %15, %24, %cst_14 {dimension_numbers = #tpu.dot_dimension_numbers<[1], [0], [0], [1], [0, 0, 1, 1], [], []>} : vector<64x128xf32>, vector<128x384xf32>, vector<64x384xf32> -> vector<64x384xf32>
    %26 = vector.extract_strided_slice %25 {offsets = [0, 0], sizes = [64, 128], strides = [1, 1]} : vector<64x384xf32> to vector<64x128xf32>
    %27 = vector.broadcast %23 : vector<64x1xf32> to vector<64x128xf32>
    %28 = arith.mulf %26, %27 : vector<64x128xf32>
    %29 = vector.extract_strided_slice %25 {offsets = [0, 128], sizes = [64, 128], strides = [1, 1]} : vector<64x384xf32> to vector<64x128xf32>
    %30 = vector.extract_strided_slice %25 {offsets = [0, 256], sizes = [64, 128], strides = [1, 1]} : vector<64x384xf32> to vector<64x128xf32>
    %31 = arith.mulf %29, %29 : vector<64x128xf32>
    %cst_15 = arith.constant dense<0.000000e+00> : vector<64xf32>
    %32 = vector.multi_reduction <add>, %31, %cst_15 [1] : vector<64x128xf32> to vector<64xf32>
    %33 = vector.shape_cast %32 : vector<64xf32> to vector<64x1xf32>
    %cst_16 = arith.constant 3.125000e-02 : f32
    %34 = vector.broadcast %cst_16 : f32 to vector<64x1xf32>
    %35 = arith.mulf %33, %34 : vector<64x1xf32>
    %cst_17 = arith.constant 9.99999997E-7 : f32
    %36 = vector.broadcast %cst_17 : f32 to vector<64x1xf32>
    %37 = arith.addf %35, %36 : vector<64x1xf32>
    %38 = math.rsqrt %37 : vector<64x1xf32>
    %39 = vector.broadcast %38 : vector<64x1xf32> to vector<64x128xf32>
    %40 = arith.mulf %29, %39 : vector<64x128xf32>
    %41 = vector.shape_cast %28 : vector<64x128xf32> to vector<1x64x128xf32>
    %42 = vector.broadcast %41 : vector<1x64x128xf32> to vector<8x64x128xf32>
    %43 = vector.broadcast %3 : vector<8x1x128xf32> to vector<8x64x128xf32>
    %44 = arith.mulf %42, %43 : vector<8x64x128xf32>
    %45 = vector.shape_cast %44 : vector<8x64x128xf32> to vector<512x128xf32>
    %cst_18 = arith.constant dense<0.000000e+00> : vector<512x64xf32>
    %46 = tpu.matmul %45, %40, %cst_18 {dimension_numbers = #tpu.dot_dimension_numbers<[1], [1], [0], [0], [0, 0, 1, 0], [], []>} : vector<512x128xf32>, vector<64x128xf32>, vector<512x64xf32> -> vector<512x64xf32>
    %cst_19 = arith.constant dense<0xFF800000> : vector<512xf32>
    %47 = vector.multi_reduction <maximumf>, %46, %cst_19 [1] : vector<512x64xf32> to vector<512xf32>
    %48 = vector.shape_cast %47 : vector<512xf32> to vector<512x1xf32>
    %49 = vector.broadcast %48 : vector<512x1xf32> to vector<512x64xf32>
    %50 = arith.subf %46, %49 : vector<512x64xf32>
    %51 = math.exp %50 : vector<512x64xf32>
    %cst_20 = arith.constant dense<0.000000e+00> : vector<512xf32>
    %52 = vector.multi_reduction <add>, %51, %cst_20 [1] : vector<512x64xf32> to vector<512xf32>
    %53 = vector.shape_cast %52 : vector<512xf32> to vector<512x1xf32>
    %54 = tpu.reciprocal %53 {approx = true} : vector<512x1xf32> -> vector<512x1xf32>
    %55 = vector.broadcast %54 : vector<512x1xf32> to vector<512x64xf32>
    %56 = arith.mulf %51, %55 : vector<512x64xf32>
    %cst_21 = arith.constant dense<0.000000e+00> : vector<512x128xf32>
    %57 = tpu.matmul %56, %30, %cst_21 {dimension_numbers = #tpu.dot_dimension_numbers<[1], [0], [0], [1], [0, 0, 1, 1], [], []>} : vector<512x64xf32>, vector<64x128xf32>, vector<512x128xf32> -> vector<512x128xf32>
    %58 = vector.shape_cast %57 : vector<512x128xf32> to vector<8x64x128xf32>
    %59 = vector.broadcast %3 : vector<8x1x128xf32> to vector<8x64x128xf32>
    %60 = arith.mulf %58, %59 : vector<8x64x128xf32>
    %cst_22 = arith.constant dense<0.000000e+00> : vector<64x128xf32>
    %61 = vector.multi_reduction <add>, %60, %cst_22 [0] : vector<8x64x128xf32> to vector<64x128xf32>
    %62 = arith.addf %1, %61 : vector<64x128xf32>
    %63 = arith.mulf %62, %62 : vector<64x128xf32>
    %cst_23 = arith.constant dense<0.000000e+00> : vector<64xf32>
    %64 = vector.multi_reduction <add>, %63, %cst_23 [1] : vector<64x128xf32> to vector<64xf32>
    %65 = vector.shape_cast %64 : vector<64xf32> to vector<64x1xf32>
    %cst_24 = arith.constant 3.125000e-02 : f32
    %66 = vector.broadcast %cst_24 : f32 to vector<64x1xf32>
    %67 = arith.mulf %65, %66 : vector<64x1xf32>
    %cst_25 = arith.constant 9.99999997E-7 : f32
    %68 = vector.broadcast %cst_25 : f32 to vector<64x1xf32>
    %69 = arith.addf %67, %68 : vector<64x1xf32>
    %70 = math.rsqrt %69 : vector<64x1xf32>
    %71 = vector.broadcast %70 : vector<64x1xf32> to vector<64x128xf32>
    %72 = arith.mulf %62, %71 : vector<64x128xf32>
    %c0_26 = arith.constant 0 : index
    %c0_27 = arith.constant 0 : index
    %73 = vector.load %arg5[%c0_26, %c0_27] : memref<128x256xf32, #tpu.memory_space<vmem>>, vector<128x256xf32>
    %cst_28 = arith.constant dense<0.000000e+00> : vector<64x256xf32>
    %74 = tpu.matmul %72, %73, %cst_28 {dimension_numbers = #tpu.dot_dimension_numbers<[1], [0], [0], [1], [0, 0, 1, 1], [], []>} : vector<64x128xf32>, vector<128x256xf32>, vector<64x256xf32> -> vector<64x256xf32>
    %75 = arith.negf %74 : vector<64x256xf32>
    %76 = math.exp %75 : vector<64x256xf32>
    %cst_29 = arith.constant 1.000000e+00 : f32
    %77 = vector.broadcast %cst_29 : f32 to vector<64x256xf32>
    %78 = arith.addf %77, %76 : vector<64x256xf32>
    %79 = arith.divf %77, %78 : vector<64x256xf32>
    %80 = arith.mulf %74, %79 : vector<64x256xf32>
    %c0_30 = arith.constant 0 : index
    %c0_31 = arith.constant 0 : index
    %81 = vector.load %arg6[%c0_30, %c0_31] : memref<256x128xf32, #tpu.memory_space<vmem>>, vector<256x128xf32>
    %cst_32 = arith.constant dense<0.000000e+00> : vector<64x128xf32>
    %82 = tpu.matmul %80, %81, %cst_32 {dimension_numbers = #tpu.dot_dimension_numbers<[1], [0], [0], [1], [0, 0, 1, 1], [], []>} : vector<64x256xf32>, vector<256x128xf32>, vector<64x128xf32> -> vector<64x128xf32>
    %83 = arith.addf %62, %82 : vector<64x128xf32>
    %c0_33 = arith.constant 0 : index
    %c0_34 = arith.constant 0 : index
    %c0_35 = arith.constant 0 : index
    %84 = vector.load %arg7[%c0_33, %c0_34, %c0_35] : memref<1x64x128xf32, #tpu.memory_space<vmem>>, vector<1x64x128xf32>
    %85 = vector.shape_cast %84 : vector<1x64x128xf32> to vector<64x128xf32>
    %86 = vector.shape_cast %83 : vector<64x128xf32> to vector<1x64x128xf32>
    tpu.vector_store %arg7[%c0_33, %c0_34, %c0_35], %86 {strides = array<i32>} : memref<1x64x128xf32, #tpu.memory_space<vmem>>, vector<1x64x128xf32>,
    return
  }
  func.func @transform_0(%arg0: i32) -> (i32, i32, i32) {
    %c0_i32 = arith.constant 0 : i32
    %c0_i32_0 = arith.constant 0 : i32
    %c0_i32_1 = arith.constant 0 : i32
    return %arg0, %c0_i32, %c0_i32_0 : i32, i32, i32
  }
  func.func @transform_1(%arg0: i32) -> (i32, i32) {
    %c0_i32 = arith.constant 0 : i32
    %c0_i32_0 = arith.constant 0 : i32
    %c0_i32_1 = arith.constant 0 : i32
    return %c0_i32, %c0_i32_0 : i32, i32
  }
  func.func @transform_2(%arg0: i32) -> (i32, i32, i32) {
    %c0_i32 = arith.constant 0 : i32
    %c0_i32_0 = arith.constant 0 : i32
    %c0_i32_1 = arith.constant 0 : i32
    %c0_i32_2 = arith.constant 0 : i32
    return %c0_i32, %c0_i32_0, %c0_i32_1 : i32, i32, i32
  }
  func.func @transform_3(%arg0: i32) -> (i32, i32) {
    %c0_i32 = arith.constant 0 : i32
    %c0_i32_0 = arith.constant 0 : i32
    %c0_i32_1 = arith.constant 0 : i32
    return %c0_i32, %c0_i32_0 : i32, i32
  }
  func.func @transform_4(%arg0: i32) -> (i32, i32) {
    %c0_i32 = arith.constant 0 : i32
    %c0_i32_0 = arith.constant 0 : i32
    %c0_i32_1 = arith.constant 0 : i32
    return %c0_i32, %c0_i32_0 : i32, i32
  }
  func.func @transform_5(%arg0: i32) -> (i32, i32) {
    %c0_i32 = arith.constant 0 : i32
    %c0_i32_0 = arith.constant 0 : i32
    %c0_i32_1 = arith.constant 0 : i32
    return %c0_i32, %c0_i32_0 : i32, i32
  }
  func.func @transform_6(%arg0: i32) -> (i32, i32, i32) {
    %c0_i32 = arith.constant 0 : i32
    %c0_i32_0 = arith.constant 0 : i32
    %c0_i32_1 = arith.constant 0 : i32
    return %arg0, %c0_i32, %c0_i32_0 : i32, i32, i32
  }
}

</mosaic_0001>

<llo_original>
// kernel: tpu_custom_call.1
$region0: #{tpu_custom_call.1}
  #allocation0 [shape = 'u32[]', space=smem, size = 0x4, offset = 0x4, fixed_abs, tag = 'smem constant byte address 0x4 - core index']
  #allocation1 [shape = 'u32[144,128]{1,0:T(1,128)}', space=vmem, size = 0x12000, scoped, tag = 'internal scratch']
  %s0 = inlined_call_operand.hbm [shape: f32[2,64,128], index: 0, kind: input, shape index: {}]
  %s1 = inlined_call_operand.vmem [shape: f32[1,128], index: 1, kind: input, shape index: {}]
  %s2 = inlined_call_operand.hbm [shape: f32[8,1,128], index: 2, kind: input, shape index: {}]
  %s3 = inlined_call_operand.hbm [shape: f32[128,384], index: 3, kind: input, shape index: {}]
  %s4 = inlined_call_operand.hbm [shape: f32[128,256], index: 4, kind: input, shape index: {}]
  %s5 = inlined_call_operand.hbm [shape: f32[256,128], index: 5, kind: input, shape index: {}]
  %s6 = inlined_call_operand.hbm [shape: f32[2,64,128], index: 6, kind: output, shape index: {}]
  %s7 = sld [smem:[#allocation0]]
  $region77: #{tpu_custom_call.1} parent=0
    _
  %s9 = ssub.s32 1, %s7
  %s10 = scalar_select 0, %s9, %s7
  $region1: #{tpu_custom_call.1} parent=0
    #allocation2 [shape = 'u8[65536]{0}', space=vmem, size = 0x10000, scoped, tag = 'input window, operand 0']
    #allocation3 [shape = 's32[2]{0}', space=sflag, size = 0x8, scoped, tag = 'scoped memory for tpu_custom_call.1']
    #allocation4 [shape = 's32[2]{0}', space=sflag, size = 0x8, scoped, tag = 'scoped memory for tpu_custom_call.1']
    #allocation5 [shape = 'u8[4096]{0}', space=vmem, size = 0x1000, scoped, tag = 'input window, operand 2, single buffered']
    #allocation6 [shape = 's32[1]{0}', space=sflag, size = 0x4, scoped, tag = 'scoped memory for tpu_custom_call.1']
    #allocation7 [shape = 'u8[196608]{0}', space=vmem, size = 0x30000, scoped, tag = 'input window, operand 3, single buffered']
    #allocation8 [shape = 'u8[131072]{0}', space=vmem, size = 0x20000, scoped, tag = 'input window, operand 4, single buffered']
    #allocation9 [shape = 's32[1]{0}', space=sflag, size = 0x4, scoped, tag = 'scoped memory for tpu_custom_call.1']
    #allocation10 [shape = 'u8[131072]{0}', space=vmem, size = 0x20000, scoped, tag = 'input window, operand 5, single buffered']
    #allocation11 [shape = 'u8[65536]{0}', space=vmem, size = 0x10000, scoped, tag = 'output window, operand 0']
    %11 = vsyncpa [#allocation3], 0
    %s12 = scalar_lea.sflag [#allocation3], 1
    %13 = vsyncpa %s12, 0
    %14 = vsyncpa [#allocation6], 0
    %15 = vsyncpa [#allocation9], 0
    %16 = vsyncpa [#allocation4], 0
    %s17 = scalar_lea.sflag [#allocation4], 1
    %18 = vsyncpa %s17, 0
    loop: start=0, step=1, limit=4
    $region2: #{tpu_custom_call.1} parent=1 // loop_pre_header
      _
    $region3: #{tpu_custom_call.1} parent=1 // loop_header
      %s20 = sphi 0, %s24
      %p21 = scmp.ge.s32.totalorder %s20, 4
      %s30 = sphi 0, %s32
      %s33 = sphi 0, %s30
      %s34 = sphi 0, %s33
      %s50 = sphi 0, %s34
      %s54 = sphi 0, %s54
      %s56 = sphi 0, %s54
      %s57 = sphi 0, %s56
      %s71 = sphi 0, %s57
      %s75 = sphi 0, %s75
      %s77 = sphi 0, %s75
      %s78 = sphi 0, %s77
      %s92 = sphi 0, %s78
      %s96 = sphi 0, %s96
      %s98 = sphi 0, %s96
      %s99 = sphi 0, %s98
      %s113 = sphi 0, %s99
      %s117 = sphi 0, %s117
      %s119 = sphi 0, %s117
      %s120 = sphi 0, %s119
      %s134 = sphi 0, %s120
      %s138 = sphi 0, %s138
      %s140 = sphi 0, %s138
      %s141 = sphi 0, %s140
      %s155 = sphi 0, %s141
      %s161 = sphi 0, %s163
      %s164 = sphi 0, %s161
      %s165 = sphi 0, %s164
      %s181 = sphi 0, %s165
    $region4: #{tpu_custom_call.1} parent=1 // loop_header_branch
      %23 = sbr.rel (%p21) target = $region8
    $region5: #{tpu_custom_call.1} parent=1 // loop_body
      %s25 = ssub.s32 %s20, 1
      %s26 = ssub.s32 %s20, 2
      %s27 = sadd.s32 %s20, 1
      %s28 = ssub.s32 %s20, %s27
      %p29 = scmp.eq.s32.totalorder %s28, 0
      %s31 = sadd.s32 %s30, 1
      %s32 = scalar_select %p29, %s30, %s31
      %p35 = pneg %p29
      %p36 = scmp.eq.s32.totalorder %s20, 1
      %p37 = por %p35, %p36
      %p38 = scmp.ne.s32.totalorder %s30, %s33
      %p39 = scmp.eq.s32.totalorder %s20, 0
      %p40 = por %p38, %p39
      %p41 = scmp.ne.s32.totalorder %s30, %s33
      %p42 = scmp.eq.s32.totalorder %s25, 1
      %p43 = por %p41, %p42
      %p44 = scmp.ne.s32.totalorder %s33, %s34
      %p45 = scmp.eq.s32.totalorder %s25, 0
      %p46 = por %p44, %p45
      %p47 = scmp.ne.s32.totalorder %s33, %s34
      %p48 = scmp.eq.s32.totalorder %s26, 1
      %p49 = por %p47, %p48
      %p51 = scmp.ne.s32.totalorder %s34, %s50
      %p52 = scmp.eq.s32.totalorder %s26, 0
      %p53 = por %p51, %p52
      %s55 = sadd.s32 %s54, 1
      %p58 = scmp.eq.s32.totalorder %s20, 1
      %p59 = scmp.ne.s32.totalorder %s54, %s56
      %p60 = scmp.eq.s32.totalorder %s20, 0
      %p61 = por %p59, %p60
      %p62 = scmp.ne.s32.totalorder %s54, %s56
      %p63 = scmp.eq.s32.totalorder %s25, 1
      %p64 = por %p62, %p63
      %p65 = scmp.ne.s32.totalorder %s56, %s57
      %p66 = scmp.eq.s32.totalorder %s25, 0
      %p67 = por %p65, %p66
      %p68 = scmp.ne.s32.totalorder %s56, %s57
      %p69 = scmp.eq.s32.totalorder %s26, 1
      %p70 = por %p68, %p69
      %p72 = scmp.ne.s32.totalorder %s57, %s71
      %p73 = scmp.eq.s32.totalorder %s26, 0
      %p74 = por %p72, %p73
      %s76 = sadd.s32 %s75, 1
      %p79 = scmp.eq.s32.totalorder %s20, 1
      %p80 = scmp.ne.s32.totalorder %s75, %s77
      %p81 = scmp.eq.s32.totalorder %s20, 0
      %p82 = por %p80, %p81
      %p83 = scmp.ne.s32.totalorder %s75, %s77
      %p84 = scmp.eq.s32.totalorder %s25, 1
      %p85 = por %p83, %p84
      %p86 = scmp.ne.s32.totalorder %s77, %s78
      %p87 = scmp.eq.s32.totalorder %s25, 0
      %p88 = por %p86, %p87
      %p89 = scmp.ne.s32.totalorder %s77, %s78
      %p90 = scmp.eq.s32.totalorder %s26, 1
      %p91 = por %p89, %p90
      %p93 = scmp.ne.s32.totalorder %s78, %s92
      %p94 = scmp.eq.s32.totalorder %s26, 0
      %p95 = por %p93, %p94
      %s97 = sadd.s32 %s96, 1
      %p100 = scmp.eq.s32.totalorder %s20, 1
      %p101 = scmp.ne.s32.totalorder %s96, %s98
      %p102 = scmp.eq.s32.totalorder %s20, 0
      %p103 = por %p101, %p102
      %p104 = scmp.ne.s32.totalorder %s96, %s98
      %p105 = scmp.eq.s32.totalorder %s25, 1
      %p106 = por %p104, %p105
      %p107 = scmp.ne.s32.totalorder %s98, %s99
      %p108 = scmp.eq.s32.totalorder %s25, 0
      %p109 = por %p107, %p108
      %p110 = scmp.ne.s32.totalorder %s98, %s99
      %p111 = scmp.eq.s32.totalorder %s26, 1
      %p112 = por %p110, %p111
      %p114 = scmp.ne.s32.totalorder %s99, %s113
      %p115 = scmp.eq.s32.totalorder %s26, 0
      %p116 = por %p114, %p115
      %s118 = sadd.s32 %s117, 1
      %p121 = scmp.eq.s32.totalorder %s20, 1
      %p122 = scmp.ne.s32.totalorder %s117, %s119
      %p123 = scmp.eq.s32.totalorder %s20, 0
      %p124 = por %p122, %p123
      %p125 = scmp.ne.s32.totalorder %s117, %s119
      %p126 = scmp.eq.s32.totalorder %s25, 1
      %p127 = por %p125, %p126
      %p128 = scmp.ne.s32.totalorder %s119, %s120
      %p129 = scmp.eq.s32.totalorder %s25, 0
      %p130 = por %p128, %p129
      %p131 = scmp.ne.s32.totalorder %s119, %s120
      %p132 = scmp.eq.s32.totalorder %s26, 1
      %p133 = por %p131, %p132
      %p135 = scmp.ne.s32.totalorder %s120, %s134
      %p136 = scmp.eq.s32.totalorder %s26, 0
      %p137 = por %p135, %p136
      %s139 = sadd.s32 %s138, 1
      %p142 = scmp.eq.s32.totalorder %s20, 1
      %p143 = scmp.ne.s32.totalorder %s138, %s140
      %p144 = scmp.eq.s32.totalorder %s20, 0
      %p145 = por %p143, %p144
      %p146 = scmp.ne.s32.totalorder %s138, %s140
      %p147 = scmp.eq.s32.totalorder %s25, 1
      %p148 = por %p146, %p147
      %p149 = scmp.ne.s32.totalorder %s140, %s141
      %p150 = scmp.eq.s32.totalorder %s25, 0
      %p151 = por %p149, %p150
      %p152 = scmp.ne.s32.totalorder %s140, %s141
      %p153 = scmp.eq.s32.totalorder %s26, 1
      %p154 = por %p152, %p153
      %p156 = scmp.ne.s32.totalorder %s141, %s155
      %p157 = scmp.eq.s32.totalorder %s26, 0
      %p158 = por %p156, %p157
      %s159 = ssub.s32 %s20, %s27
      %p160 = scmp.eq.s32.totalorder %s159, 0
      %s162 = sadd.s32 %s161, 1
      %s163 = scalar_select %p160, %s161, %s162
      %p166 = pneg %p160
      %p167 = scmp.eq.s32.totalorder %s20, 1
      %p168 = por %p166, %p167
      %p169 = scmp.ne.s32.totalorder %s161, %s164
      %p170 = scmp.eq.s32.totalorder %s20, 0
      %p171 = por %p169, %p170
      %p172 = scmp.ne.s32.totalorder %s161, %s164
      %p173 = scmp.eq.s32.totalorder %s25, 1
      %p174 = por %p172, %p173
      %p175 = scmp.ne.s32.totalorder %s164, %s165
      %p176 = scmp.eq.s32.totalorder %s25, 0
      %p177 = por %p175, %p176
      %p178 = scmp.ne.s32.totalorder %s164, %s165
      %p179 = scmp.eq.s32.totalorder %s26, 1
      %p180 = por %p178, %p179
      %p182 = scmp.ne.s32.totalorder %s165, %s181
      %p183 = scmp.eq.s32.totalorder %s26, 0
      %p184 = por %p182, %p183
      %p185 = scmp.le.s32.totalorder 1, %s20
      %p186 = scmp.lt.s32.totalorder %s20, 3
      %p187 = pnand %p185, %p186
      %p188 = pneg %p187
      // Predicated region
      $region9: #{tpu_custom_call.1} parent=5 // pred_check
        _
      $region10: #{tpu_custom_call.1} parent=5 // pred_check_branch
        %190 = sbr.rel (%p187) target = $region12
      $region11: #{tpu_custom_call.1} parent=5 // pred_region
        %s191 = ssub.s32 %s20, 1
        // Predicated region
        $region13: #{tpu_custom_call.1} parent=11 // pred_check
          %p192 = pneg %p67
        $region14: #{tpu_custom_call.1} parent=11 // pred_check_branch
          %194 = sbr.rel (%p192) target = $region16
        $region15: #{tpu_custom_call.1} parent=11 // pred_region
          _
        $region16: #{tpu_custom_call.1} parent=11 // pred_fallthru
          _
        // Predicated region
        $region17: #{tpu_custom_call.1} parent=11 // pred_check
          %p195 = pneg %p88
        $region18: #{tpu_custom_call.1} parent=11 // pred_check_branch
          %197 = sbr.rel (%p195) target = $region20
        $region19: #{tpu_custom_call.1} parent=11 // pred_region
          %s199 = ssub.s32 128, 128
          %200 = vsyncadd [#allocation6], %s199
          %s201 = sshll.u32 [#allocation5], 4
          %s202 = int_to_ptr.vmem [resolvable:$true] %s201
          %207 = dma.hbm_to_vmem [thread:$0]  %s2, 128, %s202, [#allocation6], 16, 16, 1
        $region20: #{tpu_custom_call.1} parent=11 // pred_fallthru
          _
        // Predicated region
        $region21: #{tpu_custom_call.1} parent=11 // pred_check
          %p208 = pneg %p109
        $region22: #{tpu_custom_call.1} parent=11 // pred_check_branch
          %210 = sbr.rel (%p208) target = $region24
        $region23: #{tpu_custom_call.1} parent=11 // pred_region
          %s212 = ssub.s32 6144, 6144
          %213 = vsyncadd [#allocation6], %s212
          %s214 = sshll.u32 [#allocation7], 4
          %s215 = int_to_ptr.vmem [resolvable:$true] %s214
          %220 = dma.hbm_to_vmem [thread:$0]  %s3, 6144, %s215, [#allocation6], 384, 384, 24
        $region24: #{tpu_custom_call.1} parent=11 // pred_fallthru
          _
        // Predicated region
        $region25: #{tpu_custom_call.1} parent=11 // pred_check
          %p221 = pneg %p130
        $region26: #{tpu_custom_call.1} parent=11 // pred_check_branch
          %223 = sbr.rel (%p221) target = $region28
        $region27: #{tpu_custom_call.1} parent=11 // pred_region
          %s225 = ssub.s32 4096, 4096
          %226 = vsyncadd [#allocation9], %s225
          %s227 = sshll.u32 [#allocation8], 4
          %s228 = int_to_ptr.vmem [resolvable:$true] %s227
          %233 = dma.hbm_to_vmem [thread:$0]  %s4, 4096, %s228, [#allocation9], 256, 256, 16
        $region28: #{tpu_custom_call.1} parent=11 // pred_fallthru
          _
        // Predicated region
        $region29: #{tpu_custom_call.1} parent=11 // pred_check
          %p234 = pneg %p151
        $region30: #{tpu_custom_call.1} parent=11 // pred_check_branch
          %236 = sbr.rel (%p234) target = $region32
        $region31: #{tpu_custom_call.1} parent=11 // pred_region
          %s238 = ssub.s32 4096, 4096
          %239 = vsyncadd [#allocation9], %s238
          %s240 = sshll.u32 [#allocation10], 4
          %s241 = int_to_ptr.vmem [resolvable:$true] %s240
          %246 = dma.hbm_to_vmem [thread:$0]  %s5, 4096, %s241, [#allocation9], 128, 128, 8
        $region32: #{tpu_custom_call.1} parent=11 // pred_fallthru
          _
      $region12: #{tpu_custom_call.1} parent=5 // pred_fallthru
        _
      %p247 = scmp.lt.s32.totalorder %s20, 2
      // Predicated region
      $region33: #{tpu_custom_call.1} parent=5 // pred_check
        %p248 = pneg %p247
      $region34: #{tpu_custom_call.1} parent=5 // pred_check_branch
        %250 = sbr.rel (%p248) target = $region36
      $region35: #{tpu_custom_call.1} parent=5 // pred_region
        // Predicated region
        $region37: #{tpu_custom_call.1} parent=35 // pred_check
          %p251 = pneg %p40
        $region38: #{tpu_custom_call.1} parent=35 // pred_check_branch
          %253 = sbr.rel (%p251) target = $region40
        $region39: #{tpu_custom_call.1} parent=35 // pred_region
          %s254 = sand.u32 %s30, 1
          %s255 = scalar_lea.sflag [#allocation3], %s254
          %s256 = sand.u32 %s30, 1
          %s257 = smul.addr %s256, 64
          %s258 = scalar_lea.vmem [#allocation2], %s257
          %s260 = ssub.s32 1024, 1024
          %261 = vsyncadd %s255, %s260
          %s262 = smul.addr %s20, 8
          %s263 = smul.addr %s262, 128
          %s264 = scalar_lea.hbm %s0, %s263
          %s265 = sshll.u32 %s258, 4
          %s266 = int_to_ptr.vmem [resolvable:$true] %s265
          %271 = dma.hbm_to_vmem [thread:$0]  %s264, 1024, %s266, %s255, 128, 128, 8
        $region40: #{tpu_custom_call.1} parent=35 // pred_fallthru
          _
      $region36: #{tpu_custom_call.1} parent=5 // pred_fallthru
        _
      %p272 = scmp.le.s32.totalorder 1, %s20
      %p273 = scmp.lt.s32.totalorder %s20, 3
      %p274 = pnand %p272, %p273
      %p275 = pneg %p274
      // Predicated region
      $region41: #{tpu_custom_call.1} parent=5 // pred_check
        _
      $region42: #{tpu_custom_call.1} parent=5 // pred_check_branch
        %277 = sbr.rel (%p274) target = $region44
      $region43: #{tpu_custom_call.1} parent=5 // pred_region
        %s278 = ssub.s32 %s20, 1
        %s279 = sand.u32 %s33, 1
        %s280 = scalar_lea.sflag [#allocation3], %s279
        %s281 = sand.u32 %s33, 1
        %s282 = smul.addr %s281, 64
        %s283 = scalar_lea.vmem [#allocation2], %s282
        // Predicated region
        $region45: #{tpu_custom_call.1} parent=43 // pred_check
          %p284 = pneg %p46
        $region46: #{tpu_custom_call.1} parent=43 // pred_check_branch
          %286 = sbr.rel (%p284) target = $region48
        $region47: #{tpu_custom_call.1} parent=43 // pred_region
          %287 = dma.done %s280, 1024
        $region48: #{tpu_custom_call.1} parent=43 // pred_fallthru
          _
        // Predicated region
        $region49: #{tpu_custom_call.1} parent=43 // pred_check
          %p288 = pneg %p88
        $region50: #{tpu_custom_call.1} parent=43 // pred_check_branch
          %290 = sbr.rel (%p288) target = $region52
        $region51: #{tpu_custom_call.1} parent=43 // pred_region
          %291 = dma.done [#allocation6], 128
        $region52: #{tpu_custom_call.1} parent=43 // pred_fallthru
          _
        // Predicated region
        $region53: #{tpu_custom_call.1} parent=43 // pred_check
          %p292 = pneg %p109
        $region54: #{tpu_custom_call.1} parent=43 // pred_check_branch
          %294 = sbr.rel (%p292) target = $region56
        $region55: #{tpu_custom_call.1} parent=43 // pred_region
          %295 = dma.done [#allocation6], 6144
        $region56: #{tpu_custom_call.1} parent=43 // pred_fallthru
          _
        // Predicated region
        $region57: #{tpu_custom_call.1} parent=43 // pred_check
          %p296 = pneg %p130
        $region58: #{tpu_custom_call.1} parent=43 // pred_check_branch
          %298 = sbr.rel (%p296) target = $region60
        $region59: #{tpu_custom_call.1} parent=43 // pred_region
          %299 = dma.done [#allocation9], 4096
        $region60: #{tpu_custom_call.1} parent=43 // pred_fallthru
          _
        // Predicated region
        $region61: #{tpu_custom_call.1} parent=43 // pred_check
          %p300 = pneg %p151
        $region62: #{tpu_custom_call.1} parent=43 // pred_check_branch
          %302 = sbr.rel (%p300) target = $region64
        $region63: #{tpu_custom_call.1} parent=43 // pred_region
          %303 = dma.done [#allocation9], 4096
        $region64: #{tpu_custom_call.1} parent=43 // pred_fallthru
          _
        %s304 = sand.u32 %s33, 1
        %s305 = scalar_lea.sflag [#allocation3], %s304
        %s306 = sand.u32 %s33, 1
        %s307 = smul.addr %s306, 64
        %s308 = scalar_lea.vmem [#allocation2], %s307
        %p309 = pneg %p46
        %p310 = pneg %p43
        %p311 = pneg %p67
        %p312 = pneg %p64
        %p313 = pneg %p88
        %p314 = pneg %p85
        %p315 = pneg %p109
        %p316 = pneg %p106
        %p317 = pneg %p130
        %p318 = pneg %p127
        %p319 = pneg %p151
        %p320 = pneg %p148
        %p321 = pneg %p177
        %p322 = pneg %p174
        %s323 = sand.u32 %s164, 1
        %s324 = scalar_lea.sflag [#allocation4], %s323
        %s325 = sand.u32 %s164, 1
        %s326 = smul.addr %s325, 64
        %s327 = scalar_lea.vmem [#allocation11], %s326
        %v328 = vld [vmem:[%s283] sm:$0xff]
        %v329 = vld [vmem:[%s283 + $0x8] sm:$0xff]
        %v330 = vld [vmem:[%s283 + $0x10] sm:$0xff]
        %v331 = vld [vmem:[%s283 + $0x18] sm:$0xff]
        %v332 = vld [vmem:[%s283 + $0x20] sm:$0xff]
        %v333 = vld [vmem:[%s283 + $0x28] sm:$0xff]
        %v334 = vld [vmem:[%s283 + $0x30] sm:$0xff]
        %v335 = vld [vmem:[%s283 + $0x38] sm:$0xff]
        %v336 = vld [vmem:[%s1] sm:$0x1]
        %v337 = vld [vmem:[#allocation5] sm:$0x1]
        %v338 = vld [vmem:[#allocation5 + $0x1] sm:$0x1]
        %v339 = vld [vmem:[#allocation5 + $0x2] sm:$0x1]
        %v340 = vld [vmem:[#allocation5 + $0x3] sm:$0x1]
        %v341 = vld [vmem:[#allocation5 + $0x4] sm:$0x1]
        %v342 = vld [vmem:[#allocation5 + $0x5] sm:$0x1]
        %v343 = vld [vmem:[#allocation5 + $0x6] sm:$0x1]
        %v344 = vld [vmem:[#allocation5 + $0x7] sm:$0x1]
        %v345 = vmul.f32 %v328, %v328
        %v346 = vmul.f32 %v329, %v329
        %v347 = vmul.f32 %v330, %v330
        %v348 = vmul.f32 %v331, %v331
        %v349 = vmul.f32 %v332, %v332
        %v350 = vmul.f32 %v333, %v333
        %v351 = vmul.f32 %v334, %v334
        %v352 = vmul.f32 %v335, %v335
        %353 = vadd.xlane.f32.xlu0 %v345
        %v354 = vpop.xlane.xlu0 %353
        %355 = vadd.xlane.f32.xlu0 %v346
        %v356 = vpop.xlane.xlu0 %355
        %357 = vadd.xlane.f32.xlu0 %v347
        %v358 = vpop.xlane.xlu0 %357
        %359 = vadd.xlane.f32.xlu0 %v348
        %v360 = vpop.xlane.xlu0 %359
        %361 = vadd.xlane.f32.xlu0 %v349
        %v362 = vpop.xlane.xlu0 %361
        %363 = vadd.xlane.f32.xlu0 %v350
        %v364 = vpop.xlane.xlu0 %363
        %365 = vadd.xlane.f32.xlu0 %v351
        %v366 = vpop.xlane.xlu0 %365
        %367 = vadd.xlane.f32.xlu0 %v352
        %v368 = vpop.xlane.xlu0 %367
        %v369 = vmul.f32 %v354, 0.03125
        %v370 = vmul.f32 %v356, 0.03125
        %v371 = vmul.f32 %v358, 0.03125
        %v372 = vmul.f32 %v360, 0.03125
        %v373 = vmul.f32 %v362, 0.03125
        %v374 = vmul.f32 %v364, 0.03125
        %v375 = vmul.f32 %v366, 0.03125
        %v376 = vmul.f32 %v368, 0.03125
        %v377 = vadd.f32 %v369, 1e-06
        %v378 = vadd.f32 %v370, 1e-06
        %v379 = vadd.f32 %v371, 1e-06
        %v380 = vadd.f32 %v372, 1e-06
        %v381 = vadd.f32 %v373, 1e-06
        %v382 = vadd.f32 %v374, 1e-06
        %v383 = vadd.f32 %v375, 1e-06
        %v384 = vadd.f32 %v376, 1e-06
        %v385 = vrsqrt.pop %v377
        %v386 = vrsqrt.pop %v378
        %v387 = vrsqrt.pop %v379
        %v388 = vrsqrt.pop %v380
        %v389 = vrsqrt.pop %v381
        %v390 = vrsqrt.pop %v382
        %v391 = vrsqrt.pop %v383
        %v392 = vrsqrt.pop %v384
        %v393 = vmul.f32 %v328, %v385
        %v394 = vmul.f32 %v329, %v386
        %v395 = vmul.f32 %v330, %v387
        %v396 = vmul.f32 %v331, %v388
        %v397 = vmul.f32 %v332, %v389
        %v398 = vmul.f32 %v333, %v390
        %v399 = vmul.f32 %v334, %v391
        %v400 = vmul.f32 %v335, %v392
        %v402 = vlaneseq
        %v403 = vshrl.u32 %v402, 7
        %v404 = vsub.s32 0, %v403
        %v405 = vrot.slane %v336, %v404
        %v407 = vmul.f32 %v393, %v405
        %v408 = vmul.f32 %v394, %v405
        %v409 = vmul.f32 %v395, %v405
        %v410 = vmul.f32 %v396, %v405
        %v411 = vmul.f32 %v397, %v405
        %v412 = vmul.f32 %v398, %v405
        %v413 = vmul.f32 %v399, %v405
        %v414 = vmul.f32 %v400, %v405
        %v415 = vmul.f32 %v407, %v407
        %v416 = vmul.f32 %v408, %v408
        %v417 = vmul.f32 %v409, %v409
        %v418 = vmul.f32 %v410, %v410
        %v419 = vmul.f32 %v411, %v411
        %v420 = vmul.f32 %v412, %v412
        %v421 = vmul.f32 %v413, %v413
        %v422 = vmul.f32 %v414, %v414
        %423 = vadd.xlane.f32.xlu0 %v415
        %v424 = vpop.xlane.xlu0 %423
        %425 = vadd.xlane.f32.xlu0 %v416
        %v426 = vpop.xlane.xlu0 %425
        %427 = vadd.xlane.f32.xlu0 %v417
        %v428 = vpop.xlane.xlu0 %427
        %429 = vadd.xlane.f32.xlu0 %v418
        %v430 = vpop.xlane.xlu0 %429
        %431 = vadd.xlane.f32.xlu0 %v419
        %v432 = vpop.xlane.xlu0 %431
        %433 = vadd.xlane.f32.xlu0 %v420
        %v434 = vpop.xlane.xlu0 %433
        %435 = vadd.xlane.f32.xlu0 %v421
        %v436 = vpop.xlane.xlu0 %435
        %437 = vadd.xlane.f32.xlu0 %v422
        %v438 = vpop.xlane.xlu0 %437
        %v439 = vmul.f32 %v424, 0.03125
        %v440 = vmul.f32 %v426, 0.03125
        %v441 = vmul.f32 %v428, 0.03125
        %v442 = vmul.f32 %v430, 0.03125
        %v443 = vmul.f32 %v432, 0.03125
        %v444 = vmul.f32 %v434, 0.03125
        %v445 = vmul.f32 %v436, 0.03125
        %v446 = vmul.f32 %v438, 0.03125
        %v447 = vadd.f32 %v439, 1e-06
        %v448 = vadd.f32 %v440, 1e-06
        %v449 = vadd.f32 %v441, 1e-06
        %v450 = vadd.f32 %v442, 1e-06
        %v451 = vadd.f32 %v443, 1e-06
        %v452 = vadd.f32 %v444, 1e-06
        %v453 = vadd.f32 %v445, 1e-06
        %v454 = vadd.f32 %v446, 1e-06
        %v455 = vrsqrt.pop %v447
        %v456 = vrsqrt.pop %v448
        %v457 = vrsqrt.pop %v449
        %v458 = vrsqrt.pop %v450
        %v459 = vrsqrt.pop %v451
        %v460 = vrsqrt.pop %v452
        %v461 = vrsqrt.pop %v453
        %v462 = vrsqrt.pop %v454
        %v463 = vld [vmem:[#allocation7] sm:$0xff]
        %v464 = vld [vmem:[#allocation7 + $0x8] sm:$0xff]
        %v465 = vld [vmem:[#allocation7 + $0x10] sm:$0xff]
        %v466 = vld [vmem:[#allocation7 + $0x18] sm:$0xff]
        %v467 = vld [vmem:[#allocation7 + $0x20] sm:$0xff]
        %v468 = vld [vmem:[#allocation7 + $0x28] sm:$0xff]
        %v469 = vld [vmem:[#allocation7 + $0x30] sm:$0xff]
        %v470 = vld [vmem:[#allocation7 + $0x38] sm:$0xff]
        %v471 = vld [vmem:[#allocation7 + $0x40] sm:$0xff]
        %v472 = vld [vmem:[#allocation7 + $0x48] sm:$0xff]
        %v473 = vld [vmem:[#allocation7 + $0x50] sm:$0xff]
        %v474 = vld [vmem:[#allocation7 + $0x58] sm:$0xff]
        %v475 = vld [vmem:[#allocation7 + $0x60] sm:$0xff]
        %v476 = vld [vmem:[#allocation7 + $0x68] sm:$0xff]
        %v477 = vld [vmem:[#allocation7 + $0x70] sm:$0xff]
        %v478 = vld [vmem:[#allocation7 + $0x78] sm:$0xff]
        %v479 = vld [vmem:[#allocation7 + $0x80] sm:$0xff]
        %v480 = vld [vmem:[#allocation7 + $0x88] sm:$0xff]
        %v481 = vld [vmem:[#allocation7 + $0x90] sm:$0xff]
        %v482 = vld [vmem:[#allocation7 + $0x98] sm:$0xff]
        %v483 = vld [vmem:[#allocation7 + $0xa0] sm:$0xff]
        %v484 = vld [vmem:[#allocation7 + $0xa8] sm:$0xff]
        %v485 = vld [vmem:[#allocation7 + $0xb0] sm:$0xff]
        %v486 = vld [vmem:[#allocation7 + $0xb8] sm:$0xff]
        %v487 = vld [vmem:[#allocation7 + $0xc0] sm:$0xff]
        %v488 = vld [vmem:[#allocation7 + $0xc8] sm:$0xff]
        %v489 = vld [vmem:[#allocation7 + $0xd0] sm:$0xff]
        %v490 = vld [vmem:[#allocation7 + $0xd8] sm:$0xff]
        %v491 = vld [vmem:[#allocation7 + $0xe0] sm:$0xff]
        %v492 = vld [vmem:[#allocation7 + $0xe8] sm:$0xff]
        %v493 = vld [vmem:[#allocation7 + $0xf0] sm:$0xff]
        %v494 = vld [vmem:[#allocation7 + $0xf8] sm:$0xff]
        %v495 = vld [vmem:[#allocation7 + $0x100] sm:$0xff]
        %v496 = vld [vmem:[#allocation7 + $0x108] sm:$0xff]
        %v497 = vld [vmem:[#allocation7 + $0x110] sm:$0xff]
        %v498 = vld [vmem:[#allocation7 + $0x118] sm:$0xff]
        %v499 = vld [vmem:[#allocation7 + $0x120] sm:$0xff]
        %v500 = vld [vmem:[#allocation7 + $0x128] sm:$0xff]
        %v501 = vld [vmem:[#allocation7 + $0x130] sm:$0xff]
        %v502 = vld [vmem:[#allocation7 + $0x138] sm:$0xff]
        %v503 = vld [vmem:[#allocation7 + $0x140] sm:$0xff]
        %v504 = vld [vmem:[#allocation7 + $0x148] sm:$0xff]
        %v505 = vld [vmem:[#allocation7 + $0x150] sm:$0xff]
        %v506 = vld [vmem:[#allocation7 + $0x158] sm:$0xff]
        %v507 = vld [vmem:[#allocation7 + $0x160] sm:$0xff]
        %v508 = vld [vmem:[#allocation7 + $0x168] sm:$0xff]
        %v509 = vld [vmem:[#allocation7 + $0x170] sm:$0xff]
        %v510 = vld [vmem:[#allocation7 + $0x178] sm:$0xff]
        %511 = vmatprep.subr.mxu0 %v464
        %512 = vmatpush1.msra.mxu0 %v463
        %513 = vmatprep.subr.mxu0 %v467
        %514 = vmatpush1.msra.mxu0 %v466
        %515 = vmatprep.subr.mxu0 %v470
        %516 = vmatpush1.msra.mxu0 %v469
        %517 = vmatprep.subr.mxu0 %v473
        %518 = vmatpush1.msra.mxu0 %v472
        %519 = vmatprep.subr.mxu0 %v476
        %520 = vmatpush1.msra.mxu0 %v475
        %521 = vmatprep.subr.mxu0 %v479
        %522 = vmatpush1.msra.mxu0 %v478
        %523 = vmatprep.subr.mxu0 %v482
        %524 = vmatpush1.msra.mxu0 %v481
        %525 = vmatprep.subr.mxu0 %v485
        %526 = vmatpush1.msra.mxu0 %v484
        %527 = vmatprep.subr.mxu0 %v488
        %528 = vmatpush1.msra.mxu0 %v487
        %529 = vmatprep.subr.mxu0 %v491
        %530 = vmatpush1.msra.mxu0 %v490
        %531 = vmatprep.subr.mxu0 %v494
        %532 = vmatpush1.msra.mxu0 %v493
        %533 = vmatprep.subr.mxu0 %v497
        %534 = vmatpush1.msra.mxu0 %v496
        %535 = vmatprep.subr.mxu0 %v500
        %536 = vmatpush1.msra.mxu0 %v499
        %537 = vmatprep.subr.mxu0 %v503
        %538 = vmatpush1.msra.mxu0 %v502
        %539 = vmatprep.subr.mxu0 %v506
        %540 = vmatpush1.msra.mxu0 %v505
        %541 = vmatprep.subr.mxu0 %v509
        %542 = vmatpush1.msra.mxu0 %v508
        %543 = vmatprep.subr.mxu0 0.0
        %544 = vmatpush1.msra.mxu0 0.0
        %545 = vmatprep.subr.mxu0 0.0
        %546 = vmatpush1.msra.mxu0 0.0
        %547 = vmatprep.subr.mxu0 0.0
        %548 = vmatpush1.msra.mxu0 0.0
        %549 = vmatprep.subr.mxu0 0.0
        %550 = vmatpush1.msra.mxu0 0.0
        %551 = vmatprep.subr.mxu0 0.0
        %552 = vmatpush1.msra.mxu0 0.0
        %553 = vmatprep.subr.mxu0 0.0
        %554 = vmatpush1.msra.mxu0 0.0
        %555 = vmatprep.subr.mxu0 0.0
        %556 = vmatpush1.msra.mxu0 0.0
        %557 = vmatprep.subr.mxu0 0.0
        %558 = vmatpush1.msra.mxu0 0.0
        %559 = vmatprep.subr.mxu0 0.0
        %560 = vmatpush1.msra.mxu0 0.0
        %561 = vmatprep.subr.mxu0 0.0
        %562 = vmatpush1.msra.mxu0 0.0
        %563 = vmatprep.subr.mxu0 0.0
        %564 = vmatpush1.msra.mxu0 0.0
        %565 = vmatprep.subr.mxu0 0.0
        %566 = vmatpush1.msra.mxu0 0.0
        %567 = vmatprep.subr.mxu0 0.0
        %568 = vmatpush1.msra.mxu0 0.0
        %569 = vmatprep.subr.mxu0 0.0
        %570 = vmatpush1.msra.mxu0 0.0
        %571 = vmatprep.subr.mxu0 0.0
        %572 = vmatpush1.msra.mxu0 0.0
        %573 = vmatprep.subr.mxu0 0.0
        %574 = vmatpush1.msra.mxu0 0.0
        %575 = vmatprep.mubr.f32.mxu0 0.0
        %576 = vmatmul.mubr.f32.gmra.mrb[0].mxu0 %v407
        %v577 = vpop.f32.mrb[0].mxu0
        %v578 = vadd.f32 0.0, %v577
        %v579 = vpop.f32.mrb[0].mxu0
        %v580 = vadd.f32 0.0, %v579
        %581 = vmatprep.mubr.f32.mxu0 0.0
        %582 = vmatmul.mubr.f32.gmra.mrb[0].mxu0 %v408
        %v583 = vpop.f32.mrb[0].mxu0
        %v584 = vadd.f32 0.0, %v583
        %v585 = vpop.f32.mrb[0].mxu0
        %v586 = vadd.f32 0.0, %v585
        %587 = vmatprep.mubr.f32.mxu0 0.0
        %588 = vmatmul.mubr.f32.gmra.mrb[0].mxu0 %v409
        %v589 = vpop.f32.mrb[0].mxu0
        %v590 = vadd.f32 0.0, %v589
        %v591 = vpop.f32.mrb[0].mxu0
        %v592 = vadd.f32 0.0, %v591
        %593 = vmatprep.mubr.f32.mxu0 0.0
        %594 = vmatmul.mubr.f32.gmra.mrb[0].mxu0 %v410
        %v595 = vpop.f32.mrb[0].mxu0
        %v596 = vadd.f32 0.0, %v595
        %v597 = vpop.f32.mrb[0].mxu0
        %v598 = vadd.f32 0.0, %v597
        %599 = vmatprep.mubr.f32.mxu0 0.0
        %600 = vmatmul.mubr.f32.gmra.mrb[0].mxu0 %v411
        %v601 = vpop.f32.mrb[0].mxu0
        %v602 = vadd.f32 0.0, %v601
        %v603 = vpop.f32.mrb[0].mxu0
        %v604 = vadd.f32 0.0, %v603
        %605 = vmatprep.mubr.f32.mxu0 0.0
        %606 = vmatmul.mubr.f32.gmra.mrb[0].mxu0 %v412
        %v607 = vpop.f32.mrb[0].mxu0
        %v608 = vadd.f32 0.0, %v607
        %v609 = vpop.f32.mrb[0].mxu0
        %v610 = vadd.f32 0.0, %v609
        %611 = vmatprep.mubr.f32.mxu0 0.0
        %612 = vmatmul.mubr.f32.gmra.mrb[0].mxu0 %v413
        %v613 = vpop.f32.mrb[0].mxu0
        %v614 = vadd.f32 0.0, %v613
        %v615 = vpop.f32.mrb[0].mxu0
        %v616 = vadd.f32 0.0, %v615
        %617 = vmatprep.mubr.f32.mxu0 0.0
        %618 = vmatmul.mubr.f32.gmra.mrb[0].mxu0 %v414
        %v619 = vpop.f32.mrb[0].mxu0
        %v620 = vadd.f32 0.0, %v619
        %v621 = vpop.f32.mrb[0].mxu0
        %v622 = vadd.f32 0.0, %v621
        %623 = vdwg.mxu0
        %624 = vmatprep.subr.mxu0 0.0
        %625 = vmatpush1.msra.mxu0 %v465
        %626 = vmatprep.subr.mxu0 0.0
        %627 = vmatpush1.msra.mxu0 %v468
        %628 = vmatprep.subr.mxu0 0.0
        %629 = vmatpush1.msra.mxu0 %v471
        %630 = vmatprep.subr.mxu0 0.0
        %631 = vmatpush1.msra.mxu0 %v474
        %632 = vmatprep.subr.mxu0 0.0
        %633 = vmatpush1.msra.mxu0 %v477
        %634 = vmatprep.subr.mxu0 0.0
        %635 = vmatpush1.msra.mxu0 %v480
        %636 = vmatprep.subr.mxu0 0.0
        %637 = vmatpush1.msra.mxu0 %v483
        %638 = vmatprep.subr.mxu0 0.0
        %639 = vmatpush1.msra.mxu0 %v486
        %640 = vmatprep.subr.mxu0 0.0
        %641 = vmatpush1.msra.mxu0 %v489
        %642 = vmatprep.subr.mxu0 0.0
        %643 = vmatpush1.msra.mxu0 %v492
        %644 = vmatprep.subr.mxu0 0.0
        %645 = vmatpush1.msra.mxu0 %v495
        %646 = vmatprep.subr.mxu0 0.0
        %647 = vmatpush1.msra.mxu0 %v498
        %648 = vmatprep.subr.mxu0 0.0
        %649 = vmatpush1.msra.mxu0 %v501
        %650 = vmatprep.subr.mxu0 0.0
        %651 = vmatpush1.msra.mxu0 %v504
        %652 = vmatprep.subr.mxu0 0.0
        %653 = vmatpush1.msra.mxu0 %v507
        %654 = vmatprep.subr.mxu0 0.0
        %655 = vmatpush1.msra.mxu0 %v510
        %656 = vmatprep.subr.mxu0 0.0
        %657 = vmatpush1.msra.mxu0 0.0
        %658 = vmatprep.subr.mxu0 0.0
        %659 = vmatpush1.msra.mxu0 0.0
        %660 = vmatprep.subr.mxu0 0.0
        %661 = vmatpush1.msra.mxu0 0.0
        %662 = vmatprep.subr.mxu0 0.0
        %663 = vmatpush1.msra.mxu0 0.0
        %664 = vmatprep.subr.mxu0 0.0
        %665 = vmatpush1.msra.mxu0 0.0
        %666 = vmatprep.subr.mxu0 0.0
        %667 = vmatpush1.msra.mxu0 0.0
        %668 = vmatprep.subr.mxu0 0.0
        %669 = vmatpush1.msra.mxu0 0.0
        %670 = vmatprep.subr.mxu0 0.0
        %671 = vmatpush1.msra.mxu0 0.0
        %672 = vmatprep.subr.mxu0 0.0
        %673 = vmatpush1.msra.mxu0 0.0
        %674 = vmatprep.subr.mxu0 0.0
        %675 = vmatpush1.msra.mxu0 0.0
        %676 = vmatprep.subr.mxu0 0.0
        %677 = vmatpush1.msra.mxu0 0.0
        %678 = vmatprep.subr.mxu0 0.0
        %679 = vmatpush1.msra.mxu0 0.0
        %680 = vmatprep.subr.mxu0 0.0
        %681 = vmatpush1.msra.mxu0 0.0
        %682 = vmatprep.subr.mxu0 0.0
        %683 = vmatpush1.msra.mxu0 0.0
        %684 = vmatprep.subr.mxu0 0.0
        %685 = vmatpush1.msra.mxu0 0.0
        %686 = vmatprep.subr.mxu0 0.0
        %687 = vmatpush1.msra.mxu0 0.0
        %688 = vmatprep.mubr.f32.mxu0 0.0
        %689 = vmatmul.mubr.f32.gmra.mrb[0].mxu0 %v407
        %v690 = vpop.f32.mrb[0].mxu0
        %v691 = vadd.f32 0.0, %v690
        %v692 = vpop.f32.mrb[0].mxu0
        %693 = vmatprep.mubr.f32.mxu0 0.0
        %694 = vmatmul.mubr.f32.gmra.mrb[0].mxu0 %v408
        %v695 = vpop.f32.mrb[0].mxu0
        %v696 = vadd.f32 0.0, %v695
        %v697 = vpop.f32.mrb[0].mxu0
        %698 = vmatprep.mubr.f32.mxu0 0.0
        %699 = vmatmul.mubr.f32.gmra.mrb[0].mxu0 %v409
        %v700 = vpop.f32.mrb[0].mxu0
        %v701 = vadd.f32 0.0, %v700
        %v702 = vpop.f32.mrb[0].mxu0
        %703 = vmatprep.mubr.f32.mxu0 0.0
        %704 = vmatmul.mubr.f32.gmra.mrb[0].mxu0 %v410
        %v705 = vpop.f32.mrb[0].mxu0
        %v706 = vadd.f32 0.0, %v705
        %v707 = vpop.f32.mrb[0].mxu0
        %708 = vmatprep.mubr.f32.mxu0 0.0
        %709 = vmatmul.mubr.f32.gmra.mrb[0].mxu0 %v411
        %v710 = vpop.f32.mrb[0].mxu0
        %v711 = vadd.f32 0.0, %v710
        %v712 = vpop.f32.mrb[0].mxu0
        %713 = vmatprep.mubr.f32.mxu0 0.0
        %714 = vmatmul.mubr.f32.gmra.mrb[0].mxu0 %v412
        %v715 = vpop.f32.mrb[0].mxu0
        %v716 = vadd.f32 0.0, %v715
        %v717 = vpop.f32.mrb[0].mxu0
        %718 = vmatprep.mubr.f32.mxu0 0.0
        %719 = vmatmul.mubr.f32.gmra.mrb[0].mxu0 %v413
        %v720 = vpop.f32.mrb[0].mxu0
        %v721 = vadd.f32 0.0, %v720
        %v722 = vpop.f32.mrb[0].mxu0
        %723 = vmatprep.mubr.f32.mxu0 0.0
        %724 = vmatmul.mubr.f32.gmra.mrb[0].mxu0 %v414
        %v725 = vpop.f32.mrb[0].mxu0
        %v726 = vadd.f32 0.0, %v725
        %v727 = vpop.f32.mrb[0].mxu0
        %728 = vdwg.mxu0
        %v729 = vmul.f32 %v578, %v455
        %v730 = vmul.f32 %v584, %v456
        %v731 = vmul.f32 %v590, %v457
        %v732 = vmul.f32 %v596, %v458
        %v733 = vmul.f32 %v602, %v459
        %v734 = vmul.f32 %v608, %v460
        %v735 = vmul.f32 %v614, %v461
        %v736 = vmul.f32 %v620, %v462
        %v737 = vmul.f32 %v580, %v580
        %v738 = vmul.f32 %v586, %v586
        %v739 = vmul.f32 %v592, %v592
        %v740 = vmul.f32 %v598, %v598
        %v741 = vmul.f32 %v604, %v604
        %v742 = vmul.f32 %v610, %v610
        %v743 = vmul.f32 %v616, %v616
        %v744 = vmul.f32 %v622, %v622
        %745 = vadd.xlane.f32.xlu0 %v737
        %v746 = vpop.xlane.xlu0 %745
        %747 = vadd.xlane.f32.xlu0 %v738
        %v748 = vpop.xlane.xlu0 %747
        %749 = vadd.xlane.f32.xlu0 %v739
        %v750 = vpop.xlane.xlu0 %749
        %751 = vadd.xlane.f32.xlu0 %v740
        %v752 = vpop.xlane.xlu0 %751
        %753 = vadd.xlane.f32.xlu0 %v741
        %v754 = vpop.xlane.xlu0 %753
        %755 = vadd.xlane.f32.xlu0 %v742
        %v756 = vpop.xlane.xlu0 %755
        %757 = vadd.xlane.f32.xlu0 %v743
        %v758 = vpop.xlane.xlu0 %757
        %759 = vadd.xlane.f32.xlu0 %v744
        %v760 = vpop.xlane.xlu0 %759
        %v761 = vmul.f32 %v746, 0.03125
        %v762 = vmul.f32 %v748, 0.03125
        %v763 = vmul.f32 %v750, 0.03125
        %v764 = vmul.f32 %v752, 0.03125
        %v765 = vmul.f32 %v754, 0.03125
        %v766 = vmul.f32 %v756, 0.03125
        %v767 = vmul.f32 %v758, 0.03125
        %v768 = vmul.f32 %v760, 0.03125
        %v769 = vadd.f32 %v761, 1e-06
        %v770 = vadd.f32 %v762, 1e-06
        %v771 = vadd.f32 %v763, 1e-06
        %v772 = vadd.f32 %v764, 1e-06
        %v773 = vadd.f32 %v765, 1e-06
        %v774 = vadd.f32 %v766, 1e-06
        %v775 = vadd.f32 %v767, 1e-06
        %v776 = vadd.f32 %v768, 1e-06
        %v777 = vrsqrt.pop %v769
        %v778 = vrsqrt.pop %v770
        %v779 = vrsqrt.pop %v771
        %v780 = vrsqrt.pop %v772
        %v781 = vrsqrt.pop %v773
        %v782 = vrsqrt.pop %v774
        %v783 = vrsqrt.pop %v775
        %v784 = vrsqrt.pop %v776
        %v785 = vmul.f32 %v580, %v777
        %v786 = vmul.f32 %v586, %v778
        %v787 = vmul.f32 %v592, %v779
        %v788 = vmul.f32 %v598, %v780
        %v789 = vmul.f32 %v604, %v781
        %v790 = vmul.f32 %v610, %v782
        %v791 = vmul.f32 %v616, %v783
        %v792 = vmul.f32 %v622, %v784
        %v801 = vlaneseq
        %v802 = vshrl.u32 %v801, 7
        %v803 = vsub.s32 0, %v802
        %v804 = vrot.slane %v337, %v803
        %v805 = vlaneseq
        %v806 = vshrl.u32 %v805, 7
        %v807 = vsub.s32 0, %v806
        %v808 = vrot.slane %v338, %v807
        %v809 = vlaneseq
        %v810 = vshrl.u32 %v809, 7
        %v811 = vsub.s32 0, %v810
        %v812 = vrot.slane %v339, %v811
        %v813 = vlaneseq
        %v814 = vshrl.u32 %v813, 7
        %v815 = vsub.s32 0, %v814
        %v816 = vrot.slane %v340, %v815
        %v817 = vlaneseq
        %v818 = vshrl.u32 %v817, 7
        %v819 = vsub.s32 0, %v818
        %v820 = vrot.slane %v341, %v819
        %v821 = vlaneseq
        %v822 = vshrl.u32 %v821, 7
        %v823 = vsub.s32 0, %v822
        %v824 = vrot.slane %v342, %v823
        %v825 = vlaneseq
        %v826 = vshrl.u32 %v825, 7
        %v827 = vsub.s32 0, %v826
        %v828 = vrot.slane %v343, %v827
        %v829 = vlaneseq
        %v830 = vshrl.u32 %v829, 7
        %v831 = vsub.s32 0, %v830
        %v832 = vrot.slane %v344, %v831
        %v841 = vmul.f32 %v729, %v804
        %v842 = vmul.f32 %v730, %v804
        %v843 = vmul.f32 %v731, %v804
        %v844 = vmul.f32 %v732, %v804
        %v845 = vmul.f32 %v733, %v804
        %v846 = vmul.f32 %v734, %v804
        %v847 = vmul.f32 %v735, %v804
        %v848 = vmul.f32 %v736, %v804
        %v849 = vmul.f32 %v729, %v808
        %v850 = vmul.f32 %v730, %v808
        %v851 = vmul.f32 %v731, %v808
        %v852 = vmul.f32 %v732, %v808
        %v853 = vmul.f32 %v733, %v808
        %v854 = vmul.f32 %v734, %v808
        %v855 = vmul.f32 %v735, %v808
        %v856 = vmul.f32 %v736, %v808
        %v857 = vmul.f32 %v729, %v812
        %v858 = vmul.f32 %v730, %v812
        %v859 = vmul.f32 %v731, %v812
        %v860 = vmul.f32 %v732, %v812
        %v861 = vmul.f32 %v733, %v812
        %v862 = vmul.f32 %v734, %v812
        %v863 = vmul.f32 %v735, %v812
        %v864 = vmul.f32 %v736, %v812
        %v865 = vmul.f32 %v729, %v816
        %v866 = vmul.f32 %v730, %v816
        %v867 = vmul.f32 %v731, %v816
        %v868 = vmul.f32 %v732, %v816
        %v869 = vmul.f32 %v733, %v816
        %v870 = vmul.f32 %v734, %v816
        %v871 = vmul.f32 %v735, %v816
        %v872 = vmul.f32 %v736, %v816
        %v873 = vmul.f32 %v729, %v820
        %v874 = vmul.f32 %v730, %v820
        %v875 = vmul.f32 %v731, %v820
        %v876 = vmul.f32 %v732, %v820
        %v877 = vmul.f32 %v733, %v820
        %v878 = vmul.f32 %v734, %v820
        %v879 = vmul.f32 %v735, %v820
        %v880 = vmul.f32 %v736, %v820
        %v881 = vmul.f32 %v729, %v824
        %v882 = vmul.f32 %v730, %v824
        %v883 = vmul.f32 %v731, %v824
        %v884 = vmul.f32 %v732, %v824
        %v885 = vmul.f32 %v733, %v824
        %v886 = vmul.f32 %v734, %v824
        %v887 = vmul.f32 %v735, %v824
        %v888 = vmul.f32 %v736, %v824
        %v889 = vmul.f32 %v729, %v828
        %v890 = vmul.f32 %v730, %v828
        %v891 = vmul.f32 %v731, %v828
        %v892 = vmul.f32 %v732, %v828
        %v893 = vmul.f32 %v733, %v828
        %v894 = vmul.f32 %v734, %v828
        %v895 = vmul.f32 %v735, %v828
        %v896 = vmul.f32 %v736, %v828
        %v897 = vmul.f32 %v729, %v832
        %v898 = vmul.f32 %v730, %v832
        %v899 = vmul.f32 %v731, %v832
        %v900 = vmul.f32 %v732, %v832
        %v901 = vmul.f32 %v733, %v832
        %v902 = vmul.f32 %v734, %v832
        %v903 = vmul.f32 %v735, %v832
        %v904 = vmul.f32 %v736, %v832
        %905 = vmatprep.subr.mxu0 0.0
        %906 = vmatpush1.xpose.msra.mxu0 %v785
        %907 = vmatprep.subr.mxu0 0.0
        %908 = vmatpush1.xpose.msra.mxu0 %v786
        %909 = vmatprep.subr.mxu0 0.0
        %910 = vmatpush1.xpose.msra.mxu0 %v787
        %911 = vmatprep.subr.mxu0 0.0
        %912 = vmatpush1.xpose.msra.mxu0 %v788
        %913 = vmatprep.subr.mxu0 0.0
        %914 = vmatpush1.xpose.msra.mxu0 %v789
        %915 = vmatprep.subr.mxu0 0.0
        %916 = vmatpush1.xpose.msra.mxu0 %v790
        %917 = vmatprep.subr.mxu0 0.0
        %918 = vmatpush1.xpose.msra.mxu0 %v791
        %919 = vmatprep.subr.mxu0 0.0
        %920 = vmatpush1.xpose.msra.mxu0 %v792
        %921 = vmatprep.subr.mxu0 0.0
        %922 = vmatpush1.xpose.msra.mxu0 0.0
        %923 = vmatprep.subr.mxu0 0.0
        %924 = vmatpush1.xpose.msra.mxu0 0.0
        %925 = vmatprep.subr.mxu0 0.0
        %926 = vmatpush1.xpose.msra.mxu0 0.0
        %927 = vmatprep.subr.mxu0 0.0
        %928 = vmatpush1.xpose.msra.mxu0 0.0
        %929 = vmatprep.subr.mxu0 0.0
        %930 = vmatpush1.xpose.msra.mxu0 0.0
        %931 = vmatprep.subr.mxu0 0.0
        %932 = vmatpush1.xpose.msra.mxu0 0.0
        %933 = vmatprep.subr.mxu0 0.0
        %934 = vmatpush1.xpose.msra.mxu0 0.0
        %935 = vmatprep.subr.mxu0 0.0
        %936 = vmatpush1.xpose.msra.mxu0 0.0
        %937 = vmatprep.subr.mxu0 0.0
        %938 = vmatpush1.xpose.msra.mxu0 0.0
        %939 = vmatprep.subr.mxu0 0.0
        %940 = vmatpush1.xpose.msra.mxu0 0.0
        %941 = vmatprep.subr.mxu0 0.0
        %942 = vmatpush1.xpose.msra.mxu0 0.0
        %943 = vmatprep.subr.mxu0 0.0
        %944 = vmatpush1.xpose.msra.mxu0 0.0
        %945 = vmatprep.subr.mxu0 0.0
        %946 = vmatpush1.xpose.msra.mxu0 0.0
        %947 = vmatprep.subr.mxu0 0.0
        %948 = vmatpush1.xpose.msra.mxu0 0.0
        %949 = vmatprep.subr.mxu0 0.0
        %950 = vmatpush1.xpose.msra.mxu0 0.0
        %951 = vmatprep.subr.mxu0 0.0
        %952 = vmatpush1.xpose.msra.mxu0 0.0
        %953 = vmatprep.subr.mxu0 0.0
        %954 = vmatpush1.xpose.msra.mxu0 0.0
        %955 = vmatprep.subr.mxu0 0.0
        %956 = vmatpush1.xpose.msra.mxu0 0.0
        %957 = vmatprep.subr.mxu0 0.0
        %958 = vmatpush1.xpose.msra.mxu0 0.0
        %959 = vmatprep.subr.mxu0 0.0
        %960 = vmatpush1.xpose.msra.mxu0 0.0
        %961 = vmatprep.subr.mxu0 0.0
        %962 = vmatpush1.xpose.msra.mxu0 0.0
        %963 = vmatprep.subr.mxu0 0.0
        %964 = vmatpush1.xpose.msra.mxu0 0.0
        %965 = vmatprep.subr.mxu0 0.0
        %966 = vmatpush1.xpose.msra.mxu0 0.0
        %967 = vmatprep.subr.mxu0 0.0
        %968 = vmatpush1.xpose.msra.mxu0 0.0
        %969 = vmatprep.mubr.f32.mxu0 0.0
        %970 = vmatmul.mubr.f32.gmra.mrb[0].mxu0 %v841
        %v971 = vpop.f32.mrb[0].mxu0
        %v972 = vadd.f32 0.0, %v971
        %v973 = vpop.f32.mrb[0].mxu0
        %974 = vmatprep.mubr.f32.mxu0 0.0
        %975 = vmatmul.mubr.f32.gmra.mrb[0].mxu0 %v842
        %v976 = vpop.f32.mrb[0].mxu0
        %v977 = vadd.f32 0.0, %v976
        %v978 = vpop.f32.mrb[0].mxu0
        %979 = vmatprep.mubr.f32.mxu0 0.0
        %980 = vmatmul.mubr.f32.gmra.mrb[0].mxu0 %v843
        %v981 = vpop.f32.mrb[0].mxu0
        %v982 = vadd.f32 0.0, %v981
        %v983 = vpop.f32.mrb[0].mxu0
        %984 = vmatprep.mubr.f32.mxu0 0.0
        %985 = vmatmul.mubr.f32.gmra.mrb[0].mxu0 %v844
        %v986 = vpop.f32.mrb[0].mxu0
        %v987 = vadd.f32 0.0, %v986
        %v988 = vpop.f32.mrb[0].mxu0
        %989 = vmatprep.mubr.f32.mxu0 0.0
        %990 = vmatmul.mubr.f32.gmra.mrb[0].mxu0 %v845
        %v991 = vpop.f32.mrb[0].mxu0
        %v992 = vadd.f32 0.0, %v991
        %v993 = vpop.f32.mrb[0].mxu0
        %994 = vmatprep.mubr.f32.mxu0 0.0
        %995 = vmatmul.mubr.f32.gmra.mrb[0].mxu0 %v846
        %v996 = vpop.f32.mrb[0].mxu0
        %v997 = vadd.f32 0.0, %v996
        %v998 = vpop.f32.mrb[0].mxu0
        %999 = vmatprep.mubr.f32.mxu0 0.0
        %1000 = vmatmul.mubr.f32.gmra.mrb[0].mxu0 %v847
        %v1001 = vpop.f32.mrb[0].mxu0
        %v1002 = vadd.f32 0.0, %v1001
        %v1003 = vpop.f32.mrb[0].mxu0
        %1004 = vmatprep.mubr.f32.mxu0 0.0
        %1005 = vmatmul.mubr.f32.gmra.mrb[0].mxu0 %v848
        %v1006 = vpop.f32.mrb[0].mxu0
        %v1007 = vadd.f32 0.0, %v1006
        %v1008 = vpop.f32.mrb[0].mxu0
        %1009 = vmatprep.mubr.f32.mxu0 0.0
        %1010 = vmatmul.mubr.f32.gmra.mrb[0].mxu0 %v849
        %v1011 = vpop.f32.mrb[0].mxu0
        %v1012 = vadd.f32 0.0, %v1011
        %v1013 = vpop.f32.mrb[0].mxu0
        %1014 = vmatprep.mubr.f32.mxu0 0.0
        %1015 = vmatmul.mubr.f32.gmra.mrb[0].mxu0 %v850
        %v1016 = vpop.f32.mrb[0].mxu0
        %v1017 = vadd.f32 0.0, %v1016
        %v1018 = vpop.f32.mrb[0].mxu0
        %1019 = vmatprep.mubr.f32.mxu0 0.0
        %1020 = vmatmul.mubr.f32.gmra.mrb[0].mxu0 %v851
        %v1021 = vpop.f32.mrb[0].mxu0
        %v1022 = vadd.f32 0.0, %v1021
        %v1023 = vpop.f32.mrb[0].mxu0
        %1024 = vmatprep.mubr.f32.mxu0 0.0
        %1025 = vmatmul.mubr.f32.gmra.mrb[0].mxu0 %v852
        %v1026 = vpop.f32.mrb[0].mxu0
        %v1027 = vadd.f32 0.0, %v1026
        %v1028 = vpop.f32.mrb[0].mxu0
        %1029 = vmatprep.mubr.f32.mxu0 0.0
        %1030 = vmatmul.mubr.f32.gmra.mrb[0].mxu0 %v853
        %v1031 = vpop.f32.mrb[0].mxu0
        %v1032 = vadd.f32 0.0, %v1031
        %v1033 = vpop.f32.mrb[0].mxu0
        %1034 = vmatprep.mubr.f32.mxu0 0.0
        %1035 = vmatmul.mubr.f32.gmra.mrb[0].mxu0 %v854
        %v1036 = vpop.f32.mrb[0].mxu0
        %v1037 = vadd.f32 0.0, %v1036
        %v1038 = vpop.f32.mrb[0].mxu0
        %1039 = vmatprep.mubr.f32.mxu0 0.0
        %1040 = vmatmul.mubr.f32.gmra.mrb[0].mxu0 %v855
        %v1041 = vpop.f32.mrb[0].mxu0
        %v1042 = vadd.f32 0.0, %v1041
        %v1043 = vpop.f32.mrb[0].mxu0
        %1044 = vmatprep.mubr.f32.mxu0 0.0
        %1045 = vmatmul.mubr.f32.gmra.mrb[0].mxu0 %v856
        %v1046 = vpop.f32.mrb[0].mxu0
        %v1047 = vadd.f32 0.0, %v1046
        %v1048 = vpop.f32.mrb[0].mxu0
        %1049 = vmatprep.mubr.f32.mxu0 0.0
        %1050 = vmatmul.mubr.f32.gmra.mrb[0].mxu0 %v857
        %v1051 = vpop.f32.mrb[0].mxu0
        %v1052 = vadd.f32 0.0, %v1051
        %v1053 = vpop.f32.mrb[0].mxu0
        %1054 = vmatprep.mubr.f32.mxu0 0.0
        %1055 = vmatmul.mubr.f32.gmra.mrb[0].mxu0 %v858
        %v1056 = vpop.f32.mrb[0].mxu0
        %v1057 = vadd.f32 0.0, %v1056
        %v1058 = vpop.f32.mrb[0].mxu0
        %1059 = vmatprep.mubr.f32.mxu0 0.0
        %1060 = vmatmul.mubr.f32.gmra.mrb[0].mxu0 %v859
        %v1061 = vpop.f32.mrb[0].mxu0
        %v1062 = vadd.f32 0.0, %v1061
        %v1063 = vpop.f32.mrb[0].mxu0
        %1064 = vmatprep.mubr.f32.mxu0 0.0
        %1065 = vmatmul.mubr.f32.gmra.mrb[0].mxu0 %v860
        %v1066 = vpop.f32.mrb[0].mxu0
        %v1067 = vadd.f32 0.0, %v1066
        %v1068 = vpop.f32.mrb[0].mxu0
        %1069 = vmatprep.mubr.f32.mxu0 0.0
        %1070 = vmatmul.mubr.f32.gmra.mrb[0].mxu0 %v861
        %v1071 = vpop.f32.mrb[0].mxu0
        %v1072 = vadd.f32 0.0, %v1071
        %v1073 = vpop.f32.mrb[0].mxu0
        %1074 = vmatprep.mubr.f32.mxu0 0.0
        %1075 = vmatmul.mubr.f32.gmra.mrb[0].mxu0 %v862
        %v1076 = vpop.f32.mrb[0].mxu0
        %v1077 = vadd.f32 0.0, %v1076
        %v1078 = vpop.f32.mrb[0].mxu0
        %1079 = vmatprep.mubr.f32.mxu0 0.0
        %1080 = vmatmul.mubr.f32.gmra.mrb[0].mxu0 %v863
        %v1081 = vpop.f32.mrb[0].mxu0
        %v1082 = vadd.f32 0.0, %v1081
        %v1083 = vpop.f32.mrb[0].mxu0
        %1084 = vmatprep.mubr.f32.mxu0 0.0
        %1085 = vmatmul.mubr.f32.gmra.mrb[0].mxu0 %v864
        %v1086 = vpop.f32.mrb[0].mxu0
        %v1087 = vadd.f32 0.0, %v1086
        %v1088 = vpop.f32.mrb[0].mxu0
        %1089 = vmatprep.mubr.f32.mxu0 0.0
        %1090 = vmatmul.mubr.f32.gmra.mrb[0].mxu0 %v865
        %v1091 = vpop.f32.mrb[0].mxu0
        %v1092 = vadd.f32 0.0, %v1091
        %v1093 = vpop.f32.mrb[0].mxu0
        %1094 = vmatprep.mubr.f32.mxu0 0.0
        %1095 = vmatmul.mubr.f32.gmra.mrb[0].mxu0 %v866
        %v1096 = vpop.f32.mrb[0].mxu0
        %v1097 = vadd.f32 0.0, %v1096
        %v1098 = vpop.f32.mrb[0].mxu0
        %1099 = vmatprep.mubr.f32.mxu0 0.0
        %1100 = vmatmul.mubr.f32.gmra.mrb[0].mxu0 %v867
        %v1101 = vpop.f32.mrb[0].mxu0
        %v1102 = vadd.f32 0.0, %v1101
        %v1103 = vpop.f32.mrb[0].mxu0
        %1104 = vmatprep.mubr.f32.mxu0 0.0
        %1105 = vmatmul.mubr.f32.gmra.mrb[0].mxu0 %v868
        %v1106 = vpop.f32.mrb[0].mxu0
        %v1107 = vadd.f32 0.0, %v1106
        %v1108 = vpop.f32.mrb[0].mxu0
        %1109 = vmatprep.mubr.f32.mxu0 0.0
        %1110 = vmatmul.mubr.f32.gmra.mrb[0].mxu0 %v869
        %v1111 = vpop.f32.mrb[0].mxu0
        %v1112 = vadd.f32 0.0, %v1111
        %v1113 = vpop.f32.mrb[0].mxu0
        %1114 = vmatprep.mubr.f32.mxu0 0.0
        %1115 = vmatmul.mubr.f32.gmra.mrb[0].mxu0 %v870
        %v1116 = vpop.f32.mrb[0].mxu0
        %v1117 = vadd.f32 0.0, %v1116
        %v1118 = vpop.f32.mrb[0].mxu0
        %1119 = vmatprep.mubr.f32.mxu0 0.0
        %1120 = vmatmul.mubr.f32.gmra.mrb[0].mxu0 %v871
        %v1121 = vpop.f32.mrb[0].mxu0
        %v1122 = vadd.f32 0.0, %v1121
        %v1123 = vpop.f32.mrb[0].mxu0
        %1124 = vmatprep.mubr.f32.mxu0 0.0
        %1125 = vmatmul.mubr.f32.gmra.mrb[0].mxu0 %v872
        %v1126 = vpop.f32.mrb[0].mxu0
        %v1127 = vadd.f32 0.0, %v1126
        %v1128 = vpop.f32.mrb[0].mxu0
        %1129 = vmatprep.mubr.f32.mxu0 0.0
        %1130 = vmatmul.mubr.f32.gmra.mrb[0].mxu0 %v873
        %v1131 = vpop.f32.mrb[0].mxu0
        %v1132 = vadd.f32 0.0, %v1131
        %v1133 = vpop.f32.mrb[0].mxu0
        %1134 = vmatprep.mubr.f32.mxu0 0.0
        %1135 = vmatmul.mubr.f32.gmra.mrb[0].mxu0 %v874
        %v1136 = vpop.f32.mrb[0].mxu0
        %v1137 = vadd.f32 0.0, %v1136
        %v1138 = vpop.f32.mrb[0].mxu0
        %1139 = vmatprep.mubr.f32.mxu0 0.0
        %1140 = vmatmul.mubr.f32.gmra.mrb[0].mxu0 %v875
        %v1141 = vpop.f32.mrb[0].mxu0
        %v1142 = vadd.f32 0.0, %v1141
        %v1143 = vpop.f32.mrb[0].mxu0
        %1144 = vmatprep.mubr.f32.mxu0 0.0
        %1145 = vmatmul.mubr.f32.gmra.mrb[0].mxu0 %v876
        %v1146 = vpop.f32.mrb[0].mxu0
        %v1147 = vadd.f32 0.0, %v1146
        %v1148 = vpop.f32.mrb[0].mxu0
        %1149 = vmatprep.mubr.f32.mxu0 0.0
        %1150 = vmatmul.mubr.f32.gmra.mrb[0].mxu0 %v877
        %v1151 = vpop.f32.mrb[0].mxu0
        %v1152 = vadd.f32 0.0, %v1151
        %v1153 = vpop.f32.mrb[0].mxu0
        %1154 = vmatprep.mubr.f32.mxu0 0.0
        %1155 = vmatmul.mubr.f32.gmra.mrb[0].mxu0 %v878
        %v1156 = vpop.f32.mrb[0].mxu0
        %v1157 = vadd.f32 0.0, %v1156
        %v1158 = vpop.f32.mrb[0].mxu0
        %1159 = vmatprep.mubr.f32.mxu0 0.0
        %1160 = vmatmul.mubr.f32.gmra.mrb[0].mxu0 %v879
        %v1161 = vpop.f32.mrb[0].mxu0
        %v1162 = vadd.f32 0.0, %v1161
        %v1163 = vpop.f32.mrb[0].mxu0
        %1164 = vmatprep.mubr.f32.mxu0 0.0
        %1165 = vmatmul.mubr.f32.gmra.mrb[0].mxu0 %v880
        %v1166 = vpop.f32.mrb[0].mxu0
        %v1167 = vadd.f32 0.0, %v1166
        %v1168 = vpop.f32.mrb[0].mxu0
        %1169 = vmatprep.mubr.f32.mxu0 0.0
        %1170 = vmatmul.mubr.f32.gmra.mrb[0].mxu0 %v881
        %v1171 = vpop.f32.mrb[0].mxu0
        %v1172 = vadd.f32 0.0, %v1171
        %v1173 = vpop.f32.mrb[0].mxu0
        %1174 = vmatprep.mubr.f32.mxu0 0.0
        %1175 = vmatmul.mubr.f32.gmra.mrb[0].mxu0 %v882
        %v1176 = vpop.f32.mrb[0].mxu0
        %v1177 = vadd.f32 0.0, %v1176
        %v1178 = vpop.f32.mrb[0].mxu0
        %1179 = vmatprep.mubr.f32.mxu0 0.0
        %1180 = vmatmul.mubr.f32.gmra.mrb[0].mxu0 %v883
        %v1181 = vpop.f32.mrb[0].mxu0
        %v1182 = vadd.f32 0.0, %v1181
        %v1183 = vpop.f32.mrb[0].mxu0
        %1184 = vmatprep.mubr.f32.mxu0 0.0
        %1185 = vmatmul.mubr.f32.gmra.mrb[0].mxu0 %v884
        %v1186 = vpop.f32.mrb[0].mxu0
        %v1187 = vadd.f32 0.0, %v1186
        %v1188 = vpop.f32.mrb[0].mxu0
        %1189 = vmatprep.mubr.f32.mxu0 0.0
        %1190 = vmatmul.mubr.f32.gmra.mrb[0].mxu0 %v885
        %v1191 = vpop.f32.mrb[0].mxu0
        %v1192 = vadd.f32 0.0, %v1191
        %v1193 = vpop.f32.mrb[0].mxu0
        %1194 = vmatprep.mubr.f32.mxu0 0.0
        %1195 = vmatmul.mubr.f32.gmra.mrb[0].mxu0 %v886
        %v1196 = vpop.f32.mrb[0].mxu0
        %v1197 = vadd.f32 0.0, %v1196
        %v1198 = vpop.f32.mrb[0].mxu0
        %1199 = vmatprep.mubr.f32.mxu0 0.0
        %1200 = vmatmul.mubr.f32.gmra.mrb[0].mxu0 %v887
        %v1201 = vpop.f32.mrb[0].mxu0
        %v1202 = vadd.f32 0.0, %v1201
        %v1203 = vpop.f32.mrb[0].mxu0
        %1204 = vmatprep.mubr.f32.mxu0 0.0
        %1205 = vmatmul.mubr.f32.gmra.mrb[0].mxu0 %v888
        %v1206 = vpop.f32.mrb[0].mxu0
        %v1207 = vadd.f32 0.0, %v1206
        %v1208 = vpop.f32.mrb[0].mxu0
        %1209 = vmatprep.mubr.f32.mxu0 0.0
        %1210 = vmatmul.mubr.f32.gmra.mrb[0].mxu0 %v889
        %v1211 = vpop.f32.mrb[0].mxu0
        %v1212 = vadd.f32 0.0, %v1211
        %v1213 = vpop.f32.mrb[0].mxu0
        %1214 = vmatprep.mubr.f32.mxu0 0.0
        %1215 = vmatmul.mubr.f32.gmra.mrb[0].mxu0 %v890
        %v1216 = vpop.f32.mrb[0].mxu0
        %v1217 = vadd.f32 0.0, %v1216
        %v1218 = vpop.f32.mrb[0].mxu0
        %1219 = vmatprep.mubr.f32.mxu0 0.0
        %1220 = vmatmul.mubr.f32.gmra.mrb[0].mxu0 %v891
        %v1221 = vpop.f32.mrb[0].mxu0
        %v1222 = vadd.f32 0.0, %v1221
        %v1223 = vpop.f32.mrb[0].mxu0
        %1224 = vmatprep.mubr.f32.mxu0 0.0
        %1225 = vmatmul.mubr.f32.gmra.mrb[0].mxu0 %v892
        %v1226 = vpop.f32.mrb[0].mxu0
        %v1227 = vadd.f32 0.0, %v1226
        %v1228 = vpop.f32.mrb[0].mxu0
        %1229 = vmatprep.mubr.f32.mxu0 0.0
        %1230 = vmatmul.mubr.f32.gmra.mrb[0].mxu0 %v893
        %v1231 = vpop.f32.mrb[0].mxu0
        %v1232 = vadd.f32 0.0, %v1231
        %v1233 = vpop.f32.mrb[0].mxu0
        %1234 = vmatprep.mubr.f32.mxu0 0.0
        %1235 = vmatmul.mubr.f32.gmra.mrb[0].mxu0 %v894
        %v1236 = vpop.f32.mrb[0].mxu0
        %v1237 = vadd.f32 0.0, %v1236
        %v1238 = vpop.f32.mrb[0].mxu0
        %1239 = vmatprep.mubr.f32.mxu0 0.0
        %1240 = vmatmul.mubr.f32.gmra.mrb[0].mxu0 %v895
        %v1241 = vpop.f32.mrb[0].mxu0
        %v1242 = vadd.f32 0.0, %v1241
        %v1243 = vpop.f32.mrb[0].mxu0
        %1244 = vmatprep.mubr.f32.mxu0 0.0
        %1245 = vmatmul.mubr.f32.gmra.mrb[0].mxu0 %v896
        %v1246 = vpop.f32.mrb[0].mxu0
        %v1247 = vadd.f32 0.0, %v1246
        %v1248 = vpop.f32.mrb[0].mxu0
        %1249 = vmatprep.mubr.f32.mxu0 0.0
        %1250 = vmatmul.mubr.f32.gmra.mrb[0].mxu0 %v897
        %v1251 = vpop.f32.mrb[0].mxu0
        %v1252 = vadd.f32 0.0, %v1251
        %v1253 = vpop.f32.mrb[0].mxu0
        %1254 = vmatprep.mubr.f32.mxu0 0.0
        %1255 = vmatmul.mubr.f32.gmra.mrb[0].mxu0 %v898
        %v1256 = vpop.f32.mrb[0].mxu0
        %v1257 = vadd.f32 0.0, %v1256
        %v1258 = vpop.f32.mrb[0].mxu0
        %1259 = vmatprep.mubr.f32.mxu0 0.0
        %1260 = vmatmul.mubr.f32.gmra.mrb[0].mxu0 %v899
        %v1261 = vpop.f32.mrb[0].mxu0
        %v1262 = vadd.f32 0.0, %v1261
        %v1263 = vpop.f32.mrb[0].mxu0
        %1264 = vmatprep.mubr.f32.mxu0 0.0
        %1265 = vmatmul.mubr.f32.gmra.mrb[0].mxu0 %v900
        %v1266 = vpop.f32.mrb[0].mxu0
        %v1267 = vadd.f32 0.0, %v1266
        %v1268 = vpop.f32.mrb[0].mxu0
        %1269 = vmatprep.mubr.f32.mxu0 0.0
        %1270 = vmatmul.mubr.f32.gmra.mrb[0].mxu0 %v901
        %v1271 = vpop.f32.mrb[0].mxu0
        %v1272 = vadd.f32 0.0, %v1271
        %v1273 = vpop.f32.mrb[0].mxu0
        %1274 = vmatprep.mubr.f32.mxu0 0.0
        %1275 = vmatmul.mubr.f32.gmra.mrb[0].mxu0 %v902
        %v1276 = vpop.f32.mrb[0].mxu0
        %v1277 = vadd.f32 0.0, %v1276
        %v1278 = vpop.f32.mrb[0].mxu0
        %1279 = vmatprep.mubr.f32.mxu0 0.0
        %1280 = vmatmul.mubr.f32.gmra.mrb[0].mxu0 %v903
        %v1281 = vpop.f32.mrb[0].mxu0
        %v1282 = vadd.f32 0.0, %v1281
        %v1283 = vpop.f32.mrb[0].mxu0
        %1284 = vmatprep.mubr.f32.mxu0 0.0
        %1285 = vmatmul.mubr.f32.gmra.mrb[0].mxu0 %v904
        %v1286 = vpop.f32.mrb[0].mxu0
        %v1287 = vadd.f32 0.0, %v1286
        %v1288 = vpop.f32.mrb[0].mxu0
        %1289 = vdwg.mxu0
        %vm1290 = vcmask 523264
        %v1291 = vsel %vm1290, %v972, -inf
        %1292 = vmax.xlane.f32.xlu0 %v1291
        %v1293 = vpop.xlane.xlu0 %1292
        %v1294 = vsel %vm1290, %v977, -inf
        %1295 = vmax.xlane.f32.xlu0 %v1294
        %v1296 = vpop.xlane.xlu0 %1295
        %v1297 = vsel %vm1290, %v982, -inf
        %1298 = vmax.xlane.f32.xlu0 %v1297
        %v1299 = vpop.xlane.xlu0 %1298
        %v1300 = vsel %vm1290, %v987, -inf
        %1301 = vmax.xlane.f32.xlu0 %v1300
        %v1302 = vpop.xlane.xlu0 %1301
        %v1303 = vsel %vm1290, %v992, -inf
        %1304 = vmax.xlane.f32.xlu0 %v1303
        %v1305 = vpop.xlane.xlu0 %1304
        %v1306 = vsel %vm1290, %v997, -inf
        %1307 = vmax.xlane.f32.xlu0 %v1306
        %v1308 = vpop.xlane.xlu0 %1307
        %v1309 = vsel %vm1290, %v1002, -inf
        %1310 = vmax.xlane.f32.xlu0 %v1309
        %v1311 = vpop.xlane.xlu0 %1310
        %v1312 = vsel %vm1290, %v1007, -inf
        %1313 = vmax.xlane.f32.xlu0 %v1312
        %v1314 = vpop.xlane.xlu0 %1313
        %v1315 = vsel %vm1290, %v1012, -inf
        %1316 = vmax.xlane.f32.xlu0 %v1315
        %v1317 = vpop.xlane.xlu0 %1316
        %v1318 = vsel %vm1290, %v1017, -inf
        %1319 = vmax.xlane.f32.xlu0 %v1318
        %v1320 = vpop.xlane.xlu0 %1319
        %v1321 = vsel %vm1290, %v1022, -inf
        %1322 = vmax.xlane.f32.xlu0 %v1321
        %v1323 = vpop.xlane.xlu0 %1322
        %v1324 = vsel %vm1290, %v1027, -inf
        %1325 = vmax.xlane.f32.xlu0 %v1324
        %v1326 = vpop.xlane.xlu0 %1325
        %v1327 = vsel %vm1290, %v1032, -inf
        %1328 = vmax.xlane.f32.xlu0 %v1327
        %v1329 = vpop.xlane.xlu0 %1328
        %v1330 = vsel %vm1290, %v1037, -inf
        %1331 = vmax.xlane.f32.xlu0 %v1330
        %v1332 = vpop.xlane.xlu0 %1331
        %v1333 = vsel %vm1290, %v1042, -inf
        %1334 = vmax.xlane.f32.xlu0 %v1333
        %v1335 = vpop.xlane.xlu0 %1334
        %v1336 = vsel %vm1290, %v1047, -inf
        %1337 = vmax.xlane.f32.xlu0 %v1336
        %v1338 = vpop.xlane.xlu0 %1337
        %v1339 = vsel %vm1290, %v1052, -inf
        %1340 = vmax.xlane.f32.xlu0 %v1339
        %v1341 = vpop.xlane.xlu0 %1340
        %v1342 = vsel %vm1290, %v1057, -inf
        %1343 = vmax.xlane.f32.xlu0 %v1342
        %v1344 = vpop.xlane.xlu0 %1343
        %v1345 = vsel %vm1290, %v1062, -inf
        %1346 = vmax.xlane.f32.xlu0 %v1345
        %v1347 = vpop.xlane.xlu0 %1346
        %v1348 = vsel %vm1290, %v1067, -inf
        %1349 = vmax.xlane.f32.xlu0 %v1348
        %v1350 = vpop.xlane.xlu0 %1349
        %v1351 = vsel %vm1290, %v1072, -inf
        %1352 = vmax.xlane.f32.xlu0 %v1351
        %v1353 = vpop.xlane.xlu0 %1352
        %v1354 = vsel %vm1290, %v1077, -inf
        %1355 = vmax.xlane.f32.xlu0 %v1354
        %v1356 = vpop.xlane.xlu0 %1355
        %v1357 = vsel %vm1290, %v1082, -inf
        %1358 = vmax.xlane.f32.xlu0 %v1357
        %v1359 = vpop.xlane.xlu0 %1358
        %v1360 = vsel %vm1290, %v1087, -inf
        %1361 = vmax.xlane.f32.xlu0 %v1360
        %v1362 = vpop.xlane.xlu0 %1361
        %v1363 = vsel %vm1290, %v1092, -inf
        %1364 = vmax.xlane.f32.xlu0 %v1363
        %v1365 = vpop.xlane.xlu0 %1364
        %v1366 = vsel %vm1290, %v1097, -inf
        %1367 = vmax.xlane.f32.xlu0 %v1366
        %v1368 = vpop.xlane.xlu0 %1367
        %v1369 = vsel %vm1290, %v1102, -inf
        %1370 = vmax.xlane.f32.xlu0 %v1369
        %v1371 = vpop.xlane.xlu0 %1370
        %v1372 = vsel %vm1290, %v1107, -inf
        %1373 = vmax.xlane.f32.xlu0 %v1372
        %v1374 = vpop.xlane.xlu0 %1373
        %v1375 = vsel %vm1290, %v1112, -inf
        %1376 = vmax.xlane.f32.xlu0 %v1375
        %v1377 = vpop.xlane.xlu0 %1376
        %v1378 = vsel %vm1290, %v1117, -inf
        %1379 = vmax.xlane.f32.xlu0 %v1378
        %v1380 = vpop.xlane.xlu0 %1379
        %v1381 = vsel %vm1290, %v1122, -inf
        %1382 = vmax.xlane.f32.xlu0 %v1381
        %v1383 = vpop.xlane.xlu0 %1382
        %v1384 = vsel %vm1290, %v1127, -inf
        %1385 = vmax.xlane.f32.xlu0 %v1384
        %v1386 = vpop.xlane.xlu0 %1385
        %v1387 = vsel %vm1290, %v1132, -inf
        %1388 = vmax.xlane.f32.xlu0 %v1387
        %v1389 = vpop.xlane.xlu0 %1388
        %v1390 = vsel %vm1290, %v1137, -inf
        %1391 = vmax.xlane.f32.xlu0 %v1390
        %v1392 = vpop.xlane.xlu0 %1391
        %v1393 = vsel %vm1290, %v1142, -inf
        %1394 = vmax.xlane.f32.xlu0 %v1393
        %v1395 = vpop.xlane.xlu0 %1394
        %v1396 = vsel %vm1290, %v1147, -inf
        %1397 = vmax.xlane.f32.xlu0 %v1396
        %v1398 = vpop.xlane.xlu0 %1397
        %v1399 = vsel %vm1290, %v1152, -inf
        %1400 = vmax.xlane.f32.xlu0 %v1399
        %v1401 = vpop.xlane.xlu0 %1400
        %v1402 = vsel %vm1290, %v1157, -inf
        %1403 = vmax.xlane.f32.xlu0 %v1402
        %v1404 = vpop.xlane.xlu0 %1403
        %v1405 = vsel %vm1290, %v1162, -inf
        %1406 = vmax.xlane.f32.xlu0 %v1405
        %v1407 = vpop.xlane.xlu0 %1406
        %v1408 = vsel %vm1290, %v1167, -inf
        %1409 = vmax.xlane.f32.xlu0 %v1408
        %v1410 = vpop.xlane.xlu0 %1409
        %v1411 = vsel %vm1290, %v1172, -inf
        %1412 = vmax.xlane.f32.xlu0 %v1411
        %v1413 = vpop.xlane.xlu0 %1412
        %v1414 = vsel %vm1290, %v1177, -inf
        %1415 = vmax.xlane.f32.xlu0 %v1414
        %v1416 = vpop.xlane.xlu0 %1415
        %v1417 = vsel %vm1290, %v1182, -inf
        %1418 = vmax.xlane.f32.xlu0 %v1417
        %v1419 = vpop.xlane.xlu0 %1418
        %v1420 = vsel %vm1290, %v1187, -inf
        %1421 = vmax.xlane.f32.xlu0 %v1420
        %v1422 = vpop.xlane.xlu0 %1421
        %v1423 = vsel %vm1290, %v1192, -inf
        %1424 = vmax.xlane.f32.xlu0 %v1423
        %v1425 = vpop.xlane.xlu0 %1424
        %v1426 = vsel %vm1290, %v1197, -inf
        %1427 = vmax.xlane.f32.xlu0 %v1426
        %v1428 = vpop.xlane.xlu0 %1427
        %v1429 = vsel %vm1290, %v1202, -inf
        %1430 = vmax.xlane.f32.xlu0 %v1429
        %v1431 = vpop.xlane.xlu0 %1430
        %v1432 = vsel %vm1290, %v1207, -inf
        %1433 = vmax.xlane.f32.xlu0 %v1432
        %v1434 = vpop.xlane.xlu0 %1433
        %v1435 = vsel %vm1290, %v1212, -inf
        %1436 = vmax.xlane.f32.xlu0 %v1435
        %v1437 = vpop.xlane.xlu0 %1436
        %v1438 = vsel %vm1290, %v1217, -inf
        %1439 = vmax.xlane.f32.xlu0 %v1438
        %v1440 = vpop.xlane.xlu0 %1439
        %v1441 = vsel %vm1290, %v1222, -inf
        %1442 = vmax.xlane.f32.xlu0 %v1441
        %v1443 = vpop.xlane.xlu0 %1442
        %v1444 = vsel %vm1290, %v1227, -inf
        %1445 = vmax.xlane.f32.xlu0 %v1444
        %v1446 = vpop.xlane.xlu0 %1445
        %v1447 = vsel %vm1290, %v1232, -inf
        %1448 = vmax.xlane.f32.xlu0 %v1447
        %v1449 = vpop.xlane.xlu0 %1448
        %v1450 = vsel %vm1290, %v1237, -inf
        %1451 = vmax.xlane.f32.xlu0 %v1450
        %v1452 = vpop.xlane.xlu0 %1451
        %v1453 = vsel %vm1290, %v1242, -inf
        %1454 = vmax.xlane.f32.xlu0 %v1453
        %v1455 = vpop.xlane.xlu0 %1454
        %v1456 = vsel %vm1290, %v1247, -inf
        %1457 = vmax.xlane.f32.xlu0 %v1456
        %v1458 = vpop.xlane.xlu0 %1457
        %v1459 = vsel %vm1290, %v1252, -inf
        %1460 = vmax.xlane.f32.xlu0 %v1459
        %v1461 = vpop.xlane.xlu0 %1460
        %v1462 = vsel %vm1290, %v1257, -inf
        %1463 = vmax.xlane.f32.xlu0 %v1462
        %v1464 = vpop.xlane.xlu0 %1463
        %v1465 = vsel %vm1290, %v1262, -inf
        %1466 = vmax.xlane.f32.xlu0 %v1465
        %v1467 = vpop.xlane.xlu0 %1466
        %v1468 = vsel %vm1290, %v1267, -inf
        %1469 = vmax.xlane.f32.xlu0 %v1468
        %v1470 = vpop.xlane.xlu0 %1469
        %v1471 = vsel %vm1290, %v1272, -inf
        %1472 = vmax.xlane.f32.xlu0 %v1471
        %v1473 = vpop.xlane.xlu0 %1472
        %v1474 = vsel %vm1290, %v1277, -inf
        %1475 = vmax.xlane.f32.xlu0 %v1474
        %v1476 = vpop.xlane.xlu0 %1475
        %v1477 = vsel %vm1290, %v1282, -inf
        %1478 = vmax.xlane.f32.xlu0 %v1477
        %v1479 = vpop.xlane.xlu0 %1478
        %v1480 = vsel %vm1290, %v1287, -inf
        %1481 = vmax.xlane.f32.xlu0 %v1480
        %v1482 = vpop.xlane.xlu0 %1481
        %v1483 = vsub.f32 %v972, %v1293
        %v1484 = vsub.f32 %v977, %v1296
        %v1485 = vsub.f32 %v982, %v1299
        %v1486 = vsub.f32 %v987, %v1302
        %v1487 = vsub.f32 %v992, %v1305
        %v1488 = vsub.f32 %v997, %v1308
        %v1489 = vsub.f32 %v1002, %v1311
        %v1490 = vsub.f32 %v1007, %v1314
        %v1491 = vsub.f32 %v1012, %v1317
        %v1492 = vsub.f32 %v1017, %v1320
        %v1493 = vsub.f32 %v1022, %v1323
        %v1494 = vsub.f32 %v1027, %v1326
        %v1495 = vsub.f32 %v1032, %v1329
        %v1496 = vsub.f32 %v1037, %v1332
        %v1497 = vsub.f32 %v1042, %v1335
        %v1498 = vsub.f32 %v1047, %v1338
        %v1499 = vsub.f32 %v1052, %v1341
        %v1500 = vsub.f32 %v1057, %v1344
        %v1501 = vsub.f32 %v1062, %v1347
        %v1502 = vsub.f32 %v1067, %v1350
        %v1503 = vsub.f32 %v1072, %v1353
        %v1504 = vsub.f32 %v1077, %v1356
        %v1505 = vsub.f32 %v1082, %v1359
        %v1506 = vsub.f32 %v1087, %v1362
        %v1507 = vsub.f32 %v1092, %v1365
        %v1508 = vsub.f32 %v1097, %v1368
        %v1509 = vsub.f32 %v1102, %v1371
        %v1510 = vsub.f32 %v1107, %v1374
        %v1511 = vsub.f32 %v1112, %v1377
        %v1512 = vsub.f32 %v1117, %v1380
        %v1513 = vsub.f32 %v1122, %v1383
        %v1514 = vsub.f32 %v1127, %v1386
        %v1515 = vsub.f32 %v1132, %v1389
        %v1516 = vsub.f32 %v1137, %v1392
        %v1517 = vsub.f32 %v1142, %v1395
        %v1518 = vsub.f32 %v1147, %v1398
        %v1519 = vsub.f32 %v1152, %v1401
        %v1520 = vsub.f32 %v1157, %v1404
        %v1521 = vsub.f32 %v1162, %v1407
        %v1522 = vsub.f32 %v1167, %v1410
        %v1523 = vsub.f32 %v1172, %v1413
        %v1524 = vsub.f32 %v1177, %v1416
        %v1525 = vsub.f32 %v1182, %v1419
        %v1526 = vsub.f32 %v1187, %v1422
        %v1527 = vsub.f32 %v1192, %v1425
        %v1528 = vsub.f32 %v1197, %v1428
        %v1529 = vsub.f32 %v1202, %v1431
        %v1530 = vsub.f32 %v1207, %v1434
        %v1531 = vsub.f32 %v1212, %v1437
        %v1532 = vsub.f32 %v1217, %v1440
        %v1533 = vsub.f32 %v1222, %v1443
        %v1534 = vsub.f32 %v1227, %v1446
        %v1535 = vsub.f32 %v1232, %v1449
        %v1536 = vsub.f32 %v1237, %v1452
        %v1537 = vsub.f32 %v1242, %v1455
        %v1538 = vsub.f32 %v1247, %v1458
        %v1539 = vsub.f32 %v1252, %v1461
        %v1540 = vsub.f32 %v1257, %v1464
        %v1541 = vsub.f32 %v1262, %v1467
        %v1542 = vsub.f32 %v1267, %v1470
        %v1543 = vsub.f32 %v1272, %v1473
        %v1544 = vsub.f32 %v1277, %v1476
        %v1545 = vsub.f32 %v1282, %v1479
        %v1546 = vsub.f32 %v1287, %v1482
        %v1547 = vmul.f32 %v1483, 1.442695
        %v1548 = vpow.pop %v1547
        %v1549 = vmul.f32 %v1484, 1.442695
        %v1550 = vpow.pop %v1549
        %v1551 = vmul.f32 %v1485, 1.442695
        %v1552 = vpow.pop %v1551
        %v1553 = vmul.f32 %v1486, 1.442695
        %v1554 = vpow.pop %v1553
        %v1555 = vmul.f32 %v1487, 1.442695
        %v1556 = vpow.pop %v1555
        %v1557 = vmul.f32 %v1488, 1.442695
        %v1558 = vpow.pop %v1557
        %v1559 = vmul.f32 %v1489, 1.442695
        %v1560 = vpow.pop %v1559
        %v1561 = vmul.f32 %v1490, 1.442695
        %v1562 = vpow.pop %v1561
        %v1563 = vmul.f32 %v1491, 1.442695
        %v1564 = vpow.pop %v1563
        %v1565 = vmul.f32 %v1492, 1.442695
        %v1566 = vpow.pop %v1565
        %v1567 = vmul.f32 %v1493, 1.442695
        %v1568 = vpow.pop %v1567
        %v1569 = vmul.f32 %v1494, 1.442695
        %v1570 = vpow.pop %v1569
        %v1571 = vmul.f32 %v1495, 1.442695
        %v1572 = vpow.pop %v1571
        %v1573 = vmul.f32 %v1496, 1.442695
        %v1574 = vpow.pop %v1573
        %v1575 = vmul.f32 %v1497, 1.442695
        %v1576 = vpow.pop %v1575
        %v1577 = vmul.f32 %v1498, 1.442695
        %v1578 = vpow.pop %v1577
        %v1579 = vmul.f32 %v1499, 1.442695
        %v1580 = vpow.pop %v1579
        %v1581 = vmul.f32 %v1500, 1.442695
        %v1582 = vpow.pop %v1581
        %v1583 = vmul.f32 %v1501, 1.442695
        %v1584 = vpow.pop %v1583
        %v1585 = vmul.f32 %v1502, 1.442695
        %v1586 = vpow.pop %v1585
        %v1587 = vmul.f32 %v1503, 1.442695
        %v1588 = vpow.pop %v1587
        %v1589 = vmul.f32 %v1504, 1.442695
        %v1590 = vpow.pop %v1589
        %v1591 = vmul.f32 %v1505, 1.442695
        %v1592 = vpow.pop %v1591
        %v1593 = vmul.f32 %v1506, 1.442695
        %v1594 = vpow.pop %v1593
        %v1595 = vmul.f32 %v1507, 1.442695
        %v1596 = vpow.pop %v1595
        %v1597 = vmul.f32 %v1508, 1.442695
        %v1598 = vpow.pop %v1597
        %v1599 = vmul.f32 %v1509, 1.442695
        %v1600 = vpow.pop %v1599
        %v1601 = vmul.f32 %v1510, 1.442695
        %v1602 = vpow.pop %v1601
        %v1603 = vmul.f32 %v1511, 1.442695
        %v1604 = vpow.pop %v1603
        %v1605 = vmul.f32 %v1512, 1.442695
        %v1606 = vpow.pop %v1605
        %v1607 = vmul.f32 %v1513, 1.442695
        %v1608 = vpow.pop %v1607
        %v1609 = vmul.f32 %v1514, 1.442695
        %v1610 = vpow.pop %v1609
        %v1611 = vmul.f32 %v1515, 1.442695
        %v1612 = vpow.pop %v1611
        %v1613 = vmul.f32 %v1516, 1.442695
        %v1614 = vpow.pop %v1613
        %v1615 = vmul.f32 %v1517, 1.442695
        %v1616 = vpow.pop %v1615
        %v1617 = vmul.f32 %v1518, 1.442695
        %v1618 = vpow.pop %v1617
        %v1619 = vmul.f32 %v1519, 1.442695
        %v1620 = vpow.pop %v1619
        %v1621 = vmul.f32 %v1520, 1.442695
        %v1622 = vpow.pop %v1621
        %v1623 = vmul.f32 %v1521, 1.442695
        %v1624 = vpow.pop %v1623
        %v1625 = vmul.f32 %v1522, 1.442695
        %v1626 = vpow.pop %v1625
        %v1627 = vmul.f32 %v1523, 1.442695
        %v1628 = vpow.pop %v1627
        %v1629 = vmul.f32 %v1524, 1.442695
        %v1630 = vpow.pop %v1629
        %v1631 = vmul.f32 %v1525, 1.442695
        %v1632 = vpow.pop %v1631
        %v1633 = vmul.f32 %v1526, 1.442695
        %v1634 = vpow.pop %v1633
        %v1635 = vmul.f32 %v1527, 1.442695
        %v1636 = vpow.pop %v1635
        %v1637 = vmul.f32 %v1528, 1.442695
        %v1638 = vpow.pop %v1637
        %v1639 = vmul.f32 %v1529, 1.442695
        %v1640 = vpow.pop %v1639
        %v1641 = vmul.f32 %v1530, 1.442695
        %v1642 = vpow.pop %v1641
        %v1643 = vmul.f32 %v1531, 1.442695
        %v1644 = vpow.pop %v1643
        %v1645 = vmul.f32 %v1532, 1.442695
        %v1646 = vpow.pop %v1645
        %v1647 = vmul.f32 %v1533, 1.442695
        %v1648 = vpow.pop %v1647
        %v1649 = vmul.f32 %v1534, 1.442695
        %v1650 = vpow.pop %v1649
        %v1651 = vmul.f32 %v1535, 1.442695
        %v1652 = vpow.pop %v1651
        %v1653 = vmul.f32 %v1536, 1.442695
        %v1654 = vpow.pop %v1653
        %v1655 = vmul.f32 %v1537, 1.442695
        %v1656 = vpow.pop %v1655
        %v1657 = vmul.f32 %v1538, 1.442695
        %v1658 = vpow.pop %v1657
        %v1659 = vmul.f32 %v1539, 1.442695
        %v1660 = vpow.pop %v1659
        %v1661 = vmul.f32 %v1540, 1.442695
        %v1662 = vpow.pop %v1661
        %v1663 = vmul.f32 %v1541, 1.442695
        %v1664 = vpow.pop %v1663
        %v1665 = vmul.f32 %v1542, 1.442695
        %v1666 = vpow.pop %v1665
        %v1667 = vmul.f32 %v1543, 1.442695
        %v1668 = vpow.pop %v1667
        %v1669 = vmul.f32 %v1544, 1.442695
        %v1670 = vpow.pop %v1669
        %v1671 = vmul.f32 %v1545, 1.442695
        %v1672 = vpow.pop %v1671
        %v1673 = vmul.f32 %v1546, 1.442695
        %v1674 = vpow.pop %v1673
        %v1675 = vsel %vm1290, %v1548, 0.0
        %1676 = vadd.xlane.f32.xlu0 %v1675
        %v1677 = vpop.xlane.xlu0 %1676
        %v1678 = vsel %vm1290, %v1550, 0.0
        %1679 = vadd.xlane.f32.xlu0 %v1678
        %v1680 = vpop.xlane.xlu0 %1679
        %v1681 = vsel %vm1290, %v1552, 0.0
        %1682 = vadd.xlane.f32.xlu0 %v1681
        %v1683 = vpop.xlane.xlu0 %1682
        %v1684 = vsel %vm1290, %v1554, 0.0
        %1685 = vadd.xlane.f32.xlu0 %v1684
        %v1686 = vpop.xlane.xlu0 %1685
        %v1687 = vsel %vm1290, %v1556, 0.0
        %1688 = vadd.xlane.f32.xlu0 %v1687
        %v1689 = vpop.xlane.xlu0 %1688
        %v1690 = vsel %vm1290, %v1558, 0.0
        %1691 = vadd.xlane.f32.xlu0 %v1690
        %v1692 = vpop.xlane.xlu0 %1691
        %v1693 = vsel %vm1290, %v1560, 0.0
        %1694 = vadd.xlane.f32.xlu0 %v1693
        %v1695 = vpop.xlane.xlu0 %1694
        %v1696 = vsel %vm1290, %v1562, 0.0
        %1697 = vadd.xlane.f32.xlu0 %v1696
        %v1698 = vpop.xlane.xlu0 %1697
        %v1699 = vsel %vm1290, %v1564, 0.0
        %1700 = vadd.xlane.f32.xlu0 %v1699
        %v1701 = vpop.xlane.xlu0 %1700
        %v1702 = vsel %vm1290, %v1566, 0.0
        %1703 = vadd.xlane.f32.xlu0 %v1702
        %v1704 = vpop.xlane.xlu0 %1703
        %v1705 = vsel %vm1290, %v1568, 0.0
        %1706 = vadd.xlane.f32.xlu0 %v1705
        %v1707 = vpop.xlane.xlu0 %1706
        %v1708 = vsel %vm1290, %v1570, 0.0
        %1709 = vadd.xlane.f32.xlu0 %v1708
        %v1710 = vpop.xlane.xlu0 %1709
        %v1711 = vsel %vm1290, %v1572, 0.0
        %1712 = vadd.xlane.f32.xlu0 %v1711
        %v1713 = vpop.xlane.xlu0 %1712
        %v1714 = vsel %vm1290, %v1574, 0.0
        %1715 = vadd.xlane.f32.xlu0 %v1714
        %v1716 = vpop.xlane.xlu0 %1715
        %v1717 = vsel %vm1290, %v1576, 0.0
        %1718 = vadd.xlane.f32.xlu0 %v1717
        %v1719 = vpop.xlane.xlu0 %1718
        %v1720 = vsel %vm1290, %v1578, 0.0
        %1721 = vadd.xlane.f32.xlu0 %v1720
        %v1722 = vpop.xlane.xlu0 %1721
        %v1723 = vsel %vm1290, %v1580, 0.0
        %1724 = vadd.xlane.f32.xlu0 %v1723
        %v1725 = vpop.xlane.xlu0 %1724
        %v1726 = vsel %vm1290, %v1582, 0.0
        %1727 = vadd.xlane.f32.xlu0 %v1726
        %v1728 = vpop.xlane.xlu0 %1727
        %v1729 = vsel %vm1290, %v1584, 0.0
        %1730 = vadd.xlane.f32.xlu0 %v1729
        %v1731 = vpop.xlane.xlu0 %1730
        %v1732 = vsel %vm1290, %v1586, 0.0
        %1733 = vadd.xlane.f32.xlu0 %v1732
        %v1734 = vpop.xlane.xlu0 %1733
        %v1735 = vsel %vm1290, %v1588, 0.0
        %1736 = vadd.xlane.f32.xlu0 %v1735
        %v1737 = vpop.xlane.xlu0 %1736
        %v1738 = vsel %vm1290, %v1590, 0.0
        %1739 = vadd.xlane.f32.xlu0 %v1738
        %v1740 = vpop.xlane.xlu0 %1739
        %v1741 = vsel %vm1290, %v1592, 0.0
        %1742 = vadd.xlane.f32.xlu0 %v1741
        %v1743 = vpop.xlane.xlu0 %1742
        %v1744 = vsel %vm1290, %v1594, 0.0
        %1745 = vadd.xlane.f32.xlu0 %v1744
        %v1746 = vpop.xlane.xlu0 %1745
        %v1747 = vsel %vm1290, %v1596, 0.0
        %1748 = vadd.xlane.f32.xlu0 %v1747
        %v1749 = vpop.xlane.xlu0 %1748
        %v1750 = vsel %vm1290, %v1598, 0.0
        %1751 = vadd.xlane.f32.xlu0 %v1750
        %v1752 = vpop.xlane.xlu0 %1751
        %v1753 = vsel %vm1290, %v1600, 0.0
        %1754 = vadd.xlane.f32.xlu0 %v1753
        %v1755 = vpop.xlane.xlu0 %1754
        %v1756 = vsel %vm1290, %v1602, 0.0
        %1757 = vadd.xlane.f32.xlu0 %v1756
        %v1758 = vpop.xlane.xlu0 %1757
        %v1759 = vsel %vm1290, %v1604, 0.0
        %1760 = vadd.xlane.f32.xlu0 %v1759
        %v1761 = vpop.xlane.xlu0 %1760
        %v1762 = vsel %vm1290, %v1606, 0.0
        %1763 = vadd.xlane.f32.xlu0 %v1762
        %v1764 = vpop.xlane.xlu0 %1763
        %v1765 = vsel %vm1290, %v1608, 0.0
        %1766 = vadd.xlane.f32.xlu0 %v1765
        %v1767 = vpop.xlane.xlu0 %1766
        %v1768 = vsel %vm1290, %v1610, 0.0
        %1769 = vadd.xlane.f32.xlu0 %v1768
        %v1770 = vpop.xlane.xlu0 %1769
        %v1771 = vsel %vm1290, %v1612, 0.0
        %1772 = vadd.xlane.f32.xlu0 %v1771
        %v1773 = vpop.xlane.xlu0 %1772
        %v1774 = vsel %vm1290, %v1614, 0.0
        %1775 = vadd.xlane.f32.xlu0 %v1774
        %v1776 = vpop.xlane.xlu0 %1775
        %v1777 = vsel %vm1290, %v1616, 0.0
        %1778 = vadd.xlane.f32.xlu0 %v1777
        %v1779 = vpop.xlane.xlu0 %1778
        %v1780 = vsel %vm1290, %v1618, 0.0
        %1781 = vadd.xlane.f32.xlu0 %v1780
        %v1782 = vpop.xlane.xlu0 %1781
        %v1783 = vsel %vm1290, %v1620, 0.0
        %1784 = vadd.xlane.f32.xlu0 %v1783
        %v1785 = vpop.xlane.xlu0 %1784
        %v1786 = vsel %vm1290, %v1622, 0.0
        %1787 = vadd.xlane.f32.xlu0 %v1786
        %v1788 = vpop.xlane.xlu0 %1787
        %v1789 = vsel %vm1290, %v1624, 0.0
        %1790 = vadd.xlane.f32.xlu0 %v1789
        %v1791 = vpop.xlane.xlu0 %1790
        %v1792 = vsel %vm1290, %v1626, 0.0
        %1793 = vadd.xlane.f32.xlu0 %v1792
        %v1794 = vpop.xlane.xlu0 %1793
        %v1795 = vsel %vm1290, %v1628, 0.0
        %1796 = vadd.xlane.f32.xlu0 %v1795
        %v1797 = vpop.xlane.xlu0 %1796
        %v1798 = vsel %vm1290, %v1630, 0.0
        %1799 = vadd.xlane.f32.xlu0 %v1798
        %v1800 = vpop.xlane.xlu0 %1799
        %v1801 = vsel %vm1290, %v1632, 0.0
        %1802 = vadd.xlane.f32.xlu0 %v1801
        %v1803 = vpop.xlane.xlu0 %1802
        %v1804 = vsel %vm1290, %v1634, 0.0
        %1805 = vadd.xlane.f32.xlu0 %v1804
        %v1806 = vpop.xlane.xlu0 %1805
        %v1807 = vsel %vm1290, %v1636, 0.0
        %1808 = vadd.xlane.f32.xlu0 %v1807
        %v1809 = vpop.xlane.xlu0 %1808
        %v1810 = vsel %vm1290, %v1638, 0.0
        %1811 = vadd.xlane.f32.xlu0 %v1810
        %v1812 = vpop.xlane.xlu0 %1811
        %v1813 = vsel %vm1290, %v1640, 0.0
        %1814 = vadd.xlane.f32.xlu0 %v1813
        %v1815 = vpop.xlane.xlu0 %1814
        %v1816 = vsel %vm1290, %v1642, 0.0
        %1817 = vadd.xlane.f32.xlu0 %v1816
        %v1818 = vpop.xlane.xlu0 %1817
        %v1819 = vsel %vm1290, %v1644, 0.0
        %1820 = vadd.xlane.f32.xlu0 %v1819
        %v1821 = vpop.xlane.xlu0 %1820
        %v1822 = vsel %vm1290, %v1646, 0.0
        %1823 = vadd.xlane.f32.xlu0 %v1822
        %v1824 = vpop.xlane.xlu0 %1823
        %v1825 = vsel %vm1290, %v1648, 0.0
        %1826 = vadd.xlane.f32.xlu0 %v1825
        %v1827 = vpop.xlane.xlu0 %1826
        %v1828 = vsel %vm1290, %v1650, 0.0
        %1829 = vadd.xlane.f32.xlu0 %v1828
        %v1830 = vpop.xlane.xlu0 %1829
        %v1831 = vsel %vm1290, %v1652, 0.0
        %1832 = vadd.xlane.f32.xlu0 %v1831
        %v1833 = vpop.xlane.xlu0 %1832
        %v1834 = vsel %vm1290, %v1654, 0.0
        %1835 = vadd.xlane.f32.xlu0 %v1834
        %v1836 = vpop.xlane.xlu0 %1835
        %v1837 = vsel %vm1290, %v1656, 0.0
        %1838 = vadd.xlane.f32.xlu0 %v1837
        %v1839 = vpop.xlane.xlu0 %1838
        %v1840 = vsel %vm1290, %v1658, 0.0
        %1841 = vadd.xlane.f32.xlu0 %v1840
        %v1842 = vpop.xlane.xlu0 %1841
        %v1843 = vsel %vm1290, %v1660, 0.0
        %1844 = vadd.xlane.f32.xlu0 %v1843
        %v1845 = vpop.xlane.xlu0 %1844
        %v1846 = vsel %vm1290, %v1662, 0.0
        %1847 = vadd.xlane.f32.xlu0 %v1846
        %v1848 = vpop.xlane.xlu0 %1847
        %v1849 = vsel %vm1290, %v1664, 0.0
        %1850 = vadd.xlane.f32.xlu0 %v1849
        %v1851 = vpop.xlane.xlu0 %1850
        %v1852 = vsel %vm1290, %v1666, 0.0
        %1853 = vadd.xlane.f32.xlu0 %v1852
        %v1854 = vpop.xlane.xlu0 %1853
        %v1855 = vsel %vm1290, %v1668, 0.0
        %1856 = vadd.xlane.f32.xlu0 %v1855
        %v1857 = vpop.xlane.xlu0 %1856
        %v1858 = vsel %vm1290, %v1670, 0.0
        %1859 = vadd.xlane.f32.xlu0 %v1858
        %v1860 = vpop.xlane.xlu0 %1859
        %v1861 = vsel %vm1290, %v1672, 0.0
        %1862 = vadd.xlane.f32.xlu0 %v1861
        %v1863 = vpop.xlane.xlu0 %1862
        %v1864 = vsel %vm1290, %v1674, 0.0
        %1865 = vadd.xlane.f32.xlu0 %v1864
        %v1866 = vpop.xlane.xlu0 %1865
        %v1867 = vrcp.pop %v1677
        %v1868 = vrcp.pop %v1680
        %v1869 = vrcp.pop %v1683
        %v1870 = vrcp.pop %v1686
        %v1871 = vrcp.pop %v1689
        %v1872 = vrcp.pop %v1692
        %v1873 = vrcp.pop %v1695
        %v1874 = vrcp.pop %v1698
        %v1875 = vrcp.pop %v1701
        %v1876 = vrcp.pop %v1704
        %v1877 = vrcp.pop %v1707
        %v1878 = vrcp.pop %v1710
        %v1879 = vrcp.pop %v1713
        %v1880 = vrcp.pop %v1716
        %v1881 = vrcp.pop %v1719
        %v1882 = vrcp.pop %v1722
        %v1883 = vrcp.pop %v1725
        %v1884 = vrcp.pop %v1728
        %v1885 = vrcp.pop %v1731
        %v1886 = vrcp.pop %v1734
        %v1887 = vrcp.pop %v1737
        %v1888 = vrcp.pop %v1740
        %v1889 = vrcp.pop %v1743
        %v1890 = vrcp.pop %v1746
        %v1891 = vrcp.pop %v1749
        %v1892 = vrcp.pop %v1752
        %v1893 = vrcp.pop %v1755
        %v1894 = vrcp.pop %v1758
        %v1895 = vrcp.pop %v1761
        %v1896 = vrcp.pop %v1764
        %v1897 = vrcp.pop %v1767
        %v1898 = vrcp.pop %v1770
        %v1899 = vrcp.pop %v1773
        %v1900 = vrcp.pop %v1776
        %v1901 = vrcp.pop %v1779
        %v1902 = vrcp.pop %v1782
        %v1903 = vrcp.pop %v1785
        %v1904 = vrcp.pop %v1788
        %v1905 = vrcp.pop %v1791
        %v1906 = vrcp.pop %v1794
        %v1907 = vrcp.pop %v1797
        %v1908 = vrcp.pop %v1800
        %v1909 = vrcp.pop %v1803
        %v1910 = vrcp.pop %v1806
        %v1911 = vrcp.pop %v1809
        %v1912 = vrcp.pop %v1812
        %v1913 = vrcp.pop %v1815
        %v1914 = vrcp.pop %v1818
        %v1915 = vrcp.pop %v1821
        %v1916 = vrcp.pop %v1824
        %v1917 = vrcp.pop %v1827
        %v1918 = vrcp.pop %v1830
        %v1919 = vrcp.pop %v1833
        %v1920 = vrcp.pop %v1836
        %v1921 = vrcp.pop %v1839
        %v1922 = vrcp.pop %v1842
        %v1923 = vrcp.pop %v1845
        %v1924 = vrcp.pop %v1848
        %v1925 = vrcp.pop %v1851
        %v1926 = vrcp.pop %v1854
        %v1927 = vrcp.pop %v1857
        %v1928 = vrcp.pop %v1860
        %v1929 = vrcp.pop %v1863
        %v1930 = vrcp.pop %v1866
        %v1931 = vmul.f32 %v1548, %v1867
        %v1932 = vmul.f32 %v1550, %v1868
        %v1933 = vmul.f32 %v1552, %v1869
        %v1934 = vmul.f32 %v1554, %v1870
        %v1935 = vmul.f32 %v1556, %v1871
        %v1936 = vmul.f32 %v1558, %v1872
        %v1937 = vmul.f32 %v1560, %v1873
        %v1938 = vmul.f32 %v1562, %v1874
        %v1939 = vmul.f32 %v1564, %v1875
        %v1940 = vmul.f32 %v1566, %v1876
        %v1941 = vmul.f32 %v1568, %v1877
        %v1942 = vmul.f32 %v1570, %v1878
        %v1943 = vmul.f32 %v1572, %v1879
        %v1944 = vmul.f32 %v1574, %v1880
        %v1945 = vmul.f32 %v1576, %v1881
        %v1946 = vmul.f32 %v1578, %v1882
        %v1947 = vmul.f32 %v1580, %v1883
        %v1948 = vmul.f32 %v1582, %v1884
        %v1949 = vmul.f32 %v1584, %v1885
        %v1950 = vmul.f32 %v1586, %v1886
        %v1951 = vmul.f32 %v1588, %v1887
        %v1952 = vmul.f32 %v1590, %v1888
        %v1953 = vmul.f32 %v1592, %v1889
        %v1954 = vmul.f32 %v1594, %v1890
        %v1955 = vmul.f32 %v1596, %v1891
        %v1956 = vmul.f32 %v1598, %v1892
        %v1957 = vmul.f32 %v1600, %v1893
        %v1958 = vmul.f32 %v1602, %v1894
        %v1959 = vmul.f32 %v1604, %v1895
        %v1960 = vmul.f32 %v1606, %v1896
        %v1961 = vmul.f32 %v1608, %v1897
        %v1962 = vmul.f32 %v1610, %v1898
        %v1963 = vmul.f32 %v1612, %v1899
        %v1964 = vmul.f32 %v1614, %v1900
        %v1965 = vmul.f32 %v1616, %v1901
        %v1966 = vmul.f32 %v1618, %v1902
        %v1967 = vmul.f32 %v1620, %v1903
        %v1968 = vmul.f32 %v1622, %v1904
        %v1969 = vmul.f32 %v1624, %v1905
        %v1970 = vmul.f32 %v1626, %v1906
        %v1971 = vmul.f32 %v1628, %v1907
        %v1972 = vmul.f32 %v1630, %v1908
        %v1973 = vmul.f32 %v1632, %v1909
        %v1974 = vmul.f32 %v1634, %v1910
        %v1975 = vmul.f32 %v1636, %v1911
        %v1976 = vmul.f32 %v1638, %v1912
        %v1977 = vmul.f32 %v1640, %v1913
        %v1978 = vmul.f32 %v1642, %v1914
        %v1979 = vmul.f32 %v1644, %v1915
        %v1980 = vmul.f32 %v1646, %v1916
        %v1981 = vmul.f32 %v1648, %v1917
        %v1982 = vmul.f32 %v1650, %v1918
        %v1983 = vmul.f32 %v1652, %v1919
        %v1984 = vmul.f32 %v1654, %v1920
        %v1985 = vmul.f32 %v1656, %v1921
        %v1986 = vmul.f32 %v1658, %v1922
        %v1987 = vmul.f32 %v1660, %v1923
        %v1988 = vmul.f32 %v1662, %v1924
        %v1989 = vmul.f32 %v1664, %v1925
        %v1990 = vmul.f32 %v1666, %v1926
        %v1991 = vmul.f32 %v1668, %v1927
        %v1992 = vmul.f32 %v1670, %v1928
        %v1993 = vmul.f32 %v1672, %v1929
        %v1994 = vmul.f32 %v1674, %v1930
        %v1996 = vsel %vm1290, %v1931, 0
        %v1999 = vsel %vm1290, %v1932, 0
        %v2002 = vsel %vm1290, %v1933, 0
        %v2005 = vsel %vm1290, %v1934, 0
        %v2008 = vsel %vm1290, %v1935, 0
        %v2011 = vsel %vm1290, %v1936, 0
        %v2014 = vsel %vm1290, %v1937, 0
        %v2017 = vsel %vm1290, %v1938, 0
        %v2020 = vsel %vm1290, %v1939, 0
        %v2023 = vsel %vm1290, %v1940, 0
        %v2026 = vsel %vm1290, %v1941, 0
        %v2029 = vsel %vm1290, %v1942, 0
        %v2032 = vsel %vm1290, %v1943, 0
        %v2035 = vsel %vm1290, %v1944, 0
        %v2038 = vsel %vm1290, %v1945, 0
        %v2041 = vsel %vm1290, %v1946, 0
        %v2044 = vsel %vm1290, %v1947, 0
        %v2047 = vsel %vm1290, %v1948, 0
        %v2050 = vsel %vm1290, %v1949, 0
        %v2053 = vsel %vm1290, %v1950, 0
        %v2056 = vsel %vm1290, %v1951, 0
        %v2059 = vsel %vm1290, %v1952, 0
        %v2062 = vsel %vm1290, %v1953, 0
        %v2065 = vsel %vm1290, %v1954, 0
        %v2068 = vsel %vm1290, %v1955, 0
        %v2071 = vsel %vm1290, %v1956, 0
        %v2074 = vsel %vm1290, %v1957, 0
        %v2077 = vsel %vm1290, %v1958, 0
        %v2080 = vsel %vm1290, %v1959, 0
        %v2083 = vsel %vm1290, %v1960, 0
        %v2086 = vsel %vm1290, %v1961, 0
        %v2089 = vsel %vm1290, %v1962, 0
        %v2092 = vsel %vm1290, %v1963, 0
        %v2095 = vsel %vm1290, %v1964, 0
        %v2098 = vsel %vm1290, %v1965, 0
        %v2101 = vsel %vm1290, %v1966, 0
        %v2104 = vsel %vm1290, %v1967, 0
        %v2107 = vsel %vm1290, %v1968, 0
        %v2110 = vsel %vm1290, %v1969, 0
        %v2113 = vsel %vm1290, %v1970, 0
        %v2116 = vsel %vm1290, %v1971, 0
        %v2119 = vsel %vm1290, %v1972, 0
        %v2122 = vsel %vm1290, %v1973, 0
        %v2125 = vsel %vm1290, %v1974, 0
        %v2128 = vsel %vm1290, %v1975, 0
        %v2131 = vsel %vm1290, %v1976, 0
        %v2134 = vsel %vm1290, %v1977, 0
        %v2137 = vsel %vm1290, %v1978, 0
        %v2140 = vsel %vm1290, %v1979, 0
        %v2143 = vsel %vm1290, %v1980, 0
        %v2146 = vsel %vm1290, %v1981, 0
        %v2149 = vsel %vm1290, %v1982, 0
        %v2152 = vsel %vm1290, %v1983, 0
        %v2155 = vsel %vm1290, %v1984, 0
        %v2158 = vsel %vm1290, %v1985, 0
        %v2161 = vsel %vm1290, %v1986, 0
        %v2164 = vsel %vm1290, %v1987, 0
        %v2167 = vsel %vm1290, %v1988, 0
        %v2170 = vsel %vm1290, %v1989, 0
        %v2173 = vsel %vm1290, %v1990, 0
        %v2176 = vsel %vm1290, %v1991, 0
        %v2179 = vsel %vm1290, %v1992, 0
        %v2182 = vsel %vm1290, %v1993, 0
        %v2185 = vsel %vm1290, %v1994, 0
        %2187 = vmatprep.subr.mxu0 0.0
        %2188 = vmatpush1.msra.mxu0 %v691
        %2189 = vmatprep.subr.mxu0 0.0
        %2190 = vmatpush1.msra.mxu0 %v696
        %2191 = vmatprep.subr.mxu0 0.0
        %2192 = vmatpush1.msra.mxu0 %v701
        %2193 = vmatprep.subr.mxu0 0.0
        %2194 = vmatpush1.msra.mxu0 %v706
        %2195 = vmatprep.subr.mxu0 0.0
        %2196 = vmatpush1.msra.mxu0 %v711
        %2197 = vmatprep.subr.mxu0 0.0
        %2198 = vmatpush1.msra.mxu0 %v716
        %2199 = vmatprep.subr.mxu0 0.0
        %2200 = vmatpush1.msra.mxu0 %v721
        %2201 = vmatprep.subr.mxu0 0.0
        %2202 = vmatpush1.msra.mxu0 %v726
        %2203 = vmatprep.subr.mxu0 0.0
        %2204 = vmatpush1.msra.mxu0 0.0
        %2205 = vmatprep.subr.mxu0 0.0
        %2206 = vmatpush1.msra.mxu0 0.0
        %2207 = vmatprep.subr.mxu0 0.0
        %2208 = vmatpush1.msra.mxu0 0.0
        %2209 = vmatprep.subr.mxu0 0.0
        %2210 = vmatpush1.msra.mxu0 0.0
        %2211 = vmatprep.subr.mxu0 0.0
        %2212 = vmatpush1.msra.mxu0 0.0
        %2213 = vmatprep.subr.mxu0 0.0
        %2214 = vmatpush1.msra.mxu0 0.0
        %2215 = vmatprep.subr.mxu0 0.0
        %2216 = vmatpush1.msra.mxu0 0.0
        %2217 = vmatprep.subr.mxu0 0.0
        %2218 = vmatpush1.msra.mxu0 0.0
        %2219 = vmatprep.subr.mxu0 0.0
        %2220 = vmatpush1.msra.mxu0 0.0
        %2221 = vmatprep.subr.mxu0 0.0
        %2222 = vmatpush1.msra.mxu0 0.0
        %2223 = vmatprep.subr.mxu0 0.0
        %2224 = vmatpush1.msra.mxu0 0.0
        %2225 = vmatprep.subr.mxu0 0.0
        %2226 = vmatpush1.msra.mxu0 0.0
        %2227 = vmatprep.subr.mxu0 0.0
        %2228 = vmatpush1.msra.mxu0 0.0
        %2229 = vmatprep.subr.mxu0 0.0
        %2230 = vmatpush1.msra.mxu0 0.0
        %2231 = vmatprep.subr.mxu0 0.0
        %2232 = vmatpush1.msra.mxu0 0.0
        %2233 = vmatprep.subr.mxu0 0.0
        %2234 = vmatpush1.msra.mxu0 0.0
        %2235 = vmatprep.subr.mxu0 0.0
        %2236 = vmatpush1.msra.mxu0 0.0
        %2237 = vmatprep.subr.mxu0 0.0
        %2238 = vmatpush1.msra.mxu0 0.0
        %2239 = vmatprep.subr.mxu0 0.0
        %2240 = vmatpush1.msra.mxu0 0.0
        %2241 = vmatprep.subr.mxu0 0.0
        %2242 = vmatpush1.msra.mxu0 0.0
        %2243 = vmatprep.subr.mxu0 0.0
        %2244 = vmatpush1.msra.mxu0 0.0
        %2245 = vmatprep.subr.mxu0 0.0
        %2246 = vmatpush1.msra.mxu0 0.0
        %2247 = vmatprep.subr.mxu0 0.0
        %2248 = vmatpush1.msra.mxu0 0.0
        %2249 = vmatprep.subr.mxu0 0.0
        %2250 = vmatpush1.msra.mxu0 0.0
        %2251 = vmatprep.mubr.f32.mxu0 0.0
        %2252 = vmatmul.mubr.f32.gmra.mrb[0].mxu0 %v1996
        %v2253 = vpop.f32.mrb[0].mxu0
        %v2254 = vadd.f32 0.0, %v2253
        %v2255 = vpop.f32.mrb[0].mxu0
        %2256 = vmatprep.mubr.f32.mxu0 0.0
        %2257 = vmatmul.mubr.f32.gmra.mrb[0].mxu0 %v1999
        %v2258 = vpop.f32.mrb[0].mxu0
        %v2259 = vadd.f32 0.0, %v2258
        %v2260 = vpop.f32.mrb[0].mxu0
        %2261 = vmatprep.mubr.f32.mxu0 0.0
        %2262 = vmatmul.mubr.f32.gmra.mrb[0].mxu0 %v2002
        %v2263 = vpop.f32.mrb[0].mxu0
        %v2264 = vadd.f32 0.0, %v2263
        %v2265 = vpop.f32.mrb[0].mxu0
        %2266 = vmatprep.mubr.f32.mxu0 0.0
        %2267 = vmatmul.mubr.f32.gmra.mrb[0].mxu0 %v2005
        %v2268 = vpop.f32.mrb[0].mxu0
        %v2269 = vadd.f32 0.0, %v2268
        %v2270 = vpop.f32.mrb[0].mxu0
        %2271 = vmatprep.mubr.f32.mxu0 0.0
        %2272 = vmatmul.mubr.f32.gmra.mrb[0].mxu0 %v2008
        %v2273 = vpop.f32.mrb[0].mxu0
        %v2274 = vadd.f32 0.0, %v2273
        %v2275 = vpop.f32.mrb[0].mxu0
        %2276 = vmatprep.mubr.f32.mxu0 0.0
        %2277 = vmatmul.mubr.f32.gmra.mrb[0].mxu0 %v2011
        %v2278 = vpop.f32.mrb[0].mxu0
        %v2279 = vadd.f32 0.0, %v2278
        %v2280 = vpop.f32.mrb[0].mxu0
        %2281 = vmatprep.mubr.f32.mxu0 0.0
        %2282 = vmatmul.mubr.f32.gmra.mrb[0].mxu0 %v2014
        %v2283 = vpop.f32.mrb[0].mxu0
        %v2284 = vadd.f32 0.0, %v2283
        %v2285 = vpop.f32.mrb[0].mxu0
        %2286 = vmatprep.mubr.f32.mxu0 0.0
        %2287 = vmatmul.mubr.f32.gmra.mrb[0].mxu0 %v2017
        %v2288 = vpop.f32.mrb[0].mxu0
        %v2289 = vadd.f32 0.0, %v2288
        %v2290 = vpop.f32.mrb[0].mxu0
        %2291 = vmatprep.mubr.f32.mxu0 0.0
        %2292 = vmatmul.mubr.f32.gmra.mrb[0].mxu0 %v2020
        %v2293 = vpop.f32.mrb[0].mxu0
        %v2294 = vadd.f32 0.0, %v2293
        %v2295 = vpop.f32.mrb[0].mxu0
        %2296 = vmatprep.mubr.f32.mxu0 0.0
        %2297 = vmatmul.mubr.f32.gmra.mrb[0].mxu0 %v2023
        %v2298 = vpop.f32.mrb[0].mxu0
        %v2299 = vadd.f32 0.0, %v2298
        %v2300 = vpop.f32.mrb[0].mxu0
        %2301 = vmatprep.mubr.f32.mxu0 0.0
        %2302 = vmatmul.mubr.f32.gmra.mrb[0].mxu0 %v2026
        %v2303 = vpop.f32.mrb[0].mxu0
        %v2304 = vadd.f32 0.0, %v2303
        %v2305 = vpop.f32.mrb[0].mxu0
        %2306 = vmatprep.mubr.f32.mxu0 0.0
        %2307 = vmatmul.mubr.f32.gmra.mrb[0].mxu0 %v2029
        %v2308 = vpop.f32.mrb[0].mxu0
        %v2309 = vadd.f32 0.0, %v2308
        %v2310 = vpop.f32.mrb[0].mxu0
        %2311 = vmatprep.mubr.f32.mxu0 0.0
        %2312 = vmatmul.mubr.f32.gmra.mrb[0].mxu0 %v2032
        %v2313 = vpop.f32.mrb[0].mxu0
        %v2314 = vadd.f32 0.0, %v2313
        %v2315 = vpop.f32.mrb[0].mxu0
        %2316 = vmatprep.mubr.f32.mxu0 0.0
        %2317 = vmatmul.mubr.f32.gmra.mrb[0].mxu0 %v2035
        %v2318 = vpop.f32.mrb[0].mxu0
        %v2319 = vadd.f32 0.0, %v2318
        %v2320 = vpop.f32.mrb[0].mxu0
        %2321 = vmatprep.mubr.f32.mxu0 0.0
        %2322 = vmatmul.mubr.f32.gmra.mrb[0].mxu0 %v2038
        %v2323 = vpop.f32.mrb[0].mxu0
        %v2324 = vadd.f32 0.0, %v2323
        %v2325 = vpop.f32.mrb[0].mxu0
        %2326 = vmatprep.mubr.f32.mxu0 0.0
        %2327 = vmatmul.mubr.f32.gmra.mrb[0].mxu0 %v2041
        %v2328 = vpop.f32.mrb[0].mxu0
        %v2329 = vadd.f32 0.0, %v2328
        %v2330 = vpop.f32.mrb[0].mxu0
        %2331 = vmatprep.mubr.f32.mxu0 0.0
        %2332 = vmatmul.mubr.f32.gmra.mrb[0].mxu0 %v2044
        %v2333 = vpop.f32.mrb[0].mxu0
        %v2334 = vadd.f32 0.0, %v2333
        %v2335 = vpop.f32.mrb[0].mxu0
        %2336 = vmatprep.mubr.f32.mxu0 0.0
        %2337 = vmatmul.mubr.f32.gmra.mrb[0].mxu0 %v2047
        %v2338 = vpop.f32.mrb[0].mxu0
        %v2339 = vadd.f32 0.0, %v2338
        %v2340 = vpop.f32.mrb[0].mxu0
        %2341 = vmatprep.mubr.f32.mxu0 0.0
        %2342 = vmatmul.mubr.f32.gmra.mrb[0].mxu0 %v2050
        %v2343 = vpop.f32.mrb[0].mxu0
        %v2344 = vadd.f32 0.0, %v2343
        %v2345 = vpop.f32.mrb[0].mxu0
        %2346 = vmatprep.mubr.f32.mxu0 0.0
        %2347 = vmatmul.mubr.f32.gmra.mrb[0].mxu0 %v2053
        %v2348 = vpop.f32.mrb[0].mxu0
        %v2349 = vadd.f32 0.0, %v2348
        %v2350 = vpop.f32.mrb[0].mxu0
        %2351 = vmatprep.mubr.f32.mxu0 0.0
        %2352 = vmatmul.mubr.f32.gmra.mrb[0].mxu0 %v2056
        %v2353 = vpop.f32.mrb[0].mxu0
        %v2354 = vadd.f32 0.0, %v2353
        %v2355 = vpop.f32.mrb[0].mxu0
        %2356 = vmatprep.mubr.f32.mxu0 0.0
        %2357 = vmatmul.mubr.f32.gmra.mrb[0].mxu0 %v2059
        %v2358 = vpop.f32.mrb[0].mxu0
        %v2359 = vadd.f32 0.0, %v2358
        %v2360 = vpop.f32.mrb[0].mxu0
        %2361 = vmatprep.mubr.f32.mxu0 0.0
        %2362 = vmatmul.mubr.f32.gmra.mrb[0].mxu0 %v2062
        %v2363 = vpop.f32.mrb[0].mxu0
        %v2364 = vadd.f32 0.0, %v2363
        %v2365 = vpop.f32.mrb[0].mxu0
        %2366 = vmatprep.mubr.f32.mxu0 0.0
        %2367 = vmatmul.mubr.f32.gmra.mrb[0].mxu0 %v2065
        %v2368 = vpop.f32.mrb[0].mxu0
        %v2369 = vadd.f32 0.0, %v2368
        %v2370 = vpop.f32.mrb[0].mxu0
        %2371 = vmatprep.mubr.f32.mxu0 0.0
        %2372 = vmatmul.mubr.f32.gmra.mrb[0].mxu0 %v2068
        %v2373 = vpop.f32.mrb[0].mxu0
        %v2374 = vadd.f32 0.0, %v2373
        %v2375 = vpop.f32.mrb[0].mxu0
        %2376 = vmatprep.mubr.f32.mxu0 0.0
        %2377 = vmatmul.mubr.f32.gmra.mrb[0].mxu0 %v2071
        %v2378 = vpop.f32.mrb[0].mxu0
        %v2379 = vadd.f32 0.0, %v2378
        %v2380 = vpop.f32.mrb[0].mxu0
        %2381 = vmatprep.mubr.f32.mxu0 0.0
        %2382 = vmatmul.mubr.f32.gmra.mrb[0].mxu0 %v2074
        %v2383 = vpop.f32.mrb[0].mxu0
        %v2384 = vadd.f32 0.0, %v2383
        %v2385 = vpop.f32.mrb[0].mxu0
        %2386 = vmatprep.mubr.f32.mxu0 0.0
        %2387 = vmatmul.mubr.f32.gmra.mrb[0].mxu0 %v2077
        %v2388 = vpop.f32.mrb[0].mxu0
        %v2389 = vadd.f32 0.0, %v2388
        %v2390 = vpop.f32.mrb[0].mxu0
        %2391 = vmatprep.mubr.f32.mxu0 0.0
        %2392 = vmatmul.mubr.f32.gmra.mrb[0].mxu0 %v2080
        %v2393 = vpop.f32.mrb[0].mxu0
        %v2394 = vadd.f32 0.0, %v2393
        %v2395 = vpop.f32.mrb[0].mxu0
        %2396 = vmatprep.mubr.f32.mxu0 0.0
        %2397 = vmatmul.mubr.f32.gmra.mrb[0].mxu0 %v2083
        %v2398 = vpop.f32.mrb[0].mxu0
        %v2399 = vadd.f32 0.0, %v2398
        %v2400 = vpop.f32.mrb[0].mxu0
        %2401 = vmatprep.mubr.f32.mxu0 0.0
        %2402 = vmatmul.mubr.f32.gmra.mrb[0].mxu0 %v2086
        %v2403 = vpop.f32.mrb[0].mxu0
        %v2404 = vadd.f32 0.0, %v2403
        %v2405 = vpop.f32.mrb[0].mxu0
        %2406 = vmatprep.mubr.f32.mxu0 0.0
        %2407 = vmatmul.mubr.f32.gmra.mrb[0].mxu0 %v2089
        %v2408 = vpop.f32.mrb[0].mxu0
        %v2409 = vadd.f32 0.0, %v2408
        %v2410 = vpop.f32.mrb[0].mxu0
        %2411 = vmatprep.mubr.f32.mxu0 0.0
        %2412 = vmatmul.mubr.f32.gmra.mrb[0].mxu0 %v2092
        %v2413 = vpop.f32.mrb[0].mxu0
        %v2414 = vadd.f32 0.0, %v2413
        %v2415 = vpop.f32.mrb[0].mxu0
        %2416 = vmatprep.mubr.f32.mxu0 0.0
        %2417 = vmatmul.mubr.f32.gmra.mrb[0].mxu0 %v2095
        %v2418 = vpop.f32.mrb[0].mxu0
        %v2419 = vadd.f32 0.0, %v2418
        %v2420 = vpop.f32.mrb[0].mxu0
        %2421 = vmatprep.mubr.f32.mxu0 0.0
        %2422 = vmatmul.mubr.f32.gmra.mrb[0].mxu0 %v2098
        %v2423 = vpop.f32.mrb[0].mxu0
        %v2424 = vadd.f32 0.0, %v2423
        %v2425 = vpop.f32.mrb[0].mxu0
        %2426 = vmatprep.mubr.f32.mxu0 0.0
        %2427 = vmatmul.mubr.f32.gmra.mrb[0].mxu0 %v2101
        %v2428 = vpop.f32.mrb[0].mxu0
        %v2429 = vadd.f32 0.0, %v2428
        %v2430 = vpop.f32.mrb[0].mxu0
        %2431 = vmatprep.mubr.f32.mxu0 0.0
        %2432 = vmatmul.mubr.f32.gmra.mrb[0].mxu0 %v2104
        %v2433 = vpop.f32.mrb[0].mxu0
        %v2434 = vadd.f32 0.0, %v2433
        %v2435 = vpop.f32.mrb[0].mxu0
        %2436 = vmatprep.mubr.f32.mxu0 0.0
        %2437 = vmatmul.mubr.f32.gmra.mrb[0].mxu0 %v2107
        %v2438 = vpop.f32.mrb[0].mxu0
        %v2439 = vadd.f32 0.0, %v2438
        %v2440 = vpop.f32.mrb[0].mxu0
        %2441 = vmatprep.mubr.f32.mxu0 0.0
        %2442 = vmatmul.mubr.f32.gmra.mrb[0].mxu0 %v2110
        %v2443 = vpop.f32.mrb[0].mxu0
        %v2444 = vadd.f32 0.0, %v2443
        %v2445 = vpop.f32.mrb[0].mxu0
        %2446 = vmatprep.mubr.f32.mxu0 0.0
        %2447 = vmatmul.mubr.f32.gmra.mrb[0].mxu0 %v2113
        %v2448 = vpop.f32.mrb[0].mxu0
        %v2449 = vadd.f32 0.0, %v2448
        %v2450 = vpop.f32.mrb[0].mxu0
        %2451 = vmatprep.mubr.f32.mxu0 0.0
        %2452 = vmatmul.mubr.f32.gmra.mrb[0].mxu0 %v2116
        %v2453 = vpop.f32.mrb[0].mxu0
        %v2454 = vadd.f32 0.0, %v2453
        %v2455 = vpop.f32.mrb[0].mxu0
        %2456 = vmatprep.mubr.f32.mxu0 0.0
        %2457 = vmatmul.mubr.f32.gmra.mrb[0].mxu0 %v2119
        %v2458 = vpop.f32.mrb[0].mxu0
        %v2459 = vadd.f32 0.0, %v2458
        %v2460 = vpop.f32.mrb[0].mxu0
        %2461 = vmatprep.mubr.f32.mxu0 0.0
        %2462 = vmatmul.mubr.f32.gmra.mrb[0].mxu0 %v2122
        %v2463 = vpop.f32.mrb[0].mxu0
        %v2464 = vadd.f32 0.0, %v2463
        %v2465 = vpop.f32.mrb[0].mxu0
        %2466 = vmatprep.mubr.f32.mxu0 0.0
        %2467 = vmatmul.mubr.f32.gmra.mrb[0].mxu0 %v2125
        %v2468 = vpop.f32.mrb[0].mxu0
        %v2469 = vadd.f32 0.0, %v2468
        %v2470 = vpop.f32.mrb[0].mxu0
        %2471 = vmatprep.mubr.f32.mxu0 0.0
        %2472 = vmatmul.mubr.f32.gmra.mrb[0].mxu0 %v2128
        %v2473 = vpop.f32.mrb[0].mxu0
        %v2474 = vadd.f32 0.0, %v2473
        %v2475 = vpop.f32.mrb[0].mxu0
        %2476 = vmatprep.mubr.f32.mxu0 0.0
        %2477 = vmatmul.mubr.f32.gmra.mrb[0].mxu0 %v2131
        %v2478 = vpop.f32.mrb[0].mxu0
        %v2479 = vadd.f32 0.0, %v2478
        %v2480 = vpop.f32.mrb[0].mxu0
        %2481 = vmatprep.mubr.f32.mxu0 0.0
        %2482 = vmatmul.mubr.f32.gmra.mrb[0].mxu0 %v2134
        %v2483 = vpop.f32.mrb[0].mxu0
        %v2484 = vadd.f32 0.0, %v2483
        %v2485 = vpop.f32.mrb[0].mxu0
        %2486 = vmatprep.mubr.f32.mxu0 0.0
        %2487 = vmatmul.mubr.f32.gmra.mrb[0].mxu0 %v2137
        %v2488 = vpop.f32.mrb[0].mxu0
        %v2489 = vadd.f32 0.0, %v2488
        %v2490 = vpop.f32.mrb[0].mxu0
        %2491 = vmatprep.mubr.f32.mxu0 0.0
        %2492 = vmatmul.mubr.f32.gmra.mrb[0].mxu0 %v2140
        %v2493 = vpop.f32.mrb[0].mxu0
        %v2494 = vadd.f32 0.0, %v2493
        %v2495 = vpop.f32.mrb[0].mxu0
        %2496 = vmatprep.mubr.f32.mxu0 0.0
        %2497 = vmatmul.mubr.f32.gmra.mrb[0].mxu0 %v2143
        %v2498 = vpop.f32.mrb[0].mxu0
        %v2499 = vadd.f32 0.0, %v2498
        %v2500 = vpop.f32.mrb[0].mxu0
        %2501 = vmatprep.mubr.f32.mxu0 0.0
        %2502 = vmatmul.mubr.f32.gmra.mrb[0].mxu0 %v2146
        %v2503 = vpop.f32.mrb[0].mxu0
        %v2504 = vadd.f32 0.0, %v2503
        %v2505 = vpop.f32.mrb[0].mxu0
        %2506 = vmatprep.mubr.f32.mxu0 0.0
        %2507 = vmatmul.mubr.f32.gmra.mrb[0].mxu0 %v2149
        %v2508 = vpop.f32.mrb[0].mxu0
        %v2509 = vadd.f32 0.0, %v2508
        %v2510 = vpop.f32.mrb[0].mxu0
        %2511 = vmatprep.mubr.f32.mxu0 0.0
        %2512 = vmatmul.mubr.f32.gmra.mrb[0].mxu0 %v2152
        %v2513 = vpop.f32.mrb[0].mxu0
        %v2514 = vadd.f32 0.0, %v2513
        %v2515 = vpop.f32.mrb[0].mxu0
        %2516 = vmatprep.mubr.f32.mxu0 0.0
        %2517 = vmatmul.mubr.f32.gmra.mrb[0].mxu0 %v2155
        %v2518 = vpop.f32.mrb[0].mxu0
        %v2519 = vadd.f32 0.0, %v2518
        %v2520 = vpop.f32.mrb[0].mxu0
        %2521 = vmatprep.mubr.f32.mxu0 0.0
        %2522 = vmatmul.mubr.f32.gmra.mrb[0].mxu0 %v2158
        %v2523 = vpop.f32.mrb[0].mxu0
        %v2524 = vadd.f32 0.0, %v2523
        %v2525 = vpop.f32.mrb[0].mxu0
        %2526 = vmatprep.mubr.f32.mxu0 0.0
        %2527 = vmatmul.mubr.f32.gmra.mrb[0].mxu0 %v2161
        %v2528 = vpop.f32.mrb[0].mxu0
        %v2529 = vadd.f32 0.0, %v2528
        %v2530 = vpop.f32.mrb[0].mxu0
        %2531 = vmatprep.mubr.f32.mxu0 0.0
        %2532 = vmatmul.mubr.f32.gmra.mrb[0].mxu0 %v2164
        %v2533 = vpop.f32.mrb[0].mxu0
        %v2534 = vadd.f32 0.0, %v2533
        %v2535 = vpop.f32.mrb[0].mxu0
        %2536 = vmatprep.mubr.f32.mxu0 0.0
        %2537 = vmatmul.mubr.f32.gmra.mrb[0].mxu0 %v2167
        %v2538 = vpop.f32.mrb[0].mxu0
        %v2539 = vadd.f32 0.0, %v2538
        %v2540 = vpop.f32.mrb[0].mxu0
        %2541 = vmatprep.mubr.f32.mxu0 0.0
        %2542 = vmatmul.mubr.f32.gmra.mrb[0].mxu0 %v2170
        %v2543 = vpop.f32.mrb[0].mxu0
        %v2544 = vadd.f32 0.0, %v2543
        %v2545 = vpop.f32.mrb[0].mxu0
        %2546 = vmatprep.mubr.f32.mxu0 0.0
        %2547 = vmatmul.mubr.f32.gmra.mrb[0].mxu0 %v2173
        %v2548 = vpop.f32.mrb[0].mxu0
        %v2549 = vadd.f32 0.0, %v2548
        %v2550 = vpop.f32.mrb[0].mxu0
        %2551 = vmatprep.mubr.f32.mxu0 0.0
        %2552 = vmatmul.mubr.f32.gmra.mrb[0].mxu0 %v2176
        %v2553 = vpop.f32.mrb[0].mxu0
        %v2554 = vadd.f32 0.0, %v2553
        %v2555 = vpop.f32.mrb[0].mxu0
        %2556 = vmatprep.mubr.f32.mxu0 0.0
        %2557 = vmatmul.mubr.f32.gmra.mrb[0].mxu0 %v2179
        %v2558 = vpop.f32.mrb[0].mxu0
        %v2559 = vadd.f32 0.0, %v2558
        %v2560 = vpop.f32.mrb[0].mxu0
        %2561 = vmatprep.mubr.f32.mxu0 0.0
        %2562 = vmatmul.mubr.f32.gmra.mrb[0].mxu0 %v2182
        %v2563 = vpop.f32.mrb[0].mxu0
        %v2564 = vadd.f32 0.0, %v2563
        %v2565 = vpop.f32.mrb[0].mxu0
        %2566 = vmatprep.mubr.f32.mxu0 0.0
        %2567 = vmatmul.mubr.f32.gmra.mrb[0].mxu0 %v2185
        %v2568 = vpop.f32.mrb[0].mxu0
        %v2569 = vadd.f32 0.0, %v2568
        %v2570 = vpop.f32.mrb[0].mxu0
        %2571 = vdwg.mxu0
        %v2572 = vmul.f32 %v2254, %v804
        %v2573 = vmul.f32 %v2259, %v804
        %v2574 = vmul.f32 %v2264, %v804
        %v2575 = vmul.f32 %v2269, %v804
        %v2576 = vmul.f32 %v2274, %v804
        %v2577 = vmul.f32 %v2279, %v804
        %v2578 = vmul.f32 %v2284, %v804
        %v2579 = vmul.f32 %v2289, %v804
        %v2580 = vmul.f32 %v2294, %v808
        %v2581 = vmul.f32 %v2299, %v808
        %v2582 = vmul.f32 %v2304, %v808
        %v2583 = vmul.f32 %v2309, %v808
        %v2584 = vmul.f32 %v2314, %v808
        %v2585 = vmul.f32 %v2319, %v808
        %v2586 = vmul.f32 %v2324, %v808
        %v2587 = vmul.f32 %v2329, %v808
        %v2588 = vmul.f32 %v2334, %v812
        %v2589 = vmul.f32 %v2339, %v812
        %v2590 = vmul.f32 %v2344, %v812
        %v2591 = vmul.f32 %v2349, %v812
        %v2592 = vmul.f32 %v2354, %v812
        %v2593 = vmul.f32 %v2359, %v812
        %v2594 = vmul.f32 %v2364, %v812
        %v2595 = vmul.f32 %v2369, %v812
        %v2596 = vmul.f32 %v2374, %v816
        %v2597 = vmul.f32 %v2379, %v816
        %v2598 = vmul.f32 %v2384, %v816
        %v2599 = vmul.f32 %v2389, %v816
        %v2600 = vmul.f32 %v2394, %v816
        %v2601 = vmul.f32 %v2399, %v816
        %v2602 = vmul.f32 %v2404, %v816
        %v2603 = vmul.f32 %v2409, %v816
        %v2604 = vmul.f32 %v2414, %v820
        %v2605 = vmul.f32 %v2419, %v820
        %v2606 = vmul.f32 %v2424, %v820
        %v2607 = vmul.f32 %v2429, %v820
        %v2608 = vmul.f32 %v2434, %v820
        %v2609 = vmul.f32 %v2439, %v820
        %v2610 = vmul.f32 %v2444, %v820
        %v2611 = vmul.f32 %v2449, %v820
        %v2612 = vmul.f32 %v2454, %v824
        %v2613 = vmul.f32 %v2459, %v824
        %v2614 = vmul.f32 %v2464, %v824
        %v2615 = vmul.f32 %v2469, %v824
        %v2616 = vmul.f32 %v2474, %v824
        %v2617 = vmul.f32 %v2479, %v824
        %v2618 = vmul.f32 %v2484, %v824
        %v2619 = vmul.f32 %v2489, %v824
        %v2620 = vmul.f32 %v2494, %v828
        %v2621 = vmul.f32 %v2499, %v828
        %v2622 = vmul.f32 %v2504, %v828
        %v2623 = vmul.f32 %v2509, %v828
        %v2624 = vmul.f32 %v2514, %v828
        %v2625 = vmul.f32 %v2519, %v828
        %v2626 = vmul.f32 %v2524, %v828
        %v2627 = vmul.f32 %v2529, %v828
        %v2628 = vmul.f32 %v2534, %v832
        %v2629 = vmul.f32 %v2539, %v832
        %v2630 = vmul.f32 %v2544, %v832
        %v2631 = vmul.f32 %v2549, %v832
        %v2632 = vmul.f32 %v2554, %v832
        %v2633 = vmul.f32 %v2559, %v832
        %v2634 = vmul.f32 %v2564, %v832
        %v2635 = vmul.f32 %v2569, %v832
        %v2636 = vadd.f32 %v2572, %v2580
        %v2637 = vadd.f32 %v2636, %v2588
        %v2638 = vadd.f32 %v2637, %v2596
        %v2639 = vadd.f32 %v2638, %v2604
        %v2640 = vadd.f32 %v2639, %v2612
        %v2641 = vadd.f32 %v2640, %v2620
        %v2642 = vadd.f32 %v2641, %v2628
        %v2643 = vadd.f32 %v2573, %v2581
        %v2644 = vadd.f32 %v2643, %v2589
        %v2645 = vadd.f32 %v2644, %v2597
        %v2646 = vadd.f32 %v2645, %v2605
        %v2647 = vadd.f32 %v2646, %v2613
        %v2648 = vadd.f32 %v2647, %v2621
        %v2649 = vadd.f32 %v2648, %v2629
        %v2650 = vadd.f32 %v2574, %v2582
        %v2651 = vadd.f32 %v2650, %v2590
        %v2652 = vadd.f32 %v2651, %v2598
        %v2653 = vadd.f32 %v2652, %v2606
        %v2654 = vadd.f32 %v2653, %v2614
        %v2655 = vadd.f32 %v2654, %v2622
        %v2656 = vadd.f32 %v2655, %v2630
        %v2657 = vadd.f32 %v2575, %v2583
        %v2658 = vadd.f32 %v2657, %v2591
        %v2659 = vadd.f32 %v2658, %v2599
        %v2660 = vadd.f32 %v2659, %v2607
        %v2661 = vadd.f32 %v2660, %v2615
        %v2662 = vadd.f32 %v2661, %v2623
        %v2663 = vadd.f32 %v2662, %v2631
        %v2664 = vadd.f32 %v2576, %v2584
        %v2665 = vadd.f32 %v2664, %v2592
        %v2666 = vadd.f32 %v2665, %v2600
        %v2667 = vadd.f32 %v2666, %v2608
        %v2668 = vadd.f32 %v2667, %v2616
        %v2669 = vadd.f32 %v2668, %v2624
        %v2670 = vadd.f32 %v2669, %v2632
        %v2671 = vadd.f32 %v2577, %v2585
        %v2672 = vadd.f32 %v2671, %v2593
        %v2673 = vadd.f32 %v2672, %v2601
        %v2674 = vadd.f32 %v2673, %v2609
        %v2675 = vadd.f32 %v2674, %v2617
        %v2676 = vadd.f32 %v2675, %v2625
        %v2677 = vadd.f32 %v2676, %v2633
        %v2678 = vadd.f32 %v2578, %v2586
        %v2679 = vadd.f32 %v2678, %v2594
        %v2680 = vadd.f32 %v2679, %v2602
        %v2681 = vadd.f32 %v2680, %v2610
        %v2682 = vadd.f32 %v2681, %v2618
        %v2683 = vadd.f32 %v2682, %v2626
        %v2684 = vadd.f32 %v2683, %v2634
        %v2685 = vadd.f32 %v2579, %v2587
        %v2686 = vadd.f32 %v2685, %v2595
        %v2687 = vadd.f32 %v2686, %v2603
        %v2688 = vadd.f32 %v2687, %v2611
        %v2689 = vadd.f32 %v2688, %v2619
        %v2690 = vadd.f32 %v2689, %v2627
        %v2691 = vadd.f32 %v2690, %v2635
        %v2692 = vadd.f32 %v328, %v2642
        %v2693 = vadd.f32 %v329, %v2649
        %v2694 = vadd.f32 %v330, %v2656
        %v2695 = vadd.f32 %v331, %v2663
        %v2696 = vadd.f32 %v332, %v2670
        %v2697 = vadd.f32 %v333, %v2677
        %v2698 = vadd.f32 %v334, %v2684
        %v2699 = vadd.f32 %v335, %v2691
        %v2700 = vmul.f32 %v2692, %v2692
        %v2701 = vmul.f32 %v2693, %v2693
        %v2702 = vmul.f32 %v2694, %v2694
        %v2703 = vmul.f32 %v2695, %v2695
        %v2704 = vmul.f32 %v2696, %v2696
        %v2705 = vmul.f32 %v2697, %v2697
        %v2706 = vmul.f32 %v2698, %v2698
        %v2707 = vmul.f32 %v2699, %v2699
        %2708 = vadd.xlane.f32.xlu0 %v2700
        %v2709 = vpop.xlane.xlu0 %2708
        %2710 = vadd.xlane.f32.xlu0 %v2701
        %v2711 = vpop.xlane.xlu0 %2710
        %2712 = vadd.xlane.f32.xlu0 %v2702
        %v2713 = vpop.xlane.xlu0 %2712
        %2714 = vadd.xlane.f32.xlu0 %v2703
        %v2715 = vpop.xlane.xlu0 %2714
        %2716 = vadd.xlane.f32.xlu0 %v2704
        %v2717 = vpop.xlane.xlu0 %2716
        %2718 = vadd.xlane.f32.xlu0 %v2705
        %v2719 = vpop.xlane.xlu0 %2718
        %2720 = vadd.xlane.f32.xlu0 %v2706
        %v2721 = vpop.xlane.xlu0 %2720
        %2722 = vadd.xlane.f32.xlu0 %v2707
        %v2723 = vpop.xlane.xlu0 %2722
        %v2724 = vmul.f32 %v2709, 0.03125
        %v2725 = vmul.f32 %v2711, 0.03125
        %v2726 = vmul.f32 %v2713, 0.03125
        %v2727 = vmul.f32 %v2715, 0.03125
        %v2728 = vmul.f32 %v2717, 0.03125
        %v2729 = vmul.f32 %v2719, 0.03125
        %v2730 = vmul.f32 %v2721, 0.03125
        %v2731 = vmul.f32 %v2723, 0.03125
        %v2732 = vadd.f32 %v2724, 1e-06
        %v2733 = vadd.f32 %v2725, 1e-06
        %v2734 = vadd.f32 %v2726, 1e-06
        %v2735 = vadd.f32 %v2727, 1e-06
        %v2736 = vadd.f32 %v2728, 1e-06
        %v2737 = vadd.f32 %v2729, 1e-06
        %v2738 = vadd.f32 %v2730, 1e-06
        %v2739 = vadd.f32 %v2731, 1e-06
        %v2740 = vrsqrt.pop %v2732
        %v2741 = vrsqrt.pop %v2733
        %v2742 = vrsqrt.pop %v2734
        %v2743 = vrsqrt.pop %v2735
        %v2744 = vrsqrt.pop %v2736
        %v2745 = vrsqrt.pop %v2737
        %v2746 = vrsqrt.pop %v2738
        %v2747 = vrsqrt.pop %v2739
        %v2748 = vmul.f32 %v2692, %v2740
        %v2749 = vmul.f32 %v2693, %v2741
        %v2750 = vmul.f32 %v2694, %v2742
        %v2751 = vmul.f32 %v2695, %v2743
        %v2752 = vmul.f32 %v2696, %v2744
        %v2753 = vmul.f32 %v2697, %v2745
        %v2754 = vmul.f32 %v2698, %v2746
        %v2755 = vmul.f32 %v2699, %v2747
        %v2756 = vld [vmem:[#allocation8] sm:$0xff]
        %v2757 = vld [vmem:[#allocation8 + $0x8] sm:$0xff]
        %v2758 = vld [vmem:[#allocation8 + $0x10] sm:$0xff]
        %v2759 = vld [vmem:[#allocation8 + $0x18] sm:$0xff]
        %v2760 = vld [vmem:[#allocation8 + $0x20] sm:$0xff]
        %v2761 = vld [vmem:[#allocation8 + $0x28] sm:$0xff]
        %v2762 = vld [vmem:[#allocation8 + $0x30] sm:$0xff]
        %v2763 = vld [vmem:[#allocation8 + $0x38] sm:$0xff]
        %v2764 = vld [vmem:[#allocation8 + $0x40] sm:$0xff]
        %v2765 = vld [vmem:[#allocation8 + $0x48] sm:$0xff]
        %v2766 = vld [vmem:[#allocation8 + $0x50] sm:$0xff]
        %v2767 = vld [vmem:[#allocation8 + $0x58] sm:$0xff]
        %v2768 = vld [vmem:[#allocation8 + $0x60] sm:$0xff]
        %v2769 = vld [vmem:[#allocation8 + $0x68] sm:$0xff]
        %v2770 = vld [vmem:[#allocation8 + $0x70] sm:$0xff]
        %v2771 = vld [vmem:[#allocation8 + $0x78] sm:$0xff]
        %v2772 = vld [vmem:[#allocation8 + $0x80] sm:$0xff]
        %v2773 = vld [vmem:[#allocation8 + $0x88] sm:$0xff]
        %v2774 = vld [vmem:[#allocation8 + $0x90] sm:$0xff]
        %v2775 = vld [vmem:[#allocation8 + $0x98] sm:$0xff]
        %v2776 = vld [vmem:[#allocation8 + $0xa0] sm:$0xff]
        %v2777 = vld [vmem:[#allocation8 + $0xa8] sm:$0xff]
        %v2778 = vld [vmem:[#allocation8 + $0xb0] sm:$0xff]
        %v2779 = vld [vmem:[#allocation8 + $0xb8] sm:$0xff]
        %v2780 = vld [vmem:[#allocation8 + $0xc0] sm:$0xff]
        %v2781 = vld [vmem:[#allocation8 + $0xc8] sm:$0xff]
        %v2782 = vld [vmem:[#allocation8 + $0xd0] sm:$0xff]
        %v2783 = vld [vmem:[#allocation8 + $0xd8] sm:$0xff]
        %v2784 = vld [vmem:[#allocation8 + $0xe0] sm:$0xff]
        %v2785 = vld [vmem:[#allocation8 + $0xe8] sm:$0xff]
        %v2786 = vld [vmem:[#allocation8 + $0xf0] sm:$0xff]
        %v2787 = vld [vmem:[#allocation8 + $0xf8] sm:$0xff]
        %2788 = vmatprep.subr.mxu0 %v2757
        %2789 = vmatpush1.msra.mxu0 %v2756
        %2790 = vmatprep.subr.mxu0 %v2759
        %2791 = vmatpush1.msra.mxu0 %v2758
        %2792 = vmatprep.subr.mxu0 %v2761
        %2793 = vmatpush1.msra.mxu0 %v2760
        %2794 = vmatprep.subr.mxu0 %v2763
        %2795 = vmatpush1.msra.mxu0 %v2762
        %2796 = vmatprep.subr.mxu0 %v2765
        %2797 = vmatpush1.msra.mxu0 %v2764
        %2798 = vmatprep.subr.mxu0 %v2767
        %2799 = vmatpush1.msra.mxu0 %v2766
        %2800 = vmatprep.subr.mxu0 %v2769
        %2801 = vmatpush1.msra.mxu0 %v2768
        %2802 = vmatprep.subr.mxu0 %v2771
        %2803 = vmatpush1.msra.mxu0 %v2770
        %2804 = vmatprep.subr.mxu0 %v2773
        %2805 = vmatpush1.msra.mxu0 %v2772
        %2806 = vmatprep.subr.mxu0 %v2775
        %2807 = vmatpush1.msra.mxu0 %v2774
        %2808 = vmatprep.subr.mxu0 %v2777
        %2809 = vmatpush1.msra.mxu0 %v2776
        %2810 = vmatprep.subr.mxu0 %v2779
        %2811 = vmatpush1.msra.mxu0 %v2778
        %2812 = vmatprep.subr.mxu0 %v2781
        %2813 = vmatpush1.msra.mxu0 %v2780
        %2814 = vmatprep.subr.mxu0 %v2783
        %2815 = vmatpush1.msra.mxu0 %v2782
        %2816 = vmatprep.subr.mxu0 %v2785
        %2817 = vmatpush1.msra.mxu0 %v2784
        %2818 = vmatprep.subr.mxu0 %v2787
        %2819 = vmatpush1.msra.mxu0 %v2786
        %2820 = vmatprep.subr.mxu0 0.0
        %2821 = vmatpush1.msra.mxu0 0.0
        %2822 = vmatprep.subr.mxu0 0.0
        %2823 = vmatpush1.msra.mxu0 0.0
        %2824 = vmatprep.subr.mxu0 0.0
        %2825 = vmatpush1.msra.mxu0 0.0
        %2826 = vmatprep.subr.mxu0 0.0
        %2827 = vmatpush1.msra.mxu0 0.0
        %2828 = vmatprep.subr.mxu0 0.0
        %2829 = vmatpush1.msra.mxu0 0.0
        %2830 = vmatprep.subr.mxu0 0.0
        %2831 = vmatpush1.msra.mxu0 0.0
        %2832 = vmatprep.subr.mxu0 0.0
        %2833 = vmatpush1.msra.mxu0 0.0
        %2834 = vmatprep.subr.mxu0 0.0
        %2835 = vmatpush1.msra.mxu0 0.0
        %2836 = vmatprep.subr.mxu0 0.0
        %2837 = vmatpush1.msra.mxu0 0.0
        %2838 = vmatprep.subr.mxu0 0.0
        %2839 = vmatpush1.msra.mxu0 0.0
        %2840 = vmatprep.subr.mxu0 0.0
        %2841 = vmatpush1.msra.mxu0 0.0
        %2842 = vmatprep.subr.mxu0 0.0
        %2843 = vmatpush1.msra.mxu0 0.0
        %2844 = vmatprep.subr.mxu0 0.0
        %2845 = vmatpush1.msra.mxu0 0.0
        %2846 = vmatprep.subr.mxu0 0.0
        %2847 = vmatpush1.msra.mxu0 0.0
        %2848 = vmatprep.subr.mxu0 0.0
        %2849 = vmatpush1.msra.mxu0 0.0
        %2850 = vmatprep.subr.mxu0 0.0
        %2851 = vmatpush1.msra.mxu0 0.0
        %2852 = vmatprep.mubr.f32.mxu0 0.0
        %2853 = vmatmul.mubr.f32.gmra.mrb[0].mxu0 %v2748
        %v2854 = vpop.f32.mrb[0].mxu0
        %v2855 = vadd.f32 0.0, %v2854
        %v2856 = vpop.f32.mrb[0].mxu0
        %v2857 = vadd.f32 0.0, %v2856
        %2858 = vmatprep.mubr.f32.mxu0 0.0
        %2859 = vmatmul.mubr.f32.gmra.mrb[0].mxu0 %v2749
        %v2860 = vpop.f32.mrb[0].mxu0
        %v2861 = vadd.f32 0.0, %v2860
        %v2862 = vpop.f32.mrb[0].mxu0
        %v2863 = vadd.f32 0.0, %v2862
        %2864 = vmatprep.mubr.f32.mxu0 0.0
        %2865 = vmatmul.mubr.f32.gmra.mrb[0].mxu0 %v2750
        %v2866 = vpop.f32.mrb[0].mxu0
        %v2867 = vadd.f32 0.0, %v2866
        %v2868 = vpop.f32.mrb[0].mxu0
        %v2869 = vadd.f32 0.0, %v2868
        %2870 = vmatprep.mubr.f32.mxu0 0.0
        %2871 = vmatmul.mubr.f32.gmra.mrb[0].mxu0 %v2751
        %v2872 = vpop.f32.mrb[0].mxu0
        %v2873 = vadd.f32 0.0, %v2872
        %v2874 = vpop.f32.mrb[0].mxu0
        %v2875 = vadd.f32 0.0, %v2874
        %2876 = vmatprep.mubr.f32.mxu0 0.0
        %2877 = vmatmul.mubr.f32.gmra.mrb[0].mxu0 %v2752
        %v2878 = vpop.f32.mrb[0].mxu0
        %v2879 = vadd.f32 0.0, %v2878
        %v2880 = vpop.f32.mrb[0].mxu0
        %v2881 = vadd.f32 0.0, %v2880
        %2882 = vmatprep.mubr.f32.mxu0 0.0
        %2883 = vmatmul.mubr.f32.gmra.mrb[0].mxu0 %v2753
        %v2884 = vpop.f32.mrb[0].mxu0
        %v2885 = vadd.f32 0.0, %v2884
        %v2886 = vpop.f32.mrb[0].mxu0
        %v2887 = vadd.f32 0.0, %v2886
        %2888 = vmatprep.mubr.f32.mxu0 0.0
        %2889 = vmatmul.mubr.f32.gmra.mrb[0].mxu0 %v2754
        %v2890 = vpop.f32.mrb[0].mxu0
        %v2891 = vadd.f32 0.0, %v2890
        %v2892 = vpop.f32.mrb[0].mxu0
        %v2893 = vadd.f32 0.0, %v2892
        %2894 = vmatprep.mubr.f32.mxu0 0.0
        %2895 = vmatmul.mubr.f32.gmra.mrb[0].mxu0 %v2755
        %v2896 = vpop.f32.mrb[0].mxu0
        %v2897 = vadd.f32 0.0, %v2896
        %v2898 = vpop.f32.mrb[0].mxu0
        %v2899 = vadd.f32 0.0, %v2898
        %2900 = vdwg.mxu0
        %v2901 = vxor.u32 %v2855, 2147483648
        %v2902 = vxor.u32 %v2857, 2147483648
        %v2903 = vxor.u32 %v2861, 2147483648
        %v2904 = vxor.u32 %v2863, 2147483648
        %v2905 = vxor.u32 %v2867, 2147483648
        %v2906 = vxor.u32 %v2869, 2147483648
        %v2907 = vxor.u32 %v2873, 2147483648
        %v2908 = vxor.u32 %v2875, 2147483648
        %v2909 = vxor.u32 %v2879, 2147483648
        %v2910 = vxor.u32 %v2881, 2147483648
        %v2911 = vxor.u32 %v2885, 2147483648
        %v2912 = vxor.u32 %v2887, 2147483648
        %v2913 = vxor.u32 %v2891, 2147483648
        %v2914 = vxor.u32 %v2893, 2147483648
        %v2915 = vxor.u32 %v2897, 2147483648
        %v2916 = vxor.u32 %v2899, 2147483648
        %v2917 = vmul.f32 %v2901, 1.442695
        %v2918 = vpow.pop %v2917
        %v2919 = vmul.f32 %v2902, 1.442695
        %v2920 = vpow.pop %v2919
        %v2921 = vmul.f32 %v2903, 1.442695
        %v2922 = vpow.pop %v2921
        %v2923 = vmul.f32 %v2904, 1.442695
        %v2924 = vpow.pop %v2923
        %v2925 = vmul.f32 %v2905, 1.442695
        %v2926 = vpow.pop %v2925
        %v2927 = vmul.f32 %v2906, 1.442695
        %v2928 = vpow.pop %v2927
        %v2929 = vmul.f32 %v2907, 1.442695
        %v2930 = vpow.pop %v2929
        %v2931 = vmul.f32 %v2908, 1.442695
        %v2932 = vpow.pop %v2931
        %v2933 = vmul.f32 %v2909, 1.442695
        %v2934 = vpow.pop %v2933
        %v2935 = vmul.f32 %v2910, 1.442695
        %v2936 = vpow.pop %v2935
        %v2937 = vmul.f32 %v2911, 1.442695
        %v2938 = vpow.pop %v2937
        %v2939 = vmul.f32 %v2912, 1.442695
        %v2940 = vpow.pop %v2939
        %v2941 = vmul.f32 %v2913, 1.442695
        %v2942 = vpow.pop %v2941
        %v2943 = vmul.f32 %v2914, 1.442695
        %v2944 = vpow.pop %v2943
        %v2945 = vmul.f32 %v2915, 1.442695
        %v2946 = vpow.pop %v2945
        %v2947 = vmul.f32 %v2916, 1.442695
        %v2948 = vpow.pop %v2947
        %v2949 = vadd.f32 %v2918, 1.0
        %v2950 = vadd.f32 %v2920, 1.0
        %v2951 = vadd.f32 %v2922, 1.0
        %v2952 = vadd.f32 %v2924, 1.0
        %v2953 = vadd.f32 %v2926, 1.0
        %v2954 = vadd.f32 %v2928, 1.0
        %v2955 = vadd.f32 %v2930, 1.0
        %v2956 = vadd.f32 %v2932, 1.0
        %v2957 = vadd.f32 %v2934, 1.0
        %v2958 = vadd.f32 %v2936, 1.0
        %v2959 = vadd.f32 %v2938, 1.0
        %v2960 = vadd.f32 %v2940, 1.0
        %v2961 = vadd.f32 %v2942, 1.0
        %v2962 = vadd.f32 %v2944, 1.0
        %v2963 = vadd.f32 %v2946, 1.0
        %v2964 = vadd.f32 %v2948, 1.0
        %v2965 = vrcp.pop %v2949
        %v2966 = vmul.f32 1.0, %v2965
        %v2967 = vrcp.pop %v2950
        %v2968 = vmul.f32 1.0, %v2967
        %v2969 = vrcp.pop %v2951
        %v2970 = vmul.f32 1.0, %v2969
        %v2971 = vrcp.pop %v2952
        %v2972 = vmul.f32 1.0, %v2971
        %v2973 = vrcp.pop %v2953
        %v2974 = vmul.f32 1.0, %v2973
        %v2975 = vrcp.pop %v2954
        %v2976 = vmul.f32 1.0, %v2975
        %v2977 = vrcp.pop %v2955
        %v2978 = vmul.f32 1.0, %v2977
        %v2979 = vrcp.pop %v2956
        %v2980 = vmul.f32 1.0, %v2979
        %v2981 = vrcp.pop %v2957
        %v2982 = vmul.f32 1.0, %v2981
        %v2983 = vrcp.pop %v2958
        %v2984 = vmul.f32 1.0, %v2983
        %v2985 = vrcp.pop %v2959
        %v2986 = vmul.f32 1.0, %v2985
        %v2987 = vrcp.pop %v2960
        %v2988 = vmul.f32 1.0, %v2987
        %v2989 = vrcp.pop %v2961
        %v2990 = vmul.f32 1.0, %v2989
        %v2991 = vrcp.pop %v2962
        %v2992 = vmul.f32 1.0, %v2991
        %v2993 = vrcp.pop %v2963
        %v2994 = vmul.f32 1.0, %v2993
        %v2995 = vrcp.pop %v2964
        %v2996 = vmul.f32 1.0, %v2995
        %v2997 = vmul.f32 %v2855, %v2966
        %v2998 = vmul.f32 %v2857, %v2968
        %v2999 = vmul.f32 %v2861, %v2970
        %v3000 = vmul.f32 %v2863, %v2972
        %v3001 = vmul.f32 %v2867, %v2974
        %v3002 = vmul.f32 %v2869, %v2976
        %v3003 = vmul.f32 %v2873, %v2978
        %v3004 = vmul.f32 %v2875, %v2980
        %v3005 = vmul.f32 %v2879, %v2982
        %v3006 = vmul.f32 %v2881, %v2984
        %v3007 = vmul.f32 %v2885, %v2986
        %v3008 = vmul.f32 %v2887, %v2988
        %v3009 = vmul.f32 %v2891, %v2990
        %v3010 = vmul.f32 %v2893, %v2992
        %v3011 = vmul.f32 %v2897, %v2994
        %v3012 = vmul.f32 %v2899, %v2996
        %v3013 = vld [vmem:[#allocation10] sm:$0xff]
        %v3014 = vld [vmem:[#allocation10 + $0x8] sm:$0xff]
        %v3015 = vld [vmem:[#allocation10 + $0x10] sm:$0xff]
        %v3016 = vld [vmem:[#allocation10 + $0x18] sm:$0xff]
        %v3017 = vld [vmem:[#allocation10 + $0x20] sm:$0xff]
        %v3018 = vld [vmem:[#allocation10 + $0x28] sm:$0xff]
        %v3019 = vld [vmem:[#allocation10 + $0x30] sm:$0xff]
        %v3020 = vld [vmem:[#allocation10 + $0x38] sm:$0xff]
        %v3021 = vld [vmem:[#allocation10 + $0x40] sm:$0xff]
        %v3022 = vld [vmem:[#allocation10 + $0x48] sm:$0xff]
        %v3023 = vld [vmem:[#allocation10 + $0x50] sm:$0xff]
        %v3024 = vld [vmem:[#allocation10 + $0x58] sm:$0xff]
        %v3025 = vld [vmem:[#allocation10 + $0x60] sm:$0xff]
        %v3026 = vld [vmem:[#allocation10 + $0x68] sm:$0xff]
        %v3027 = vld [vmem:[#allocation10 + $0x70] sm:$0xff]
        %v3028 = vld [vmem:[#allocation10 + $0x78] sm:$0xff]
        %v3029 = vld [vmem:[#allocation10 + $0x80] sm:$0xff]
        %v3030 = vld [vmem:[#allocation10 + $0x88] sm:$0xff]
        %v3031 = vld [vmem:[#allocation10 + $0x90] sm:$0xff]
        %v3032 = vld [vmem:[#allocation10 + $0x98] sm:$0xff]
        %v3033 = vld [vmem:[#allocation10 + $0xa0] sm:$0xff]
        %v3034 = vld [vmem:[#allocation10 + $0xa8] sm:$0xff]
        %v3035 = vld [vmem:[#allocation10 + $0xb0] sm:$0xff]
        %v3036 = vld [vmem:[#allocation10 + $0xb8] sm:$0xff]
        %v3037 = vld [vmem:[#allocation10 + $0xc0] sm:$0xff]
        %v3038 = vld [vmem:[#allocation10 + $0xc8] sm:$0xff]
        %v3039 = vld [vmem:[#allocation10 + $0xd0] sm:$0xff]
        %v3040 = vld [vmem:[#allocation10 + $0xd8] sm:$0xff]
        %v3041 = vld [vmem:[#allocation10 + $0xe0] sm:$0xff]
        %v3042 = vld [vmem:[#allocation10 + $0xe8] sm:$0xff]
        %v3043 = vld [vmem:[#allocation10 + $0xf0] sm:$0xff]
        %v3044 = vld [vmem:[#allocation10 + $0xf8] sm:$0xff]
        %3045 = vmatprep.subr.mxu0 0.0
        %3046 = vmatpush1.msra.mxu0 %v3013
        %3047 = vmatprep.subr.mxu0 0.0
        %3048 = vmatpush1.msra.mxu0 %v3014
        %3049 = vmatprep.subr.mxu0 0.0
        %3050 = vmatpush1.msra.mxu0 %v3015
        %3051 = vmatprep.subr.mxu0 0.0
        %3052 = vmatpush1.msra.mxu0 %v3016
        %3053 = vmatprep.subr.mxu0 0.0
        %3054 = vmatpush1.msra.mxu0 %v3017
        %3055 = vmatprep.subr.mxu0 0.0
        %3056 = vmatpush1.msra.mxu0 %v3018
        %3057 = vmatprep.subr.mxu0 0.0
        %3058 = vmatpush1.msra.mxu0 %v3019
        %3059 = vmatprep.subr.mxu0 0.0
        %3060 = vmatpush1.msra.mxu0 %v3020
        %3061 = vmatprep.subr.mxu0 0.0
        %3062 = vmatpush1.msra.mxu0 %v3021
        %3063 = vmatprep.subr.mxu0 0.0
        %3064 = vmatpush1.msra.mxu0 %v3022
        %3065 = vmatprep.subr.mxu0 0.0
        %3066 = vmatpush1.msra.mxu0 %v3023
        %3067 = vmatprep.subr.mxu0 0.0
        %3068 = vmatpush1.msra.mxu0 %v3024
        %3069 = vmatprep.subr.mxu0 0.0
        %3070 = vmatpush1.msra.mxu0 %v3025
        %3071 = vmatprep.subr.mxu0 0.0
        %3072 = vmatpush1.msra.mxu0 %v3026
        %3073 = vmatprep.subr.mxu0 0.0
        %3074 = vmatpush1.msra.mxu0 %v3027
        %3075 = vmatprep.subr.mxu0 0.0
        %3076 = vmatpush1.msra.mxu0 %v3028
        %3077 = vmatprep.subr.mxu0 0.0
        %3078 = vmatpush1.msra.mxu0 %v3029
        %3079 = vmatprep.subr.mxu0 0.0
        %3080 = vmatpush1.msra.mxu0 %v3030
        %3081 = vmatprep.subr.mxu0 0.0
        %3082 = vmatpush1.msra.mxu0 %v3031
        %3083 = vmatprep.subr.mxu0 0.0
        %3084 = vmatpush1.msra.mxu0 %v3032
        %3085 = vmatprep.subr.mxu0 0.0
        %3086 = vmatpush1.msra.mxu0 %v3033
        %3087 = vmatprep.subr.mxu0 0.0
        %3088 = vmatpush1.msra.mxu0 %v3034
        %3089 = vmatprep.subr.mxu0 0.0
        %3090 = vmatpush1.msra.mxu0 %v3035
        %3091 = vmatprep.subr.mxu0 0.0
        %3092 = vmatpush1.msra.mxu0 %v3036
        %3093 = vmatprep.subr.mxu0 0.0
        %3094 = vmatpush1.msra.mxu0 %v3037
        %3095 = vmatprep.subr.mxu0 0.0
        %3096 = vmatpush1.msra.mxu0 %v3038
        %3097 = vmatprep.subr.mxu0 0.0
        %3098 = vmatpush1.msra.mxu0 %v3039
        %3099 = vmatprep.subr.mxu0 0.0
        %3100 = vmatpush1.msra.mxu0 %v3040
        %3101 = vmatprep.subr.mxu0 0.0
        %3102 = vmatpush1.msra.mxu0 %v3041
        %3103 = vmatprep.subr.mxu0 0.0
        %3104 = vmatpush1.msra.mxu0 %v3042
        %3105 = vmatprep.subr.mxu0 0.0
        %3106 = vmatpush1.msra.mxu0 %v3043
        %3107 = vmatprep.subr.mxu0 0.0
        %3108 = vmatpush1.msra.mxu0 %v3044
        %3109 = vmatprep.mubr.f32.mxu0 %v2998
        %3110 = vmatmul.mubr.f32.gmra.mrb[0].mxu0 %v2997
        %v3111 = vpop.f32.mrb[0].mxu0
        %v3112 = vadd.f32 0.0, %v3111
        %v3113 = vpop.f32.mrb[0].mxu0
        %3114 = vmatprep.mubr.f32.mxu0 %v3000
        %3115 = vmatmul.mubr.f32.gmra.mrb[0].mxu0 %v2999
        %v3116 = vpop.f32.mrb[0].mxu0
        %v3117 = vadd.f32 0.0, %v3116
        %v3118 = vpop.f32.mrb[0].mxu0
        %3119 = vmatprep.mubr.f32.mxu0 %v3002
        %3120 = vmatmul.mubr.f32.gmra.mrb[0].mxu0 %v3001
        %v3121 = vpop.f32.mrb[0].mxu0
        %v3122 = vadd.f32 0.0, %v3121
        %v3123 = vpop.f32.mrb[0].mxu0
        %3124 = vmatprep.mubr.f32.mxu0 %v3004
        %3125 = vmatmul.mubr.f32.gmra.mrb[0].mxu0 %v3003
        %v3126 = vpop.f32.mrb[0].mxu0
        %v3127 = vadd.f32 0.0, %v3126
        %v3128 = vpop.f32.mrb[0].mxu0
        %3129 = vmatprep.mubr.f32.mxu0 %v3006
        %3130 = vmatmul.mubr.f32.gmra.mrb[0].mxu0 %v3005
        %v3131 = vpop.f32.mrb[0].mxu0
        %v3132 = vadd.f32 0.0, %v3131
        %v3133 = vpop.f32.mrb[0].mxu0
        %3134 = vmatprep.mubr.f32.mxu0 %v3008
        %3135 = vmatmul.mubr.f32.gmra.mrb[0].mxu0 %v3007
        %v3136 = vpop.f32.mrb[0].mxu0
        %v3137 = vadd.f32 0.0, %v3136
        %v3138 = vpop.f32.mrb[0].mxu0
        %3139 = vmatprep.mubr.f32.mxu0 %v3010
        %3140 = vmatmul.mubr.f32.gmra.mrb[0].mxu0 %v3009
        %v3141 = vpop.f32.mrb[0].mxu0
        %v3142 = vadd.f32 0.0, %v3141
        %v3143 = vpop.f32.mrb[0].mxu0
        %3144 = vmatprep.mubr.f32.mxu0 %v3012
        %3145 = vmatmul.mubr.f32.gmra.mrb[0].mxu0 %v3011
        %v3146 = vpop.f32.mrb[0].mxu0
        %v3147 = vadd.f32 0.0, %v3146
        %v3148 = vpop.f32.mrb[0].mxu0
        %3149 = vdwg.mxu0
        %v3150 = vadd.f32 %v2692, %v3112
        %v3151 = vadd.f32 %v2693, %v3117
        %v3152 = vadd.f32 %v2694, %v3122
        %v3153 = vadd.f32 %v2695, %v3127
        %v3154 = vadd.f32 %v2696, %v3132
        %v3155 = vadd.f32 %v2697, %v3137
        %v3156 = vadd.f32 %v2698, %v3142
        %v3157 = vadd.f32 %v2699, %v3147
        %3158 = vst [vmem:[%s327] sm:$0xff] %v3150
        %3159 = vst [vmem:[%s327 + $0x8] sm:$0xff] %v3151
        %3160 = vst [vmem:[%s327 + $0x10] sm:$0xff] %v3152
        %3161 = vst [vmem:[%s327 + $0x18] sm:$0xff] %v3153
        %3162 = vst [vmem:[%s327 + $0x20] sm:$0xff] %v3154
        %3163 = vst [vmem:[%s327 + $0x28] sm:$0xff] %v3155
        %3164 = vst [vmem:[%s327 + $0x30] sm:$0xff] %v3156
        %3165 = vst [vmem:[%s327 + $0x38] sm:$0xff] %v3157
        %s3166 = sand.u32 %s164, 1
        %s3167 = scalar_lea.sflag [#allocation4], %s3166
        %s3168 = sand.u32 %s164, 1
        %s3169 = smul.addr %s3168, 64
        %s3170 = scalar_lea.vmem [#allocation11], %s3169
        // Predicated region
        $region65: #{tpu_custom_call.1} parent=43 // pred_check
          %p3171 = pneg %p174
        $region66: #{tpu_custom_call.1} parent=43 // pred_check_branch
          %3173 = sbr.rel (%p3171) target = $region68
        $region67: #{tpu_custom_call.1} parent=43 // pred_region
          %s3175 = ssub.s32 1024, 1024
          %3176 = vsyncadd %s3167, %s3175
          %s3177 = smul.addr %s25, 8
          %s3178 = smul.addr %s3177, 128
          %s3179 = scalar_lea.hbm %s6, %s3178
          %s3180 = sshll.u32 %s3170, 4
          %s3181 = int_to_ptr.vmem [resolvable:$true] %s3180
          %3186 = dma.vmem_to_hbm [thread:$0]  %s3181, 1024, %s3179, %s3167, 128, 128, 8
        $region68: #{tpu_custom_call.1} parent=43 // pred_fallthru
          _
      $region44: #{tpu_custom_call.1} parent=5 // pred_fallthru
        _
      %p3187 = scmp.le.s32.totalorder 2, %s20
      // Predicated region
      $region69: #{tpu_custom_call.1} parent=5 // pred_check
        %p3188 = pneg %p3187
      $region70: #{tpu_custom_call.1} parent=5 // pred_check_branch
        %3190 = sbr.rel (%p3188) target = $region72
      $region71: #{tpu_custom_call.1} parent=5 // pred_region
        %s3191 = ssub.s32 %s20, 2
        // Predicated region
        $region73: #{tpu_custom_call.1} parent=71 // pred_check
          %p3192 = pneg %p180
        $region74: #{tpu_custom_call.1} parent=71 // pred_check_branch
          %3194 = sbr.rel (%p3192) target = $region76
        $region75: #{tpu_custom_call.1} parent=71 // pred_region
          %s3195 = sand.u32 %s165, 1
          %s3196 = scalar_lea.sflag [#allocation4], %s3195
          %s3197 = sand.u32 %s165, 1
          %s3198 = smul.addr %s3197, 64
          %s3199 = scalar_lea.vmem [#allocation11], %s3198
          %3200 = dma.done %s3196, 1024
        $region76: #{tpu_custom_call.1} parent=71 // pred_fallthru
          _
      $region72: #{tpu_custom_call.1} parent=5 // pred_fallthru
        _
    $region6: #{tpu_custom_call.1} parent=1 // loop_footer
      %s24 = sadd.s32 1, %s20
    $region7: #{tpu_custom_call.1} parent=1 // loop_footer_branch
      %19 = sbr.rel target = $region3
    $region8: #{tpu_custom_call.1} parent=1 // loop_exit
      _
    %3201 = vsyncpa [#allocation3], 1
    %s3202 = scalar_lea.sflag [#allocation3], 1
    %3203 = vsyncpa %s3202, 1
    %3204 = vsyncpa [#allocation6], 1
    %3205 = vsyncpa [#allocation9], 1
    %3206 = vsyncpa [#allocation4], 1
    %s3207 = scalar_lea.sflag [#allocation4], 1
    %3208 = vsyncpa %s3207, 1

</llo_original>
